<compile_context>
chip_gen: v7x
topology: tpu7x:2x2x1
jax: 0.10.0
libtpu: 0.0.40
codegen_flags: <defaults>
</compile_context>

<pallas_src>
import functools

import jax
import jax.numpy as jnp
from jax import lax
from jax.experimental import pallas as pl
from jax.experimental.pallas import tpu as pltpu


def _expand_kernel(x_ref, o_ref, *, gain):
    """x_ref: (1, s*s, TM, W)  ->  o_ref: (1, TM, s*s*W)."""
    s = gain
    w = x_ref.shape[-1]

    # 0/1 "riffle" selection matrices (built once per grid step on the VPU):
    #   sel_j[w, s*w + j] = 1   (scatters source column w to output lane s*w+j)
    col = lax.broadcasted_iota(jnp.int32, (w, s * w), 1)
    row = lax.broadcasted_iota(jnp.int32, (w, s * w), 0)

    row_blocks = []
    for i in range(s):           # output row parity -- interleave is free via
        z = None                 # the (H, s) packing of the output view
        for j in range(s):       # output column parity -- lane interleave
            sel = (col == s * row + j).astype(jnp.float32)
            a = x_ref[0, i * s + j].astype(jnp.float32)      # (TM, W)
            # Exact permutation on the MXU: every output lane receives exactly
            # one input value times 1.0, accumulated in f32. HIGHEST precision
            # keeps f32 data bit-accurate; the MXU is idle otherwise.
            t = jnp.dot(a, sel, preferred_element_type=jnp.float32,
                        precision=lax.Precision.HIGHEST)
            z = t if z is None else z + t
        row_blocks.append(z)                                  # (TM, s*W)
    # TODO(synk): swap the selection matmuls for a lane-merge reshape
    # (stack(..., -1).reshape(TM, s*W)) once Mosaic guarantees that lowering;
    # it would remove the extra MXU passes for very wide feature maps.
    o_ref[0] = jnp.concatenate(row_blocks, axis=-1).astype(o_ref.dtype)


def _pick_row_tile(m_rows, w, gain, itemsize):
    """Largest row tile dividing the fused (C_out*H) dim that is a multiple of
    8 (sublane tiling) and keeps double-buffered in+out blocks <= ~8 MiB
    (ample headroom even for v7x's 64 MiB VMEM)."""
    budget = 8 * 1024 * 1024
    per_row = 4 * gain * gain * w * itemsize   # 2x (dbl-buffer) * (in + out)
    for tm in (2048, 1024, 512, 256, 128, 64, 32, 16, 8):
        if m_rows % tm == 0 and tm * per_row <= budget:
            return tm
    return m_rows  # tiny / oddly-sized inputs: one block over the fused rows


@functools.partial(jax.jit, static_argnames=("gain",))
def expand_forward(x, gain=2):
    """Expand.forward: (N, C, H, W) -> (N, C//gain**2, H*gain, W*gain)."""
    s = gain
    n, c, h, w = x.shape
    assert c % (s * s) == 0, "C must be divisible by gain**2"
    c_out = c // (s * s)
    m_rows = c_out * h

    # Free (contiguous) view only -- no data movement outside the kernel.
    x_v = x.reshape(n, s * s, m_rows, w)            # [n, i*s+j, c*H+h, w]
    tm = _pick_row_tile(m_rows, w, s, x.dtype.itemsize)
    grid = (n, m_rows // tm)

    out_v = pl.pallas_call(
        functools.partial(_expand_kernel, gain=s),
        out_shape=jax.ShapeDtypeStruct((n, m_rows, s * s * w), x.dtype),
        grid=grid,
        in_specs=[
            pl.BlockSpec((1, s * s, tm, w), lambda ni, mi: (ni, 0, mi, 0)),
        ],
        out_specs=pl.BlockSpec((1, tm, s * s * w), lambda ni, mi: (ni, mi, 0)),
        compiler_params=pltpu.CompilerParams(
            dimension_semantics=("parallel", "parallel"),
            vmem_limit_bytes=32 * 1024 * 1024,
        ),
    )(x_v)

    # Row m = c*H + h of out_v holds output rows [s*h, s*h+s) back to back, so
    # reshaping back to NCHW is a pure contiguous (free) view.
    return out_v.reshape(n, c_out, h * s, w * s)


def expand_reference(x, gain=2):
    """Pure-JAX mirror of the PyTorch module, for the correctness check."""
    s = gain
    n, c, h, w = x.shape
    y = x.reshape(n, s, s, c // (s * s), h, w)
    y = jnp.transpose(y, (0, 3, 4, 1, 5, 2))
    return y.reshape(n, c // (s * s), h * s, w * s)


if __name__ == "__main__":
    key = jax.random.PRNGKey(0)
    N, C, H, W = 2, 16, 16, 16            # gain=2 -> output (2, 4, 32, 32)
    x = jax.random.normal(key, (N, C, H, W), dtype=jnp.float32)

    out = expand_forward(x, gain=2)
    out = jax.block_until_ready(out)

    ref = expand_reference(x, gain=2)
    assert out.shape == (N, C // 4, 2 * H, 2 * W), out.shape
    max_err = float(jnp.max(jnp.abs(out - ref)))
    assert jnp.allclose(out, ref, atol=1e-3, rtol=1e-3), max_err
    print("KERNEL_OK")
</pallas_src>

<mosaic_0001>
module attributes {stable_mosaic.version = 11 : i64} {
  func.func @_expand_kernel(%arg0: i32, %arg1: i32, %arg2: memref<1x4x64x16xf32, #tpu.memory_space<vmem>>, %arg3: memref<1x64x64xf32, #tpu.memory_space<vmem>>) attributes {dimension_semantics = [#tpu.dimension_semantics<parallel>, #tpu.dimension_semantics<parallel>], iteration_bounds = array<i64: 2, 1>, scalar_prefetch = 0 : i64, scratch_operands = 0 : i64, tpu.core_type = #tpu.core_type<tc>, window_params = [{transform_indices = @transform_0, window_bounds = array<i64: 1, 4, 64, 16>}, {transform_indices = @transform_1, window_bounds = array<i64: 1, 64, 64>}]} {
    %0 = tpu.iota {dimensions = array<i32: 1>} : vector<16x32xi32>
    %1 = tpu.iota {dimensions = array<i32: 0>} : vector<16x32xi32>
    %c2_i32 = arith.constant 2 : i32
    %2 = vector.broadcast %c2_i32 : i32 to vector<16x32xi32>
    %3 = arith.muli %2, %1 : vector<16x32xi32>
    %c0_i32 = arith.constant 0 : i32
    %4 = vector.broadcast %c0_i32 : i32 to vector<16x32xi32>
    %5 = arith.addi %3, %4 : vector<16x32xi32>
    %6 = arith.cmpi eq, %0, %5 : vector<16x32xi32>
    %7 = arith.extui %6 : vector<16x32xi1> to vector<16x32xi32>
    %8 = arith.sitofp %7 : vector<16x32xi32> to vector<16x32xf32>
    %c0 = arith.constant 0 : index
    %c0_0 = arith.constant 0 : index
    %c0_1 = arith.constant 0 : index
    %c0_2 = arith.constant 0 : index
    %9 = vector.load %arg2[%c0, %c0_0, %c0_1, %c0_2] : memref<1x4x64x16xf32, #tpu.memory_space<vmem>>, vector<1x1x64x16xf32>
    %10 = vector.shape_cast %9 : vector<1x1x64x16xf32> to vector<64x16xf32>
    %cst = arith.constant dense<0.000000e+00> : vector<64x32xf32>
    %11 = tpu.matmul %10, %8, %cst {dimension_numbers = #tpu.dot_dimension_numbers<[1], [0], [0], [1], [0, 0, 1, 1], [], []>, precision = #tpu.contract_precision<fp32>} : vector<64x16xf32>, vector<16x32xf32>, vector<64x32xf32> -> vector<64x32xf32>
    %c2_i32_3 = arith.constant 2 : i32
    %12 = vector.broadcast %c2_i32_3 : i32 to vector<16x32xi32>
    %13 = arith.muli %12, %1 : vector<16x32xi32>
    %c1_i32 = arith.constant 1 : i32
    %14 = vector.broadcast %c1_i32 : i32 to vector<16x32xi32>
    %15 = arith.addi %13, %14 : vector<16x32xi32>
    %16 = arith.cmpi eq, %0, %15 : vector<16x32xi32>
    %17 = arith.extui %16 : vector<16x32xi1> to vector<16x32xi32>
    %18 = arith.sitofp %17 : vector<16x32xi32> to vector<16x32xf32>
    %c0_4 = arith.constant 0 : index
    %c1 = arith.constant 1 : index
    %c0_5 = arith.constant 0 : index
    %c0_6 = arith.constant 0 : index
    %19 = vector.load %arg2[%c0_4, %c1, %c0_5, %c0_6] : memref<1x4x64x16xf32, #tpu.memory_space<vmem>>, vector<1x1x64x16xf32>
    %20 = vector.shape_cast %19 : vector<1x1x64x16xf32> to vector<64x16xf32>
    %cst_7 = arith.constant dense<0.000000e+00> : vector<64x32xf32>
    %21 = tpu.matmul %20, %18, %cst_7 {dimension_numbers = #tpu.dot_dimension_numbers<[1], [0], [0], [1], [0, 0, 1, 1], [], []>, precision = #tpu.contract_precision<fp32>} : vector<64x16xf32>, vector<16x32xf32>, vector<64x32xf32> -> vector<64x32xf32>
    %22 = arith.addf %11, %21 : vector<64x32xf32>
    %c2_i32_8 = arith.constant 2 : i32
    %23 = vector.broadcast %c2_i32_8 : i32 to vector<16x32xi32>
    %24 = arith.muli %23, %1 : vector<16x32xi32>
    %c0_i32_9 = arith.constant 0 : i32
    %25 = vector.broadcast %c0_i32_9 : i32 to vector<16x32xi32>
    %26 = arith.addi %24, %25 : vector<16x32xi32>
    %27 = arith.cmpi eq, %0, %26 : vector<16x32xi32>
    %28 = arith.extui %27 : vector<16x32xi1> to vector<16x32xi32>
    %29 = arith.sitofp %28 : vector<16x32xi32> to vector<16x32xf32>
    %c0_10 = arith.constant 0 : index
    %c2 = arith.constant 2 : index
    %c0_11 = arith.constant 0 : index
    %c0_12 = arith.constant 0 : index
    %30 = vector.load %arg2[%c0_10, %c2, %c0_11, %c0_12] : memref<1x4x64x16xf32, #tpu.memory_space<vmem>>, vector<1x1x64x16xf32>
    %31 = vector.shape_cast %30 : vector<1x1x64x16xf32> to vector<64x16xf32>
    %cst_13 = arith.constant dense<0.000000e+00> : vector<64x32xf32>
    %32 = tpu.matmul %31, %29, %cst_13 {dimension_numbers = #tpu.dot_dimension_numbers<[1], [0], [0], [1], [0, 0, 1, 1], [], []>, precision = #tpu.contract_precision<fp32>} : vector<64x16xf32>, vector<16x32xf32>, vector<64x32xf32> -> vector<64x32xf32>
    %c2_i32_14 = arith.constant 2 : i32
    %33 = vector.broadcast %c2_i32_14 : i32 to vector<16x32xi32>
    %34 = arith.muli %33, %1 : vector<16x32xi32>
    %c1_i32_15 = arith.constant 1 : i32
    %35 = vector.broadcast %c1_i32_15 : i32 to vector<16x32xi32>
    %36 = arith.addi %34, %35 : vector<16x32xi32>
    %37 = arith.cmpi eq, %0, %36 : vector<16x32xi32>
    %38 = arith.extui %37 : vector<16x32xi1> to vector<16x32xi32>
    %39 = arith.sitofp %38 : vector<16x32xi32> to vector<16x32xf32>
    %c0_16 = arith.constant 0 : index
    %c3 = arith.constant 3 : index
    %c0_17 = arith.constant 0 : index
    %c0_18 = arith.constant 0 : index
    %40 = vector.load %arg2[%c0_16, %c3, %c0_17, %c0_18] : memref<1x4x64x16xf32, #tpu.memory_space<vmem>>, vector<1x1x64x16xf32>
    %41 = vector.shape_cast %40 : vector<1x1x64x16xf32> to vector<64x16xf32>
    %cst_19 = arith.constant dense<0.000000e+00> : vector<64x32xf32>
    %42 = tpu.matmul %41, %39, %cst_19 {dimension_numbers = #tpu.dot_dimension_numbers<[1], [0], [0], [1], [0, 0, 1, 1], [], []>, precision = #tpu.contract_precision<fp32>} : vector<64x16xf32>, vector<16x32xf32>, vector<64x32xf32> -> vector<64x32xf32>
    %43 = arith.addf %32, %42 : vector<64x32xf32>
    %44 = tpu.concatenate %22, %43 in 1 : vector<64x32xf32>, vector<64x32xf32> -> vector<64x64xf32>
    %c0_20 = arith.constant 0 : index
    %c0_21 = arith.constant 0 : index
    %c0_22 = arith.constant 0 : index
    %45 = vector.load %arg3[%c0_20, %c0_21, %c0_22] : memref<1x64x64xf32, #tpu.memory_space<vmem>>, vector<1x64x64xf32>
    %46 = vector.shape_cast %45 : vector<1x64x64xf32> to vector<64x64xf32>
    %47 = vector.shape_cast %44 : vector<64x64xf32> to vector<1x64x64xf32>
    tpu.vector_store %arg3[%c0_20, %c0_21, %c0_22], %47 {strides = array<i32>} : memref<1x64x64xf32, #tpu.memory_space<vmem>>, vector<1x64x64xf32>,
    return
  }
  func.func @transform_0(%arg0: i32, %arg1: i32) -> (i32, i32, i32, i32) {
    %c0_i32 = arith.constant 0 : i32
    %c0_i32_0 = arith.constant 0 : i32
    %c0_i32_1 = arith.constant 0 : i32
    return %arg0, %c0_i32, %arg1, %c0_i32_0 : i32, i32, i32, i32
  }
  func.func @transform_1(%arg0: i32, %arg1: i32) -> (i32, i32, i32) {
    %c0_i32 = arith.constant 0 : i32
    %c0_i32_0 = arith.constant 0 : i32
    return %arg0, %arg1, %c0_i32 : i32, i32, i32
  }
}

</mosaic_0001>

<llo_original>
// kernel: expand_forward.1
$region0: #{expand_forward.1}
  #allocation0 [shape = 'u32[]', space=smem, size = 0x4, offset = 0x4, fixed_abs, tag = 'smem constant byte address 0x4 - core index']
  #allocation1 [shape = 'u32[144,128]{1,0:T(1,128)}', space=vmem, size = 0x12000, scoped, tag = 'internal scratch']
  %s0 = inlined_call_operand.hbm [shape: f32[2,4,64,16], index: 0, kind: input, shape index: {}]
  %s1 = inlined_call_operand.vmem [shape: f32[2,64,64], index: 1, kind: output, shape index: {}]
  %s2 = sld [smem:[#allocation0]]
  $region41: #{expand_forward.1} parent=0
    _
  %s4 = ssub.s32 1, %s2
  %s5 = scalar_select 0, %s4, %s2
  $region1: #{expand_forward.1} parent=0
    #allocation2 [shape = 'u8[262144]{0}', space=vmem, size = 0x40000, scoped, tag = 'input window, operand 0']
    #allocation3 [shape = 's32[2]{0}', space=sflag, size = 0x8, scoped, tag = 'scoped memory for expand_forward.1']
    %6 = vsyncpa [#allocation3], 0
    %s7 = scalar_lea.sflag [#allocation3], 1
    %8 = vsyncpa %s7, 0
    loop: start=0, step=1, limit=4
    $region2: #{expand_forward.1} parent=1 // loop_pre_header
      _
    $region3: #{expand_forward.1} parent=1 // loop_header
      %s10 = sphi 0, %s14
      %p11 = scmp.ge.s32.totalorder %s10, 4
      %s17 = sphi 0, %s29
      %s18 = sphi 0, %s25
      %s19 = sphi 0, %s17
      %s20 = sphi 0, %s18
      %s21 = sphi 0, %s19
      %s22 = sphi 0, %s20
      %s34 = sphi 0, %s36
      %s37 = sphi 0, %s34
      %s38 = sphi 0, %s37
      %s54 = sphi 0, %s38
      %s62 = sphi 0, %s64
      %s65 = sphi 0, %s62
      %s66 = sphi 0, %s65
      %s82 = sphi 0, %s66
    $region4: #{expand_forward.1} parent=1 // loop_header_branch
      %13 = sbr.rel (%p11) target = $region8
    $region5: #{expand_forward.1} parent=1 // loop_body
      %s15 = ssub.s32 %s10, 1
      %s16 = ssub.s32 %s10, 2
      %s23 = sadd.s32 1, %s18
      %p24 = scmp.ge.s32.totalorder %s23, 1
      %s25 = scalar_select %p24, 0, %s23
      %s26 = sadd.s32 1, %s17
      %s27 = scalar_select %p24, %s26, %s17
      %p28 = scmp.ge.s32.totalorder %s27, 2
      %s29 = scalar_select %p28, 0, %s27
      %s30 = ssub.s32 %s17, %s29
      %s31 = ssub.s32 %s18, %s25
      %s32 = sor.u32 %s30, %s31
      %p33 = scmp.eq.s32.totalorder %s32, 0
      %s35 = sadd.s32 %s34, 1
      %s36 = scalar_select %p33, %s34, %s35
      %p39 = pneg %p33
      %p40 = scmp.eq.s32.totalorder %s10, 1
      %p41 = por %p39, %p40
      %p42 = scmp.ne.s32.totalorder %s34, %s37
      %p43 = scmp.eq.s32.totalorder %s10, 0
      %p44 = por %p42, %p43
      %p45 = scmp.ne.s32.totalorder %s34, %s37
      %p46 = scmp.eq.s32.totalorder %s15, 1
      %p47 = por %p45, %p46
      %p48 = scmp.ne.s32.totalorder %s37, %s38
      %p49 = scmp.eq.s32.totalorder %s15, 0
      %p50 = por %p48, %p49
      %p51 = scmp.ne.s32.totalorder %s37, %s38
      %p52 = scmp.eq.s32.totalorder %s16, 1
      %p53 = por %p51, %p52
      %p55 = scmp.ne.s32.totalorder %s38, %s54
      %p56 = scmp.eq.s32.totalorder %s16, 0
      %p57 = por %p55, %p56
      %s58 = ssub.s32 %s17, %s29
      %s59 = ssub.s32 %s18, %s25
      %s60 = sor.u32 %s58, %s59
      %p61 = scmp.eq.s32.totalorder %s60, 0
      %s63 = sadd.s32 %s62, 1
      %s64 = scalar_select %p61, %s62, %s63
      %p67 = pneg %p61
      %p68 = scmp.eq.s32.totalorder %s10, 1
      %p69 = por %p67, %p68
      %p70 = scmp.ne.s32.totalorder %s62, %s65
      %p71 = scmp.eq.s32.totalorder %s10, 0
      %p72 = por %p70, %p71
      %p73 = scmp.ne.s32.totalorder %s62, %s65
      %p74 = scmp.eq.s32.totalorder %s15, 1
      %p75 = por %p73, %p74
      %p76 = scmp.ne.s32.totalorder %s65, %s66
      %p77 = scmp.eq.s32.totalorder %s15, 0
      %p78 = por %p76, %p77
      %p79 = scmp.ne.s32.totalorder %s65, %s66
      %p80 = scmp.eq.s32.totalorder %s16, 1
      %p81 = por %p79, %p80
      %p83 = scmp.ne.s32.totalorder %s66, %s82
      %p84 = scmp.eq.s32.totalorder %s16, 0
      %p85 = por %p83, %p84
      %p86 = scmp.le.s32.totalorder 1, %s10
      %p87 = scmp.lt.s32.totalorder %s10, 3
      %p88 = pnand %p86, %p87
      %p89 = pneg %p88
      // Predicated region
      $region9: #{expand_forward.1} parent=5 // pred_check
        _
      $region10: #{expand_forward.1} parent=5 // pred_check_branch
        %91 = sbr.rel (%p88) target = $region12
      $region11: #{expand_forward.1} parent=5 // pred_region
        %s92 = ssub.s32 %s10, 1
      $region12: #{expand_forward.1} parent=5 // pred_fallthru
        _
      %p93 = scmp.lt.s32.totalorder %s10, 2
      // Predicated region
      $region13: #{expand_forward.1} parent=5 // pred_check
        %p94 = pneg %p93
      $region14: #{expand_forward.1} parent=5 // pred_check_branch
        %96 = sbr.rel (%p94) target = $region16
      $region15: #{expand_forward.1} parent=5 // pred_region
        // Predicated region
        $region17: #{expand_forward.1} parent=15 // pred_check
          %p97 = pneg %p44
        $region18: #{expand_forward.1} parent=15 // pred_check_branch
          %99 = sbr.rel (%p97) target = $region20
        $region19: #{expand_forward.1} parent=15 // pred_region
          %s100 = sand.u32 %s34, 1
          %s101 = scalar_lea.sflag [#allocation3], %s100
          %s102 = sand.u32 %s34, 1
          %s103 = smul.addr %s102, 256
          %s104 = scalar_lea.vmem [#allocation2], %s103
          %s105 = smul.u32 8, %s18
          %s107 = ssub.s32 4096, 4096
          %108 = vsyncadd %s101, %s107
          %s109 = smul.addr %s17, 32
          %s110 = sadd.s32 %s105, %s109
          %s111 = smul.addr %s110, 128
          %s112 = scalar_lea.hbm %s0, %s111
          %s113 = sshll.u32 %s104, 4
          %s114 = int_to_ptr.vmem [resolvable:$true] %s113
          %119 = dma.hbm_to_vmem [thread:$0]  %s112, 4096, %s114, %s101, 128, 128, 8
        $region20: #{expand_forward.1} parent=15 // pred_fallthru
          _
      $region16: #{expand_forward.1} parent=5 // pred_fallthru
        _
      %p120 = scmp.le.s32.totalorder 1, %s10
      %p121 = scmp.lt.s32.totalorder %s10, 3
      %p122 = pnand %p120, %p121
      %p123 = pneg %p122
      // Predicated region
      $region21: #{expand_forward.1} parent=5 // pred_check
        _
      $region22: #{expand_forward.1} parent=5 // pred_check_branch
        %125 = sbr.rel (%p122) target = $region24
      $region23: #{expand_forward.1} parent=5 // pred_region
        %s126 = ssub.s32 %s10, 1
        %s127 = sand.u32 %s37, 1
        %s128 = scalar_lea.sflag [#allocation3], %s127
        %s129 = sand.u32 %s37, 1
        %s130 = smul.addr %s129, 256
        %s131 = scalar_lea.vmem [#allocation2], %s130
        // Predicated region
        $region25: #{expand_forward.1} parent=23 // pred_check
          %p132 = pneg %p50
        $region26: #{expand_forward.1} parent=23 // pred_check_branch
          %134 = sbr.rel (%p132) target = $region28
        $region27: #{expand_forward.1} parent=23 // pred_region
          %135 = dma.done %s128, 4096
        $region28: #{expand_forward.1} parent=23 // pred_fallthru
          _
        %s136 = sand.u32 %s37, 1
        %s137 = scalar_lea.sflag [#allocation3], %s136
        %s138 = sand.u32 %s37, 1
        %s139 = smul.addr %s138, 256
        %s140 = scalar_lea.vmem [#allocation2], %s139
        %p141 = pneg %p50
        %p142 = pneg %p47
        %p143 = pneg %p78
        %p144 = pneg %p75
        %s145 = smul.u32 8, %s20
        %p146 = scmp.lt.s32.totalorder %s19, 1
        %s147 = scalar_select %p146, %s19, 1
        %p148 = scmp.lt.s32.totalorder %s145, 7
        %s149 = scalar_select %p148, %s145, 7
        %s150 = smul.addr %s147, 8
        %s151 = sadd.s32 %s149, %s150
        %s152 = smul.addr %s151, 8
        %s153 = scalar_lea.vmem %s1, %s152
        %s154 = smul.u32 8, %s20
        %s155 = smul.u32 8, %s20
        %p156 = scmp.lt.s32.totalorder %s19, 1
        %s157 = scalar_select %p156, %s19, 1
        %p158 = scmp.lt.s32.totalorder %s155, 7
        %s159 = scalar_select %p158, %s155, 7
        %s160 = smul.addr %s157, 8
        %s161 = sadd.s32 %s159, %s160
        %s162 = smul.addr %s161, 8
        %s163 = scalar_lea.vmem %s1, %s162
        %s164 = smul.u32 8, %s20
        %v165 = vlaneseq
        %v166 = vand.u32 %v165, 127
        %v167 = vlaneseq
        %v168 = vshrl.u32 %v167, 7
        %v169 = vadd.s32 %v168, 8
        %v170 = vmul.u32 %v168, 2
        %v171 = vmul.u32 %v169, 2
        %vm172 = vcmp.eq.s32.totalorder %v166, %v170
        %vm173 = vcmp.eq.s32.totalorder %v166, %v171
        %v174 = vsel %vm172, 1, 0
        %v175 = vsel %vm173, 1, 0
        %v176 = vcvt.s32.f32 %v174
        %v177 = vcvt.s32.f32 %v175
        %v178 = vld [vmem:[%s131] sm:$0xff]
        %v179 = vld [vmem:[%s131 + $0x8] sm:$0xff]
        %v180 = vld [vmem:[%s131 + $0x10] sm:$0xff]
        %v181 = vld [vmem:[%s131 + $0x18] sm:$0xff]
        %v182 = vld [vmem:[%s131 + $0x20] sm:$0xff]
        %v183 = vld [vmem:[%s131 + $0x28] sm:$0xff]
        %v184 = vld [vmem:[%s131 + $0x30] sm:$0xff]
        %v185 = vld [vmem:[%s131 + $0x38] sm:$0xff]
        %v186 = vadd.s32 %v170, 1
        %v187 = vadd.s32 %v171, 1
        %vm188 = vcmp.eq.s32.totalorder %v166, %v186
        %vm189 = vcmp.eq.s32.totalorder %v166, %v187
        %v190 = vsel %vm188, 1, 0
        %v191 = vsel %vm189, 1, 0
        %v192 = vcvt.s32.f32 %v190
        %v193 = vcvt.s32.f32 %v191
        %s194 = scalar_lea.vmem %s131, 64 [#allocation2]
        %v195 = vld [vmem:[%s194] sm:$0xff]
        %v196 = vld [vmem:[%s194 + $0x8] sm:$0xff]
        %v197 = vld [vmem:[%s194 + $0x10] sm:$0xff]
        %v198 = vld [vmem:[%s194 + $0x18] sm:$0xff]
        %v199 = vld [vmem:[%s194 + $0x20] sm:$0xff]
        %v200 = vld [vmem:[%s194 + $0x28] sm:$0xff]
        %v201 = vld [vmem:[%s194 + $0x30] sm:$0xff]
        %v202 = vld [vmem:[%s194 + $0x38] sm:$0xff]
        %vm203 = vcmask 130048
        %v205 = vsel %vm203, %v195, 0
        %v208 = vsel %vm203, %v196, 0
        %v211 = vsel %vm203, %v197, 0
        %v214 = vsel %vm203, %v198, 0
        %v217 = vsel %vm203, %v199, 0
        %v220 = vsel %vm203, %v200, 0
        %v223 = vsel %vm203, %v201, 0
        %v226 = vsel %vm203, %v202, 0
        %228 = vmatprep.subr.mxu0 0.0
        %v229 = vand.u32 %v192, 4294901760
        %230 = vmatpush1.msra.mxu0 %v229
        %231 = vmatprep.subr.mxu0 0.0
        %v232 = vand.u32 %v193, 4294901760
        %233 = vmatpush1.msra.mxu0 %v232
        %234 = vmatprep.subr.mxu0 0.0
        %235 = vmatpush1.msra.mxu0 0.0
        %236 = vmatprep.subr.mxu0 0.0
        %237 = vmatpush1.msra.mxu0 0.0
        %238 = vmatprep.subr.mxu0 0.0
        %239 = vmatpush1.msra.mxu0 0.0
        %240 = vmatprep.subr.mxu0 0.0
        %241 = vmatpush1.msra.mxu0 0.0
        %242 = vmatprep.subr.mxu0 0.0
        %243 = vmatpush1.msra.mxu0 0.0
        %244 = vmatprep.subr.mxu0 0.0
        %245 = vmatpush1.msra.mxu0 0.0
        %246 = vmatprep.subr.mxu0 0.0
        %247 = vmatpush1.msra.mxu0 0.0
        %248 = vmatprep.subr.mxu0 0.0
        %249 = vmatpush1.msra.mxu0 0.0
        %250 = vmatprep.subr.mxu0 0.0
        %251 = vmatpush1.msra.mxu0 0.0
        %252 = vmatprep.subr.mxu0 0.0
        %253 = vmatpush1.msra.mxu0 0.0
        %254 = vmatprep.subr.mxu0 0.0
        %255 = vmatpush1.msra.mxu0 0.0
        %256 = vmatprep.subr.mxu0 0.0
        %257 = vmatpush1.msra.mxu0 0.0
        %258 = vmatprep.subr.mxu0 0.0
        %259 = vmatpush1.msra.mxu0 0.0
        %260 = vmatprep.subr.mxu0 0.0
        %261 = vmatpush1.msra.mxu0 0.0
        %262 = vmatprep.subr.mxu0 0.0
        %263 = vmatpush1.msra.mxu0 0.0
        %264 = vmatprep.subr.mxu0 0.0
        %265 = vmatpush1.msra.mxu0 0.0
        %266 = vmatprep.subr.mxu0 0.0
        %267 = vmatpush1.msra.mxu0 0.0
        %268 = vmatprep.subr.mxu0 0.0
        %269 = vmatpush1.msra.mxu0 0.0
        %270 = vmatprep.subr.mxu0 0.0
        %271 = vmatpush1.msra.mxu0 0.0
        %272 = vmatprep.subr.mxu0 0.0
        %273 = vmatpush1.msra.mxu0 0.0
        %274 = vmatprep.subr.mxu0 0.0
        %275 = vmatpush1.msra.mxu0 0.0
        %276 = vmatprep.subr.mxu0 0.0
        %277 = vmatpush1.msra.mxu0 0.0
        %278 = vmatprep.subr.mxu0 0.0
        %279 = vmatpush1.msra.mxu0 0.0
        %280 = vmatprep.subr.mxu0 0.0
        %281 = vmatpush1.msra.mxu0 0.0
        %282 = vmatprep.subr.mxu0 0.0
        %283 = vmatpush1.msra.mxu0 0.0
        %284 = vmatprep.subr.mxu0 0.0
        %285 = vmatpush1.msra.mxu0 0.0
        %286 = vmatprep.subr.mxu0 0.0
        %287 = vmatpush1.msra.mxu0 0.0
        %288 = vmatprep.subr.mxu0 0.0
        %289 = vmatpush1.msra.mxu0 0.0
        %290 = vmatprep.subr.mxu0 0.0
        %291 = vmatpush1.msra.mxu0 0.0
        %292 = vmatprep.subr.mxu0 0.0
        %293 = vmatpush1.msra.mxu0 0.0
        %294 = vmatprep.mubr.f32.mxu0 0.0
        %v295 = vand.u32 %v205, 4294901760
        %v296 = vsub.f32 %v205, %v295
        %v297 = vand.u32 %v296, 4294901760
        %v298 = vsub.f32 %v296, %v297
        %v299 = vand.u32 %v298, 4294901760
        %300 = vmatmul.mubr.f32.gmra.mrb[0].mxu0 %v299
        %v301 = vpop.f32.mrb[0].mxu0
        %v302 = vadd.f32 0.0, %v301
        %v303 = vpop.f32.mrb[0].mxu0
        %304 = vmatprep.mubr.f32.mxu0 0.0
        %v305 = vand.u32 %v208, 4294901760
        %v306 = vsub.f32 %v208, %v305
        %v307 = vand.u32 %v306, 4294901760
        %v308 = vsub.f32 %v306, %v307
        %v309 = vand.u32 %v308, 4294901760
        %310 = vmatmul.mubr.f32.gmra.mrb[0].mxu0 %v309
        %v311 = vpop.f32.mrb[0].mxu0
        %v312 = vadd.f32 0.0, %v311
        %v313 = vpop.f32.mrb[0].mxu0
        %314 = vmatprep.mubr.f32.mxu0 0.0
        %v315 = vand.u32 %v211, 4294901760
        %v316 = vsub.f32 %v211, %v315
        %v317 = vand.u32 %v316, 4294901760
        %v318 = vsub.f32 %v316, %v317
        %v319 = vand.u32 %v318, 4294901760
        %320 = vmatmul.mubr.f32.gmra.mrb[0].mxu0 %v319
        %v321 = vpop.f32.mrb[0].mxu0
        %v322 = vadd.f32 0.0, %v321
        %v323 = vpop.f32.mrb[0].mxu0
        %324 = vmatprep.mubr.f32.mxu0 0.0
        %v325 = vand.u32 %v214, 4294901760
        %v326 = vsub.f32 %v214, %v325
        %v327 = vand.u32 %v326, 4294901760
        %v328 = vsub.f32 %v326, %v327
        %v329 = vand.u32 %v328, 4294901760
        %330 = vmatmul.mubr.f32.gmra.mrb[0].mxu0 %v329
        %v331 = vpop.f32.mrb[0].mxu0
        %v332 = vadd.f32 0.0, %v331
        %v333 = vpop.f32.mrb[0].mxu0
        %334 = vmatprep.mubr.f32.mxu0 0.0
        %v335 = vand.u32 %v217, 4294901760
        %v336 = vsub.f32 %v217, %v335
        %v337 = vand.u32 %v336, 4294901760
        %v338 = vsub.f32 %v336, %v337
        %v339 = vand.u32 %v338, 4294901760
        %340 = vmatmul.mubr.f32.gmra.mrb[0].mxu0 %v339
        %v341 = vpop.f32.mrb[0].mxu0
        %v342 = vadd.f32 0.0, %v341
        %v343 = vpop.f32.mrb[0].mxu0
        %344 = vmatprep.mubr.f32.mxu0 0.0
        %v345 = vand.u32 %v220, 4294901760
        %v346 = vsub.f32 %v220, %v345
        %v347 = vand.u32 %v346, 4294901760
        %v348 = vsub.f32 %v346, %v347
        %v349 = vand.u32 %v348, 4294901760
        %350 = vmatmul.mubr.f32.gmra.mrb[0].mxu0 %v349
        %v351 = vpop.f32.mrb[0].mxu0
        %v352 = vadd.f32 0.0, %v351
        %v353 = vpop.f32.mrb[0].mxu0
        %354 = vmatprep.mubr.f32.mxu0 0.0
        %v355 = vand.u32 %v223, 4294901760
        %v356 = vsub.f32 %v223, %v355
        %v357 = vand.u32 %v356, 4294901760
        %v358 = vsub.f32 %v356, %v357
        %v359 = vand.u32 %v358, 4294901760
        %360 = vmatmul.mubr.f32.gmra.mrb[0].mxu0 %v359
        %v361 = vpop.f32.mrb[0].mxu0
        %v362 = vadd.f32 0.0, %v361
        %v363 = vpop.f32.mrb[0].mxu0
        %364 = vmatprep.mubr.f32.mxu0 0.0
        %v365 = vand.u32 %v226, 4294901760
        %v366 = vsub.f32 %v226, %v365
        %v367 = vand.u32 %v366, 4294901760
        %v368 = vsub.f32 %v366, %v367
        %v369 = vand.u32 %v368, 4294901760
        %370 = vmatmul.mubr.f32.gmra.mrb[0].mxu0 %v369
        %v371 = vpop.f32.mrb[0].mxu0
        %v372 = vadd.f32 0.0, %v371
        %v373 = vpop.f32.mrb[0].mxu0
        %374 = vdwg.mxu0
        %375 = vmatprep.subr.mxu0 0.0
        %v376 = vand.u32 %v192, 4294901760
        %v377 = vsub.f32 %v192, %v376
        %v378 = vand.u32 %v377, 4294901760
        %v379 = vsub.f32 %v377, %v378
        %v380 = vand.u32 %v379, 4294901760
        %381 = vmatpush1.msra.mxu0 %v380
        %382 = vmatprep.subr.mxu0 0.0
        %v383 = vand.u32 %v193, 4294901760
        %v384 = vsub.f32 %v193, %v383
        %v385 = vand.u32 %v384, 4294901760
        %v386 = vsub.f32 %v384, %v385
        %v387 = vand.u32 %v386, 4294901760
        %388 = vmatpush1.msra.mxu0 %v387
        %389 = vmatprep.subr.mxu0 0.0
        %390 = vmatpush1.msra.mxu0 0.0
        %391 = vmatprep.subr.mxu0 0.0
        %392 = vmatpush1.msra.mxu0 0.0
        %393 = vmatprep.subr.mxu0 0.0
        %394 = vmatpush1.msra.mxu0 0.0
        %395 = vmatprep.subr.mxu0 0.0
        %396 = vmatpush1.msra.mxu0 0.0
        %397 = vmatprep.subr.mxu0 0.0
        %398 = vmatpush1.msra.mxu0 0.0
        %399 = vmatprep.subr.mxu0 0.0
        %400 = vmatpush1.msra.mxu0 0.0
        %401 = vmatprep.subr.mxu0 0.0
        %402 = vmatpush1.msra.mxu0 0.0
        %403 = vmatprep.subr.mxu0 0.0
        %404 = vmatpush1.msra.mxu0 0.0
        %405 = vmatprep.subr.mxu0 0.0
        %406 = vmatpush1.msra.mxu0 0.0
        %407 = vmatprep.subr.mxu0 0.0
        %408 = vmatpush1.msra.mxu0 0.0
        %409 = vmatprep.subr.mxu0 0.0
        %410 = vmatpush1.msra.mxu0 0.0
        %411 = vmatprep.subr.mxu0 0.0
        %412 = vmatpush1.msra.mxu0 0.0
        %413 = vmatprep.subr.mxu0 0.0
        %414 = vmatpush1.msra.mxu0 0.0
        %415 = vmatprep.subr.mxu0 0.0
        %416 = vmatpush1.msra.mxu0 0.0
        %417 = vmatprep.subr.mxu0 0.0
        %418 = vmatpush1.msra.mxu0 0.0
        %419 = vmatprep.subr.mxu0 0.0
        %420 = vmatpush1.msra.mxu0 0.0
        %421 = vmatprep.subr.mxu0 0.0
        %422 = vmatpush1.msra.mxu0 0.0
        %423 = vmatprep.subr.mxu0 0.0
        %424 = vmatpush1.msra.mxu0 0.0
        %425 = vmatprep.subr.mxu0 0.0
        %426 = vmatpush1.msra.mxu0 0.0
        %427 = vmatprep.subr.mxu0 0.0
        %428 = vmatpush1.msra.mxu0 0.0
        %429 = vmatprep.subr.mxu0 0.0
        %430 = vmatpush1.msra.mxu0 0.0
        %431 = vmatprep.subr.mxu0 0.0
        %432 = vmatpush1.msra.mxu0 0.0
        %433 = vmatprep.subr.mxu0 0.0
        %434 = vmatpush1.msra.mxu0 0.0
        %435 = vmatprep.subr.mxu0 0.0
        %436 = vmatpush1.msra.mxu0 0.0
        %437 = vmatprep.subr.mxu0 0.0
        %438 = vmatpush1.msra.mxu0 0.0
        %439 = vmatprep.subr.mxu0 0.0
        %440 = vmatpush1.msra.mxu0 0.0
        %441 = vmatprep.subr.mxu0 0.0
        %442 = vmatpush1.msra.mxu0 0.0
        %443 = vmatprep.subr.mxu0 0.0
        %444 = vmatpush1.msra.mxu0 0.0
        %445 = vmatprep.subr.mxu0 0.0
        %446 = vmatpush1.msra.mxu0 0.0
        %447 = vmatprep.subr.mxu0 0.0
        %448 = vmatpush1.msra.mxu0 0.0
        %449 = vmatprep.mubr.f32.mxu0 0.0
        %v450 = vand.u32 %v205, 4294901760
        %451 = vmatmul.mubr.f32.gmra.mrb[0].mxu0 %v450
        %v452 = vpop.f32.mrb[0].mxu0
        %v453 = vadd.f32 %v302, %v452
        %v454 = vpop.f32.mrb[0].mxu0
        %455 = vmatprep.mubr.f32.mxu0 0.0
        %v456 = vand.u32 %v208, 4294901760
        %457 = vmatmul.mubr.f32.gmra.mrb[0].mxu0 %v456
        %v458 = vpop.f32.mrb[0].mxu0
        %v459 = vadd.f32 %v312, %v458
        %v460 = vpop.f32.mrb[0].mxu0
        %461 = vmatprep.mubr.f32.mxu0 0.0
        %v462 = vand.u32 %v211, 4294901760
        %463 = vmatmul.mubr.f32.gmra.mrb[0].mxu0 %v462
        %v464 = vpop.f32.mrb[0].mxu0
        %v465 = vadd.f32 %v322, %v464
        %v466 = vpop.f32.mrb[0].mxu0
        %467 = vmatprep.mubr.f32.mxu0 0.0
        %v468 = vand.u32 %v214, 4294901760
        %469 = vmatmul.mubr.f32.gmra.mrb[0].mxu0 %v468
        %v470 = vpop.f32.mrb[0].mxu0
        %v471 = vadd.f32 %v332, %v470
        %v472 = vpop.f32.mrb[0].mxu0
        %473 = vmatprep.mubr.f32.mxu0 0.0
        %v474 = vand.u32 %v217, 4294901760
        %475 = vmatmul.mubr.f32.gmra.mrb[0].mxu0 %v474
        %v476 = vpop.f32.mrb[0].mxu0
        %v477 = vadd.f32 %v342, %v476
        %v478 = vpop.f32.mrb[0].mxu0
        %479 = vmatprep.mubr.f32.mxu0 0.0
        %v480 = vand.u32 %v220, 4294901760
        %481 = vmatmul.mubr.f32.gmra.mrb[0].mxu0 %v480
        %v482 = vpop.f32.mrb[0].mxu0
        %v483 = vadd.f32 %v352, %v482
        %v484 = vpop.f32.mrb[0].mxu0
        %485 = vmatprep.mubr.f32.mxu0 0.0
        %v486 = vand.u32 %v223, 4294901760
        %487 = vmatmul.mubr.f32.gmra.mrb[0].mxu0 %v486
        %v488 = vpop.f32.mrb[0].mxu0
        %v489 = vadd.f32 %v362, %v488
        %v490 = vpop.f32.mrb[0].mxu0
        %491 = vmatprep.mubr.f32.mxu0 0.0
        %v492 = vand.u32 %v226, 4294901760
        %493 = vmatmul.mubr.f32.gmra.mrb[0].mxu0 %v492
        %v494 = vpop.f32.mrb[0].mxu0
        %v495 = vadd.f32 %v372, %v494
        %v496 = vpop.f32.mrb[0].mxu0
        %497 = vdwg.mxu0
        %498 = vmatprep.subr.mxu0 0.0
        %v499 = vand.u32 %v192, 4294901760
        %v500 = vsub.f32 %v192, %v499
        %501 = vmatpush1.msra.mxu0 %v500
        %502 = vmatprep.subr.mxu0 0.0
        %v503 = vand.u32 %v193, 4294901760
        %v504 = vsub.f32 %v193, %v503
        %505 = vmatpush1.msra.mxu0 %v504
        %506 = vmatprep.subr.mxu0 0.0
        %507 = vmatpush1.msra.mxu0 0.0
        %508 = vmatprep.subr.mxu0 0.0
        %509 = vmatpush1.msra.mxu0 0.0
        %510 = vmatprep.subr.mxu0 0.0
        %511 = vmatpush1.msra.mxu0 0.0
        %512 = vmatprep.subr.mxu0 0.0
        %513 = vmatpush1.msra.mxu0 0.0
        %514 = vmatprep.subr.mxu0 0.0
        %515 = vmatpush1.msra.mxu0 0.0
        %516 = vmatprep.subr.mxu0 0.0
        %517 = vmatpush1.msra.mxu0 0.0
        %518 = vmatprep.subr.mxu0 0.0
        %519 = vmatpush1.msra.mxu0 0.0
        %520 = vmatprep.subr.mxu0 0.0
        %521 = vmatpush1.msra.mxu0 0.0
        %522 = vmatprep.subr.mxu0 0.0
        %523 = vmatpush1.msra.mxu0 0.0
        %524 = vmatprep.subr.mxu0 0.0
        %525 = vmatpush1.msra.mxu0 0.0
        %526 = vmatprep.subr.mxu0 0.0
        %527 = vmatpush1.msra.mxu0 0.0
        %528 = vmatprep.subr.mxu0 0.0
        %529 = vmatpush1.msra.mxu0 0.0
        %530 = vmatprep.subr.mxu0 0.0
        %531 = vmatpush1.msra.mxu0 0.0
        %532 = vmatprep.subr.mxu0 0.0
        %533 = vmatpush1.msra.mxu0 0.0
        %534 = vmatprep.subr.mxu0 0.0
        %535 = vmatpush1.msra.mxu0 0.0
        %536 = vmatprep.subr.mxu0 0.0
        %537 = vmatpush1.msra.mxu0 0.0
        %538 = vmatprep.subr.mxu0 0.0
        %539 = vmatpush1.msra.mxu0 0.0
        %540 = vmatprep.subr.mxu0 0.0
        %541 = vmatpush1.msra.mxu0 0.0
        %542 = vmatprep.subr.mxu0 0.0
        %543 = vmatpush1.msra.mxu0 0.0
        %544 = vmatprep.subr.mxu0 0.0
        %545 = vmatpush1.msra.mxu0 0.0
        %546 = vmatprep.subr.mxu0 0.0
        %547 = vmatpush1.msra.mxu0 0.0
        %548 = vmatprep.subr.mxu0 0.0
        %549 = vmatpush1.msra.mxu0 0.0
        %550 = vmatprep.subr.mxu0 0.0
        %551 = vmatpush1.msra.mxu0 0.0
        %552 = vmatprep.subr.mxu0 0.0
        %553 = vmatpush1.msra.mxu0 0.0
        %554 = vmatprep.subr.mxu0 0.0
        %555 = vmatpush1.msra.mxu0 0.0
        %556 = vmatprep.subr.mxu0 0.0
        %557 = vmatpush1.msra.mxu0 0.0
        %558 = vmatprep.subr.mxu0 0.0
        %559 = vmatpush1.msra.mxu0 0.0
        %560 = vmatprep.subr.mxu0 0.0
        %561 = vmatpush1.msra.mxu0 0.0
        %562 = vmatprep.subr.mxu0 0.0
        %563 = vmatpush1.msra.mxu0 0.0
        %564 = vmatprep.subr.mxu0 0.0
        %565 = vmatpush1.msra.mxu0 0.0
        %566 = vmatprep.mubr.f32.mxu0 0.0
        %v567 = vand.u32 %v205, 4294901760
        %v568 = vsub.f32 %v205, %v567
        %569 = vmatmul.mubr.f32.gmra.mrb[0].mxu0 %v568
        %v570 = vpop.f32.mrb[0].mxu0
        %v571 = vadd.f32 %v453, %v570
        %v572 = vpop.f32.mrb[0].mxu0
        %573 = vmatprep.mubr.f32.mxu0 0.0
        %v574 = vand.u32 %v208, 4294901760
        %v575 = vsub.f32 %v208, %v574
        %576 = vmatmul.mubr.f32.gmra.mrb[0].mxu0 %v575
        %v577 = vpop.f32.mrb[0].mxu0
        %v578 = vadd.f32 %v459, %v577
        %v579 = vpop.f32.mrb[0].mxu0
        %580 = vmatprep.mubr.f32.mxu0 0.0
        %v581 = vand.u32 %v211, 4294901760
        %v582 = vsub.f32 %v211, %v581
        %583 = vmatmul.mubr.f32.gmra.mrb[0].mxu0 %v582
        %v584 = vpop.f32.mrb[0].mxu0
        %v585 = vadd.f32 %v465, %v584
        %v586 = vpop.f32.mrb[0].mxu0
        %587 = vmatprep.mubr.f32.mxu0 0.0
        %v588 = vand.u32 %v214, 4294901760
        %v589 = vsub.f32 %v214, %v588
        %590 = vmatmul.mubr.f32.gmra.mrb[0].mxu0 %v589
        %v591 = vpop.f32.mrb[0].mxu0
        %v592 = vadd.f32 %v471, %v591
        %v593 = vpop.f32.mrb[0].mxu0
        %594 = vmatprep.mubr.f32.mxu0 0.0
        %v595 = vand.u32 %v217, 4294901760
        %v596 = vsub.f32 %v217, %v595
        %597 = vmatmul.mubr.f32.gmra.mrb[0].mxu0 %v596
        %v598 = vpop.f32.mrb[0].mxu0
        %v599 = vadd.f32 %v477, %v598
        %v600 = vpop.f32.mrb[0].mxu0
        %601 = vmatprep.mubr.f32.mxu0 0.0
        %v602 = vand.u32 %v220, 4294901760
        %v603 = vsub.f32 %v220, %v602
        %604 = vmatmul.mubr.f32.gmra.mrb[0].mxu0 %v603
        %v605 = vpop.f32.mrb[0].mxu0
        %v606 = vadd.f32 %v483, %v605
        %v607 = vpop.f32.mrb[0].mxu0
        %608 = vmatprep.mubr.f32.mxu0 0.0
        %v609 = vand.u32 %v223, 4294901760
        %v610 = vsub.f32 %v223, %v609
        %611 = vmatmul.mubr.f32.gmra.mrb[0].mxu0 %v610
        %v612 = vpop.f32.mrb[0].mxu0
        %v613 = vadd.f32 %v489, %v612
        %v614 = vpop.f32.mrb[0].mxu0
        %615 = vmatprep.mubr.f32.mxu0 0.0
        %v616 = vand.u32 %v226, 4294901760
        %v617 = vsub.f32 %v226, %v616
        %618 = vmatmul.mubr.f32.gmra.mrb[0].mxu0 %v617
        %v619 = vpop.f32.mrb[0].mxu0
        %v620 = vadd.f32 %v495, %v619
        %v621 = vpop.f32.mrb[0].mxu0
        %622 = vdwg.mxu0
        %623 = vmatprep.subr.mxu0 0.0
        %v624 = vand.u32 %v192, 4294901760
        %625 = vmatpush1.msra.mxu0 %v624
        %626 = vmatprep.subr.mxu0 0.0
        %v627 = vand.u32 %v193, 4294901760
        %628 = vmatpush1.msra.mxu0 %v627
        %629 = vmatprep.subr.mxu0 0.0
        %630 = vmatpush1.msra.mxu0 0.0
        %631 = vmatprep.subr.mxu0 0.0
        %632 = vmatpush1.msra.mxu0 0.0
        %633 = vmatprep.subr.mxu0 0.0
        %634 = vmatpush1.msra.mxu0 0.0
        %635 = vmatprep.subr.mxu0 0.0
        %636 = vmatpush1.msra.mxu0 0.0
        %637 = vmatprep.subr.mxu0 0.0
        %638 = vmatpush1.msra.mxu0 0.0
        %639 = vmatprep.subr.mxu0 0.0
        %640 = vmatpush1.msra.mxu0 0.0
        %641 = vmatprep.subr.mxu0 0.0
        %642 = vmatpush1.msra.mxu0 0.0
        %643 = vmatprep.subr.mxu0 0.0
        %644 = vmatpush1.msra.mxu0 0.0
        %645 = vmatprep.subr.mxu0 0.0
        %646 = vmatpush1.msra.mxu0 0.0
        %647 = vmatprep.subr.mxu0 0.0
        %648 = vmatpush1.msra.mxu0 0.0
        %649 = vmatprep.subr.mxu0 0.0
        %650 = vmatpush1.msra.mxu0 0.0
        %651 = vmatprep.subr.mxu0 0.0
        %652 = vmatpush1.msra.mxu0 0.0
        %653 = vmatprep.subr.mxu0 0.0
        %654 = vmatpush1.msra.mxu0 0.0
        %655 = vmatprep.subr.mxu0 0.0
        %656 = vmatpush1.msra.mxu0 0.0
        %657 = vmatprep.subr.mxu0 0.0
        %658 = vmatpush1.msra.mxu0 0.0
        %659 = vmatprep.subr.mxu0 0.0
        %660 = vmatpush1.msra.mxu0 0.0
        %661 = vmatprep.subr.mxu0 0.0
        %662 = vmatpush1.msra.mxu0 0.0
        %663 = vmatprep.subr.mxu0 0.0
        %664 = vmatpush1.msra.mxu0 0.0
        %665 = vmatprep.subr.mxu0 0.0
        %666 = vmatpush1.msra.mxu0 0.0
        %667 = vmatprep.subr.mxu0 0.0
        %668 = vmatpush1.msra.mxu0 0.0
        %669 = vmatprep.subr.mxu0 0.0
        %670 = vmatpush1.msra.mxu0 0.0
        %671 = vmatprep.subr.mxu0 0.0
        %672 = vmatpush1.msra.mxu0 0.0
        %673 = vmatprep.subr.mxu0 0.0
        %674 = vmatpush1.msra.mxu0 0.0
        %675 = vmatprep.subr.mxu0 0.0
        %676 = vmatpush1.msra.mxu0 0.0
        %677 = vmatprep.subr.mxu0 0.0
        %678 = vmatpush1.msra.mxu0 0.0
        %679 = vmatprep.subr.mxu0 0.0
        %680 = vmatpush1.msra.mxu0 0.0
        %681 = vmatprep.subr.mxu0 0.0
        %682 = vmatpush1.msra.mxu0 0.0
        %683 = vmatprep.subr.mxu0 0.0
        %684 = vmatpush1.msra.mxu0 0.0
        %685 = vmatprep.subr.mxu0 0.0
        %686 = vmatpush1.msra.mxu0 0.0
        %687 = vmatprep.subr.mxu0 0.0
        %688 = vmatpush1.msra.mxu0 0.0
        %689 = vmatprep.mubr.f32.mxu0 0.0
        %v690 = vand.u32 %v205, 4294901760
        %v691 = vsub.f32 %v205, %v690
        %v692 = vand.u32 %v691, 4294901760
        %693 = vmatmul.mubr.f32.gmra.mrb[0].mxu0 %v692
        %v694 = vpop.f32.mrb[0].mxu0
        %v695 = vadd.f32 %v571, %v694
        %v696 = vpop.f32.mrb[0].mxu0
        %697 = vmatprep.mubr.f32.mxu0 0.0
        %v698 = vand.u32 %v208, 4294901760
        %v699 = vsub.f32 %v208, %v698
        %v700 = vand.u32 %v699, 4294901760
        %701 = vmatmul.mubr.f32.gmra.mrb[0].mxu0 %v700
        %v702 = vpop.f32.mrb[0].mxu0
        %v703 = vadd.f32 %v578, %v702
        %v704 = vpop.f32.mrb[0].mxu0
        %705 = vmatprep.mubr.f32.mxu0 0.0
        %v706 = vand.u32 %v211, 4294901760
        %v707 = vsub.f32 %v211, %v706
        %v708 = vand.u32 %v707, 4294901760
        %709 = vmatmul.mubr.f32.gmra.mrb[0].mxu0 %v708
        %v710 = vpop.f32.mrb[0].mxu0
        %v711 = vadd.f32 %v585, %v710
        %v712 = vpop.f32.mrb[0].mxu0
        %713 = vmatprep.mubr.f32.mxu0 0.0
        %v714 = vand.u32 %v214, 4294901760
        %v715 = vsub.f32 %v214, %v714
        %v716 = vand.u32 %v715, 4294901760
        %717 = vmatmul.mubr.f32.gmra.mrb[0].mxu0 %v716
        %v718 = vpop.f32.mrb[0].mxu0
        %v719 = vadd.f32 %v592, %v718
        %v720 = vpop.f32.mrb[0].mxu0
        %721 = vmatprep.mubr.f32.mxu0 0.0
        %v722 = vand.u32 %v217, 4294901760
        %v723 = vsub.f32 %v217, %v722
        %v724 = vand.u32 %v723, 4294901760
        %725 = vmatmul.mubr.f32.gmra.mrb[0].mxu0 %v724
        %v726 = vpop.f32.mrb[0].mxu0
        %v727 = vadd.f32 %v599, %v726
        %v728 = vpop.f32.mrb[0].mxu0
        %729 = vmatprep.mubr.f32.mxu0 0.0
        %v730 = vand.u32 %v220, 4294901760
        %v731 = vsub.f32 %v220, %v730
        %v732 = vand.u32 %v731, 4294901760
        %733 = vmatmul.mubr.f32.gmra.mrb[0].mxu0 %v732
        %v734 = vpop.f32.mrb[0].mxu0
        %v735 = vadd.f32 %v606, %v734
        %v736 = vpop.f32.mrb[0].mxu0
        %737 = vmatprep.mubr.f32.mxu0 0.0
        %v738 = vand.u32 %v223, 4294901760
        %v739 = vsub.f32 %v223, %v738
        %v740 = vand.u32 %v739, 4294901760
        %741 = vmatmul.mubr.f32.gmra.mrb[0].mxu0 %v740
        %v742 = vpop.f32.mrb[0].mxu0
        %v743 = vadd.f32 %v613, %v742
        %v744 = vpop.f32.mrb[0].mxu0
        %745 = vmatprep.mubr.f32.mxu0 0.0
        %v746 = vand.u32 %v226, 4294901760
        %v747 = vsub.f32 %v226, %v746
        %v748 = vand.u32 %v747, 4294901760
        %749 = vmatmul.mubr.f32.gmra.mrb[0].mxu0 %v748
        %v750 = vpop.f32.mrb[0].mxu0
        %v751 = vadd.f32 %v620, %v750
        %v752 = vpop.f32.mrb[0].mxu0
        %753 = vdwg.mxu0
        %754 = vmatprep.subr.mxu0 0.0
        %v755 = vand.u32 %v192, 4294901760
        %v756 = vsub.f32 %v192, %v755
        %v757 = vand.u32 %v756, 4294901760
        %758 = vmatpush1.msra.mxu0 %v757
        %759 = vmatprep.subr.mxu0 0.0
        %v760 = vand.u32 %v193, 4294901760
        %v761 = vsub.f32 %v193, %v760
        %v762 = vand.u32 %v761, 4294901760
        %763 = vmatpush1.msra.mxu0 %v762
        %764 = vmatprep.subr.mxu0 0.0
        %765 = vmatpush1.msra.mxu0 0.0
        %766 = vmatprep.subr.mxu0 0.0
        %767 = vmatpush1.msra.mxu0 0.0
        %768 = vmatprep.subr.mxu0 0.0
        %769 = vmatpush1.msra.mxu0 0.0
        %770 = vmatprep.subr.mxu0 0.0
        %771 = vmatpush1.msra.mxu0 0.0
        %772 = vmatprep.subr.mxu0 0.0
        %773 = vmatpush1.msra.mxu0 0.0
        %774 = vmatprep.subr.mxu0 0.0
        %775 = vmatpush1.msra.mxu0 0.0
        %776 = vmatprep.subr.mxu0 0.0
        %777 = vmatpush1.msra.mxu0 0.0
        %778 = vmatprep.subr.mxu0 0.0
        %779 = vmatpush1.msra.mxu0 0.0
        %780 = vmatprep.subr.mxu0 0.0
        %781 = vmatpush1.msra.mxu0 0.0
        %782 = vmatprep.subr.mxu0 0.0
        %783 = vmatpush1.msra.mxu0 0.0
        %784 = vmatprep.subr.mxu0 0.0
        %785 = vmatpush1.msra.mxu0 0.0
        %786 = vmatprep.subr.mxu0 0.0
        %787 = vmatpush1.msra.mxu0 0.0
        %788 = vmatprep.subr.mxu0 0.0
        %789 = vmatpush1.msra.mxu0 0.0
        %790 = vmatprep.subr.mxu0 0.0
        %791 = vmatpush1.msra.mxu0 0.0
        %792 = vmatprep.subr.mxu0 0.0
        %793 = vmatpush1.msra.mxu0 0.0
        %794 = vmatprep.subr.mxu0 0.0
        %795 = vmatpush1.msra.mxu0 0.0
        %796 = vmatprep.subr.mxu0 0.0
        %797 = vmatpush1.msra.mxu0 0.0
        %798 = vmatprep.subr.mxu0 0.0
        %799 = vmatpush1.msra.mxu0 0.0
        %800 = vmatprep.subr.mxu0 0.0
        %801 = vmatpush1.msra.mxu0 0.0
        %802 = vmatprep.subr.mxu0 0.0
        %803 = vmatpush1.msra.mxu0 0.0
        %804 = vmatprep.subr.mxu0 0.0
        %805 = vmatpush1.msra.mxu0 0.0
        %806 = vmatprep.subr.mxu0 0.0
        %807 = vmatpush1.msra.mxu0 0.0
        %808 = vmatprep.subr.mxu0 0.0
        %809 = vmatpush1.msra.mxu0 0.0
        %810 = vmatprep.subr.mxu0 0.0
        %811 = vmatpush1.msra.mxu0 0.0
        %812 = vmatprep.subr.mxu0 0.0
        %813 = vmatpush1.msra.mxu0 0.0
        %814 = vmatprep.subr.mxu0 0.0
        %815 = vmatpush1.msra.mxu0 0.0
        %816 = vmatprep.subr.mxu0 0.0
        %817 = vmatpush1.msra.mxu0 0.0
        %818 = vmatprep.subr.mxu0 0.0
        %819 = vmatpush1.msra.mxu0 0.0
        %820 = vmatprep.subr.mxu0 0.0
        %821 = vmatpush1.msra.mxu0 0.0
        %822 = vmatprep.subr.mxu0 0.0
        %823 = vmatpush1.msra.mxu0 0.0
        %824 = vmatprep.mubr.f32.mxu0 0.0
        %v825 = vand.u32 %v205, 4294901760
        %826 = vmatmul.mubr.f32.gmra.mrb[0].mxu0 %v825
        %v827 = vpop.f32.mrb[0].mxu0
        %v828 = vadd.f32 %v695, %v827
        %v829 = vpop.f32.mrb[0].mxu0
        %830 = vmatprep.mubr.f32.mxu0 0.0
        %v831 = vand.u32 %v208, 4294901760
        %832 = vmatmul.mubr.f32.gmra.mrb[0].mxu0 %v831
        %v833 = vpop.f32.mrb[0].mxu0
        %v834 = vadd.f32 %v703, %v833
        %v835 = vpop.f32.mrb[0].mxu0
        %836 = vmatprep.mubr.f32.mxu0 0.0
        %v837 = vand.u32 %v211, 4294901760
        %838 = vmatmul.mubr.f32.gmra.mrb[0].mxu0 %v837
        %v839 = vpop.f32.mrb[0].mxu0
        %v840 = vadd.f32 %v711, %v839
        %v841 = vpop.f32.mrb[0].mxu0
        %842 = vmatprep.mubr.f32.mxu0 0.0
        %v843 = vand.u32 %v214, 4294901760
        %844 = vmatmul.mubr.f32.gmra.mrb[0].mxu0 %v843
        %v845 = vpop.f32.mrb[0].mxu0
        %v846 = vadd.f32 %v719, %v845
        %v847 = vpop.f32.mrb[0].mxu0
        %848 = vmatprep.mubr.f32.mxu0 0.0
        %v849 = vand.u32 %v217, 4294901760
        %850 = vmatmul.mubr.f32.gmra.mrb[0].mxu0 %v849
        %v851 = vpop.f32.mrb[0].mxu0
        %v852 = vadd.f32 %v727, %v851
        %v853 = vpop.f32.mrb[0].mxu0
        %854 = vmatprep.mubr.f32.mxu0 0.0
        %v855 = vand.u32 %v220, 4294901760
        %856 = vmatmul.mubr.f32.gmra.mrb[0].mxu0 %v855
        %v857 = vpop.f32.mrb[0].mxu0
        %v858 = vadd.f32 %v735, %v857
        %v859 = vpop.f32.mrb[0].mxu0
        %860 = vmatprep.mubr.f32.mxu0 0.0
        %v861 = vand.u32 %v223, 4294901760
        %862 = vmatmul.mubr.f32.gmra.mrb[0].mxu0 %v861
        %v863 = vpop.f32.mrb[0].mxu0
        %v864 = vadd.f32 %v743, %v863
        %v865 = vpop.f32.mrb[0].mxu0
        %866 = vmatprep.mubr.f32.mxu0 0.0
        %v867 = vand.u32 %v226, 4294901760
        %868 = vmatmul.mubr.f32.gmra.mrb[0].mxu0 %v867
        %v869 = vpop.f32.mrb[0].mxu0
        %v870 = vadd.f32 %v751, %v869
        %v871 = vpop.f32.mrb[0].mxu0
        %872 = vdwg.mxu0
        %873 = vmatprep.subr.mxu0 0.0
        %v874 = vand.u32 %v192, 4294901760
        %875 = vmatpush1.msra.mxu0 %v874
        %876 = vmatprep.subr.mxu0 0.0
        %v877 = vand.u32 %v193, 4294901760
        %878 = vmatpush1.msra.mxu0 %v877
        %879 = vmatprep.subr.mxu0 0.0
        %880 = vmatpush1.msra.mxu0 0.0
        %881 = vmatprep.subr.mxu0 0.0
        %882 = vmatpush1.msra.mxu0 0.0
        %883 = vmatprep.subr.mxu0 0.0
        %884 = vmatpush1.msra.mxu0 0.0
        %885 = vmatprep.subr.mxu0 0.0
        %886 = vmatpush1.msra.mxu0 0.0
        %887 = vmatprep.subr.mxu0 0.0
        %888 = vmatpush1.msra.mxu0 0.0
        %889 = vmatprep.subr.mxu0 0.0
        %890 = vmatpush1.msra.mxu0 0.0
        %891 = vmatprep.subr.mxu0 0.0
        %892 = vmatpush1.msra.mxu0 0.0
        %893 = vmatprep.subr.mxu0 0.0
        %894 = vmatpush1.msra.mxu0 0.0
        %895 = vmatprep.subr.mxu0 0.0
        %896 = vmatpush1.msra.mxu0 0.0
        %897 = vmatprep.subr.mxu0 0.0
        %898 = vmatpush1.msra.mxu0 0.0
        %899 = vmatprep.subr.mxu0 0.0
        %900 = vmatpush1.msra.mxu0 0.0
        %901 = vmatprep.subr.mxu0 0.0
        %902 = vmatpush1.msra.mxu0 0.0
        %903 = vmatprep.subr.mxu0 0.0
        %904 = vmatpush1.msra.mxu0 0.0
        %905 = vmatprep.subr.mxu0 0.0
        %906 = vmatpush1.msra.mxu0 0.0
        %907 = vmatprep.subr.mxu0 0.0
        %908 = vmatpush1.msra.mxu0 0.0
        %909 = vmatprep.subr.mxu0 0.0
        %910 = vmatpush1.msra.mxu0 0.0
        %911 = vmatprep.subr.mxu0 0.0
        %912 = vmatpush1.msra.mxu0 0.0
        %913 = vmatprep.subr.mxu0 0.0
        %914 = vmatpush1.msra.mxu0 0.0
        %915 = vmatprep.subr.mxu0 0.0
        %916 = vmatpush1.msra.mxu0 0.0
        %917 = vmatprep.subr.mxu0 0.0
        %918 = vmatpush1.msra.mxu0 0.0
        %919 = vmatprep.subr.mxu0 0.0
        %920 = vmatpush1.msra.mxu0 0.0
        %921 = vmatprep.subr.mxu0 0.0
        %922 = vmatpush1.msra.mxu0 0.0
        %923 = vmatprep.subr.mxu0 0.0
        %924 = vmatpush1.msra.mxu0 0.0
        %925 = vmatprep.subr.mxu0 0.0
        %926 = vmatpush1.msra.mxu0 0.0
        %927 = vmatprep.subr.mxu0 0.0
        %928 = vmatpush1.msra.mxu0 0.0
        %929 = vmatprep.subr.mxu0 0.0
        %930 = vmatpush1.msra.mxu0 0.0
        %931 = vmatprep.subr.mxu0 0.0
        %932 = vmatpush1.msra.mxu0 0.0
        %933 = vmatprep.subr.mxu0 0.0
        %934 = vmatpush1.msra.mxu0 0.0
        %935 = vmatprep.subr.mxu0 0.0
        %936 = vmatpush1.msra.mxu0 0.0
        %937 = vmatprep.subr.mxu0 0.0
        %938 = vmatpush1.msra.mxu0 0.0
        %939 = vmatprep.mubr.f32.mxu0 0.0
        %v940 = vand.u32 %v205, 4294901760
        %941 = vmatmul.mubr.f32.gmra.mrb[0].mxu0 %v940
        %v942 = vpop.f32.mrb[0].mxu0
        %v943 = vadd.f32 %v828, %v942
        %v944 = vpop.f32.mrb[0].mxu0
        %945 = vmatprep.mubr.f32.mxu0 0.0
        %v946 = vand.u32 %v208, 4294901760
        %947 = vmatmul.mubr.f32.gmra.mrb[0].mxu0 %v946
        %v948 = vpop.f32.mrb[0].mxu0
        %v949 = vadd.f32 %v834, %v948
        %v950 = vpop.f32.mrb[0].mxu0
        %951 = vmatprep.mubr.f32.mxu0 0.0
        %v952 = vand.u32 %v211, 4294901760
        %953 = vmatmul.mubr.f32.gmra.mrb[0].mxu0 %v952
        %v954 = vpop.f32.mrb[0].mxu0
        %v955 = vadd.f32 %v840, %v954
        %v956 = vpop.f32.mrb[0].mxu0
        %957 = vmatprep.mubr.f32.mxu0 0.0
        %v958 = vand.u32 %v214, 4294901760
        %959 = vmatmul.mubr.f32.gmra.mrb[0].mxu0 %v958
        %v960 = vpop.f32.mrb[0].mxu0
        %v961 = vadd.f32 %v846, %v960
        %v962 = vpop.f32.mrb[0].mxu0
        %963 = vmatprep.mubr.f32.mxu0 0.0
        %v964 = vand.u32 %v217, 4294901760
        %965 = vmatmul.mubr.f32.gmra.mrb[0].mxu0 %v964
        %v966 = vpop.f32.mrb[0].mxu0
        %v967 = vadd.f32 %v852, %v966
        %v968 = vpop.f32.mrb[0].mxu0
        %969 = vmatprep.mubr.f32.mxu0 0.0
        %v970 = vand.u32 %v220, 4294901760
        %971 = vmatmul.mubr.f32.gmra.mrb[0].mxu0 %v970
        %v972 = vpop.f32.mrb[0].mxu0
        %v973 = vadd.f32 %v858, %v972
        %v974 = vpop.f32.mrb[0].mxu0
        %975 = vmatprep.mubr.f32.mxu0 0.0
        %v976 = vand.u32 %v223, 4294901760
        %977 = vmatmul.mubr.f32.gmra.mrb[0].mxu0 %v976
        %v978 = vpop.f32.mrb[0].mxu0
        %v979 = vadd.f32 %v864, %v978
        %v980 = vpop.f32.mrb[0].mxu0
        %981 = vmatprep.mubr.f32.mxu0 0.0
        %v982 = vand.u32 %v226, 4294901760
        %983 = vmatmul.mubr.f32.gmra.mrb[0].mxu0 %v982
        %v984 = vpop.f32.mrb[0].mxu0
        %v985 = vadd.f32 %v870, %v984
        %v986 = vpop.f32.mrb[0].mxu0
        %987 = vdwg.mxu0
        %v989 = vsel %vm203, %v178, 0
        %v992 = vsel %vm203, %v179, 0
        %v995 = vsel %vm203, %v180, 0
        %v998 = vsel %vm203, %v181, 0
        %v1001 = vsel %vm203, %v182, 0
        %v1004 = vsel %vm203, %v183, 0
        %v1007 = vsel %vm203, %v184, 0
        %v1010 = vsel %vm203, %v185, 0
        %1012 = vmatprep.subr.mxu0 0.0
        %v1013 = vand.u32 %v176, 4294901760
        %1014 = vmatpush1.msra.mxu0 %v1013
        %1015 = vmatprep.subr.mxu0 0.0
        %v1016 = vand.u32 %v177, 4294901760
        %1017 = vmatpush1.msra.mxu0 %v1016
        %1018 = vmatprep.subr.mxu0 0.0
        %1019 = vmatpush1.msra.mxu0 0.0
        %1020 = vmatprep.subr.mxu0 0.0
        %1021 = vmatpush1.msra.mxu0 0.0
        %1022 = vmatprep.subr.mxu0 0.0
        %1023 = vmatpush1.msra.mxu0 0.0
        %1024 = vmatprep.subr.mxu0 0.0
        %1025 = vmatpush1.msra.mxu0 0.0
        %1026 = vmatprep.subr.mxu0 0.0
        %1027 = vmatpush1.msra.mxu0 0.0
        %1028 = vmatprep.subr.mxu0 0.0
        %1029 = vmatpush1.msra.mxu0 0.0
        %1030 = vmatprep.subr.mxu0 0.0
        %1031 = vmatpush1.msra.mxu0 0.0
        %1032 = vmatprep.subr.mxu0 0.0
        %1033 = vmatpush1.msra.mxu0 0.0
        %1034 = vmatprep.subr.mxu0 0.0
        %1035 = vmatpush1.msra.mxu0 0.0
        %1036 = vmatprep.subr.mxu0 0.0
        %1037 = vmatpush1.msra.mxu0 0.0
        %1038 = vmatprep.subr.mxu0 0.0
        %1039 = vmatpush1.msra.mxu0 0.0
        %1040 = vmatprep.subr.mxu0 0.0
        %1041 = vmatpush1.msra.mxu0 0.0
        %1042 = vmatprep.subr.mxu0 0.0
        %1043 = vmatpush1.msra.mxu0 0.0
        %1044 = vmatprep.subr.mxu0 0.0
        %1045 = vmatpush1.msra.mxu0 0.0
        %1046 = vmatprep.subr.mxu0 0.0
        %1047 = vmatpush1.msra.mxu0 0.0
        %1048 = vmatprep.subr.mxu0 0.0
        %1049 = vmatpush1.msra.mxu0 0.0
        %1050 = vmatprep.subr.mxu0 0.0
        %1051 = vmatpush1.msra.mxu0 0.0
        %1052 = vmatprep.subr.mxu0 0.0
        %1053 = vmatpush1.msra.mxu0 0.0
        %1054 = vmatprep.subr.mxu0 0.0
        %1055 = vmatpush1.msra.mxu0 0.0
        %1056 = vmatprep.subr.mxu0 0.0
        %1057 = vmatpush1.msra.mxu0 0.0
        %1058 = vmatprep.subr.mxu0 0.0
        %1059 = vmatpush1.msra.mxu0 0.0
        %1060 = vmatprep.subr.mxu0 0.0
        %1061 = vmatpush1.msra.mxu0 0.0
        %1062 = vmatprep.subr.mxu0 0.0
        %1063 = vmatpush1.msra.mxu0 0.0
        %1064 = vmatprep.subr.mxu0 0.0
        %1065 = vmatpush1.msra.mxu0 0.0
        %1066 = vmatprep.subr.mxu0 0.0
        %1067 = vmatpush1.msra.mxu0 0.0
        %1068 = vmatprep.subr.mxu0 0.0
        %1069 = vmatpush1.msra.mxu0 0.0
        %1070 = vmatprep.subr.mxu0 0.0
        %1071 = vmatpush1.msra.mxu0 0.0
        %1072 = vmatprep.subr.mxu0 0.0
        %1073 = vmatpush1.msra.mxu0 0.0
        %1074 = vmatprep.subr.mxu0 0.0
        %1075 = vmatpush1.msra.mxu0 0.0
        %1076 = vmatprep.subr.mxu0 0.0
        %1077 = vmatpush1.msra.mxu0 0.0
        %1078 = vmatprep.mubr.f32.mxu0 0.0
        %v1079 = vand.u32 %v989, 4294901760
        %v1080 = vsub.f32 %v989, %v1079
        %v1081 = vand.u32 %v1080, 4294901760
        %v1082 = vsub.f32 %v1080, %v1081
        %v1083 = vand.u32 %v1082, 4294901760
        %1084 = vmatmul.mubr.f32.gmra.mrb[0].mxu0 %v1083
        %v1085 = vpop.f32.mrb[0].mxu0
        %v1086 = vadd.f32 %v943, %v1085
        %v1087 = vpop.f32.mrb[0].mxu0
        %1088 = vmatprep.mubr.f32.mxu0 0.0
        %v1089 = vand.u32 %v992, 4294901760
        %v1090 = vsub.f32 %v992, %v1089
        %v1091 = vand.u32 %v1090, 4294901760
        %v1092 = vsub.f32 %v1090, %v1091
        %v1093 = vand.u32 %v1092, 4294901760
        %1094 = vmatmul.mubr.f32.gmra.mrb[0].mxu0 %v1093
        %v1095 = vpop.f32.mrb[0].mxu0
        %v1096 = vadd.f32 %v949, %v1095
        %v1097 = vpop.f32.mrb[0].mxu0
        %1098 = vmatprep.mubr.f32.mxu0 0.0
        %v1099 = vand.u32 %v995, 4294901760
        %v1100 = vsub.f32 %v995, %v1099
        %v1101 = vand.u32 %v1100, 4294901760
        %v1102 = vsub.f32 %v1100, %v1101
        %v1103 = vand.u32 %v1102, 4294901760
        %1104 = vmatmul.mubr.f32.gmra.mrb[0].mxu0 %v1103
        %v1105 = vpop.f32.mrb[0].mxu0
        %v1106 = vadd.f32 %v955, %v1105
        %v1107 = vpop.f32.mrb[0].mxu0
        %1108 = vmatprep.mubr.f32.mxu0 0.0
        %v1109 = vand.u32 %v998, 4294901760
        %v1110 = vsub.f32 %v998, %v1109
        %v1111 = vand.u32 %v1110, 4294901760
        %v1112 = vsub.f32 %v1110, %v1111
        %v1113 = vand.u32 %v1112, 4294901760
        %1114 = vmatmul.mubr.f32.gmra.mrb[0].mxu0 %v1113
        %v1115 = vpop.f32.mrb[0].mxu0
        %v1116 = vadd.f32 %v961, %v1115
        %v1117 = vpop.f32.mrb[0].mxu0
        %1118 = vmatprep.mubr.f32.mxu0 0.0
        %v1119 = vand.u32 %v1001, 4294901760
        %v1120 = vsub.f32 %v1001, %v1119
        %v1121 = vand.u32 %v1120, 4294901760
        %v1122 = vsub.f32 %v1120, %v1121
        %v1123 = vand.u32 %v1122, 4294901760
        %1124 = vmatmul.mubr.f32.gmra.mrb[0].mxu0 %v1123
        %v1125 = vpop.f32.mrb[0].mxu0
        %v1126 = vadd.f32 %v967, %v1125
        %v1127 = vpop.f32.mrb[0].mxu0
        %1128 = vmatprep.mubr.f32.mxu0 0.0
        %v1129 = vand.u32 %v1004, 4294901760
        %v1130 = vsub.f32 %v1004, %v1129
        %v1131 = vand.u32 %v1130, 4294901760
        %v1132 = vsub.f32 %v1130, %v1131
        %v1133 = vand.u32 %v1132, 4294901760
        %1134 = vmatmul.mubr.f32.gmra.mrb[0].mxu0 %v1133
        %v1135 = vpop.f32.mrb[0].mxu0
        %v1136 = vadd.f32 %v973, %v1135
        %v1137 = vpop.f32.mrb[0].mxu0
        %1138 = vmatprep.mubr.f32.mxu0 0.0
        %v1139 = vand.u32 %v1007, 4294901760
        %v1140 = vsub.f32 %v1007, %v1139
        %v1141 = vand.u32 %v1140, 4294901760
        %v1142 = vsub.f32 %v1140, %v1141
        %v1143 = vand.u32 %v1142, 4294901760
        %1144 = vmatmul.mubr.f32.gmra.mrb[0].mxu0 %v1143
        %v1145 = vpop.f32.mrb[0].mxu0
        %v1146 = vadd.f32 %v979, %v1145
        %v1147 = vpop.f32.mrb[0].mxu0
        %1148 = vmatprep.mubr.f32.mxu0 0.0
        %v1149 = vand.u32 %v1010, 4294901760
        %v1150 = vsub.f32 %v1010, %v1149
        %v1151 = vand.u32 %v1150, 4294901760
        %v1152 = vsub.f32 %v1150, %v1151
        %v1153 = vand.u32 %v1152, 4294901760
        %1154 = vmatmul.mubr.f32.gmra.mrb[0].mxu0 %v1153
        %v1155 = vpop.f32.mrb[0].mxu0
        %v1156 = vadd.f32 %v985, %v1155
        %v1157 = vpop.f32.mrb[0].mxu0
        %1158 = vdwg.mxu0
        %1159 = vmatprep.subr.mxu0 0.0
        %v1160 = vand.u32 %v176, 4294901760
        %v1161 = vsub.f32 %v176, %v1160
        %v1162 = vand.u32 %v1161, 4294901760
        %v1163 = vsub.f32 %v1161, %v1162
        %v1164 = vand.u32 %v1163, 4294901760
        %1165 = vmatpush1.msra.mxu0 %v1164
        %1166 = vmatprep.subr.mxu0 0.0
        %v1167 = vand.u32 %v177, 4294901760
        %v1168 = vsub.f32 %v177, %v1167
        %v1169 = vand.u32 %v1168, 4294901760
        %v1170 = vsub.f32 %v1168, %v1169
        %v1171 = vand.u32 %v1170, 4294901760
        %1172 = vmatpush1.msra.mxu0 %v1171
        %1173 = vmatprep.subr.mxu0 0.0
        %1174 = vmatpush1.msra.mxu0 0.0
        %1175 = vmatprep.subr.mxu0 0.0
        %1176 = vmatpush1.msra.mxu0 0.0
        %1177 = vmatprep.subr.mxu0 0.0
        %1178 = vmatpush1.msra.mxu0 0.0
        %1179 = vmatprep.subr.mxu0 0.0
        %1180 = vmatpush1.msra.mxu0 0.0
        %1181 = vmatprep.subr.mxu0 0.0
        %1182 = vmatpush1.msra.mxu0 0.0
        %1183 = vmatprep.subr.mxu0 0.0
        %1184 = vmatpush1.msra.mxu0 0.0
        %1185 = vmatprep.subr.mxu0 0.0
        %1186 = vmatpush1.msra.mxu0 0.0
        %1187 = vmatprep.subr.mxu0 0.0
        %1188 = vmatpush1.msra.mxu0 0.0
        %1189 = vmatprep.subr.mxu0 0.0
        %1190 = vmatpush1.msra.mxu0 0.0
        %1191 = vmatprep.subr.mxu0 0.0
        %1192 = vmatpush1.msra.mxu0 0.0
        %1193 = vmatprep.subr.mxu0 0.0
        %1194 = vmatpush1.msra.mxu0 0.0
        %1195 = vmatprep.subr.mxu0 0.0
        %1196 = vmatpush1.msra.mxu0 0.0
        %1197 = vmatprep.subr.mxu0 0.0
        %1198 = vmatpush1.msra.mxu0 0.0
        %1199 = vmatprep.subr.mxu0 0.0
        %1200 = vmatpush1.msra.mxu0 0.0
        %1201 = vmatprep.subr.mxu0 0.0
        %1202 = vmatpush1.msra.mxu0 0.0
        %1203 = vmatprep.subr.mxu0 0.0
        %1204 = vmatpush1.msra.mxu0 0.0
        %1205 = vmatprep.subr.mxu0 0.0
        %1206 = vmatpush1.msra.mxu0 0.0
        %1207 = vmatprep.subr.mxu0 0.0
        %1208 = vmatpush1.msra.mxu0 0.0
        %1209 = vmatprep.subr.mxu0 0.0
        %1210 = vmatpush1.msra.mxu0 0.0
        %1211 = vmatprep.subr.mxu0 0.0
        %1212 = vmatpush1.msra.mxu0 0.0
        %1213 = vmatprep.subr.mxu0 0.0
        %1214 = vmatpush1.msra.mxu0 0.0
        %1215 = vmatprep.subr.mxu0 0.0
        %1216 = vmatpush1.msra.mxu0 0.0
        %1217 = vmatprep.subr.mxu0 0.0
        %1218 = vmatpush1.msra.mxu0 0.0
        %1219 = vmatprep.subr.mxu0 0.0
        %1220 = vmatpush1.msra.mxu0 0.0
        %1221 = vmatprep.subr.mxu0 0.0
        %1222 = vmatpush1.msra.mxu0 0.0
        %1223 = vmatprep.subr.mxu0 0.0
        %1224 = vmatpush1.msra.mxu0 0.0
        %1225 = vmatprep.subr.mxu0 0.0
        %1226 = vmatpush1.msra.mxu0 0.0
        %1227 = vmatprep.subr.mxu0 0.0
        %1228 = vmatpush1.msra.mxu0 0.0
        %1229 = vmatprep.subr.mxu0 0.0
        %1230 = vmatpush1.msra.mxu0 0.0
        %1231 = vmatprep.subr.mxu0 0.0
        %1232 = vmatpush1.msra.mxu0 0.0
        %1233 = vmatprep.mubr.f32.mxu0 0.0
        %v1234 = vand.u32 %v989, 4294901760
        %1235 = vmatmul.mubr.f32.gmra.mrb[0].mxu0 %v1234
        %v1236 = vpop.f32.mrb[0].mxu0
        %v1237 = vadd.f32 %v1086, %v1236
        %v1238 = vpop.f32.mrb[0].mxu0
        %1239 = vmatprep.mubr.f32.mxu0 0.0
        %v1240 = vand.u32 %v992, 4294901760
        %1241 = vmatmul.mubr.f32.gmra.mrb[0].mxu0 %v1240
        %v1242 = vpop.f32.mrb[0].mxu0
        %v1243 = vadd.f32 %v1096, %v1242
        %v1244 = vpop.f32.mrb[0].mxu0
        %1245 = vmatprep.mubr.f32.mxu0 0.0
        %v1246 = vand.u32 %v995, 4294901760
        %1247 = vmatmul.mubr.f32.gmra.mrb[0].mxu0 %v1246
        %v1248 = vpop.f32.mrb[0].mxu0
        %v1249 = vadd.f32 %v1106, %v1248
        %v1250 = vpop.f32.mrb[0].mxu0
        %1251 = vmatprep.mubr.f32.mxu0 0.0
        %v1252 = vand.u32 %v998, 4294901760
        %1253 = vmatmul.mubr.f32.gmra.mrb[0].mxu0 %v1252
        %v1254 = vpop.f32.mrb[0].mxu0
        %v1255 = vadd.f32 %v1116, %v1254
        %v1256 = vpop.f32.mrb[0].mxu0
        %1257 = vmatprep.mubr.f32.mxu0 0.0
        %v1258 = vand.u32 %v1001, 4294901760
        %1259 = vmatmul.mubr.f32.gmra.mrb[0].mxu0 %v1258
        %v1260 = vpop.f32.mrb[0].mxu0
        %v1261 = vadd.f32 %v1126, %v1260
        %v1262 = vpop.f32.mrb[0].mxu0
        %1263 = vmatprep.mubr.f32.mxu0 0.0
        %v1264 = vand.u32 %v1004, 4294901760
        %1265 = vmatmul.mubr.f32.gmra.mrb[0].mxu0 %v1264
        %v1266 = vpop.f32.mrb[0].mxu0
        %v1267 = vadd.f32 %v1136, %v1266
        %v1268 = vpop.f32.mrb[0].mxu0
        %1269 = vmatprep.mubr.f32.mxu0 0.0
        %v1270 = vand.u32 %v1007, 4294901760
        %1271 = vmatmul.mubr.f32.gmra.mrb[0].mxu0 %v1270
        %v1272 = vpop.f32.mrb[0].mxu0
        %v1273 = vadd.f32 %v1146, %v1272
        %v1274 = vpop.f32.mrb[0].mxu0
        %1275 = vmatprep.mubr.f32.mxu0 0.0
        %v1276 = vand.u32 %v1010, 4294901760
        %1277 = vmatmul.mubr.f32.gmra.mrb[0].mxu0 %v1276
        %v1278 = vpop.f32.mrb[0].mxu0
        %v1279 = vadd.f32 %v1156, %v1278
        %v1280 = vpop.f32.mrb[0].mxu0
        %1281 = vdwg.mxu0
        %1282 = vmatprep.subr.mxu0 0.0
        %v1283 = vand.u32 %v176, 4294901760
        %v1284 = vsub.f32 %v176, %v1283
        %1285 = vmatpush1.msra.mxu0 %v1284
        %1286 = vmatprep.subr.mxu0 0.0
        %v1287 = vand.u32 %v177, 4294901760
        %v1288 = vsub.f32 %v177, %v1287
        %1289 = vmatpush1.msra.mxu0 %v1288
        %1290 = vmatprep.subr.mxu0 0.0
        %1291 = vmatpush1.msra.mxu0 0.0
        %1292 = vmatprep.subr.mxu0 0.0
        %1293 = vmatpush1.msra.mxu0 0.0
        %1294 = vmatprep.subr.mxu0 0.0
        %1295 = vmatpush1.msra.mxu0 0.0
        %1296 = vmatprep.subr.mxu0 0.0
        %1297 = vmatpush1.msra.mxu0 0.0
        %1298 = vmatprep.subr.mxu0 0.0
        %1299 = vmatpush1.msra.mxu0 0.0
        %1300 = vmatprep.subr.mxu0 0.0
        %1301 = vmatpush1.msra.mxu0 0.0
        %1302 = vmatprep.subr.mxu0 0.0
        %1303 = vmatpush1.msra.mxu0 0.0
        %1304 = vmatprep.subr.mxu0 0.0
        %1305 = vmatpush1.msra.mxu0 0.0
        %1306 = vmatprep.subr.mxu0 0.0
        %1307 = vmatpush1.msra.mxu0 0.0
        %1308 = vmatprep.subr.mxu0 0.0
        %1309 = vmatpush1.msra.mxu0 0.0
        %1310 = vmatprep.subr.mxu0 0.0
        %1311 = vmatpush1.msra.mxu0 0.0
        %1312 = vmatprep.subr.mxu0 0.0
        %1313 = vmatpush1.msra.mxu0 0.0
        %1314 = vmatprep.subr.mxu0 0.0
        %1315 = vmatpush1.msra.mxu0 0.0
        %1316 = vmatprep.subr.mxu0 0.0
        %1317 = vmatpush1.msra.mxu0 0.0
        %1318 = vmatprep.subr.mxu0 0.0
        %1319 = vmatpush1.msra.mxu0 0.0
        %1320 = vmatprep.subr.mxu0 0.0
        %1321 = vmatpush1.msra.mxu0 0.0
        %1322 = vmatprep.subr.mxu0 0.0
        %1323 = vmatpush1.msra.mxu0 0.0
        %1324 = vmatprep.subr.mxu0 0.0
        %1325 = vmatpush1.msra.mxu0 0.0
        %1326 = vmatprep.subr.mxu0 0.0
        %1327 = vmatpush1.msra.mxu0 0.0
        %1328 = vmatprep.subr.mxu0 0.0
        %1329 = vmatpush1.msra.mxu0 0.0
        %1330 = vmatprep.subr.mxu0 0.0
        %1331 = vmatpush1.msra.mxu0 0.0
        %1332 = vmatprep.subr.mxu0 0.0
        %1333 = vmatpush1.msra.mxu0 0.0
        %1334 = vmatprep.subr.mxu0 0.0
        %1335 = vmatpush1.msra.mxu0 0.0
        %1336 = vmatprep.subr.mxu0 0.0
        %1337 = vmatpush1.msra.mxu0 0.0
        %1338 = vmatprep.subr.mxu0 0.0
        %1339 = vmatpush1.msra.mxu0 0.0
        %1340 = vmatprep.subr.mxu0 0.0
        %1341 = vmatpush1.msra.mxu0 0.0
        %1342 = vmatprep.subr.mxu0 0.0
        %1343 = vmatpush1.msra.mxu0 0.0
        %1344 = vmatprep.subr.mxu0 0.0
        %1345 = vmatpush1.msra.mxu0 0.0
        %1346 = vmatprep.subr.mxu0 0.0
        %1347 = vmatpush1.msra.mxu0 0.0
        %1348 = vmatprep.subr.mxu0 0.0
        %1349 = vmatpush1.msra.mxu0 0.0
        %1350 = vmatprep.mubr.f32.mxu0 0.0
        %v1351 = vand.u32 %v989, 4294901760
        %v1352 = vsub.f32 %v989, %v1351
        %1353 = vmatmul.mubr.f32.gmra.mrb[0].mxu0 %v1352
        %v1354 = vpop.f32.mrb[0].mxu0
        %v1355 = vadd.f32 %v1237, %v1354
        %v1356 = vpop.f32.mrb[0].mxu0
        %1357 = vmatprep.mubr.f32.mxu0 0.0
        %v1358 = vand.u32 %v992, 4294901760
        %v1359 = vsub.f32 %v992, %v1358
        %1360 = vmatmul.mubr.f32.gmra.mrb[0].mxu0 %v1359
        %v1361 = vpop.f32.mrb[0].mxu0
        %v1362 = vadd.f32 %v1243, %v1361
        %v1363 = vpop.f32.mrb[0].mxu0
        %1364 = vmatprep.mubr.f32.mxu0 0.0
        %v1365 = vand.u32 %v995, 4294901760
        %v1366 = vsub.f32 %v995, %v1365
        %1367 = vmatmul.mubr.f32.gmra.mrb[0].mxu0 %v1366
        %v1368 = vpop.f32.mrb[0].mxu0
        %v1369 = vadd.f32 %v1249, %v1368
        %v1370 = vpop.f32.mrb[0].mxu0
        %1371 = vmatprep.mubr.f32.mxu0 0.0
        %v1372 = vand.u32 %v998, 4294901760
        %v1373 = vsub.f32 %v998, %v1372
        %1374 = vmatmul.mubr.f32.gmra.mrb[0].mxu0 %v1373
        %v1375 = vpop.f32.mrb[0].mxu0
        %v1376 = vadd.f32 %v1255, %v1375
        %v1377 = vpop.f32.mrb[0].mxu0
        %1378 = vmatprep.mubr.f32.mxu0 0.0
        %v1379 = vand.u32 %v1001, 4294901760
        %v1380 = vsub.f32 %v1001, %v1379
        %1381 = vmatmul.mubr.f32.gmra.mrb[0].mxu0 %v1380
        %v1382 = vpop.f32.mrb[0].mxu0
        %v1383 = vadd.f32 %v1261, %v1382
        %v1384 = vpop.f32.mrb[0].mxu0
        %1385 = vmatprep.mubr.f32.mxu0 0.0
        %v1386 = vand.u32 %v1004, 4294901760
        %v1387 = vsub.f32 %v1004, %v1386
        %1388 = vmatmul.mubr.f32.gmra.mrb[0].mxu0 %v1387
        %v1389 = vpop.f32.mrb[0].mxu0
        %v1390 = vadd.f32 %v1267, %v1389
        %v1391 = vpop.f32.mrb[0].mxu0
        %1392 = vmatprep.mubr.f32.mxu0 0.0
        %v1393 = vand.u32 %v1007, 4294901760
        %v1394 = vsub.f32 %v1007, %v1393
        %1395 = vmatmul.mubr.f32.gmra.mrb[0].mxu0 %v1394
        %v1396 = vpop.f32.mrb[0].mxu0
        %v1397 = vadd.f32 %v1273, %v1396
        %v1398 = vpop.f32.mrb[0].mxu0
        %1399 = vmatprep.mubr.f32.mxu0 0.0
        %v1400 = vand.u32 %v1010, 4294901760
        %v1401 = vsub.f32 %v1010, %v1400
        %1402 = vmatmul.mubr.f32.gmra.mrb[0].mxu0 %v1401
        %v1403 = vpop.f32.mrb[0].mxu0
        %v1404 = vadd.f32 %v1279, %v1403
        %v1405 = vpop.f32.mrb[0].mxu0
        %1406 = vdwg.mxu0
        %1407 = vmatprep.subr.mxu0 0.0
        %v1408 = vand.u32 %v176, 4294901760
        %1409 = vmatpush1.msra.mxu0 %v1408
        %1410 = vmatprep.subr.mxu0 0.0
        %v1411 = vand.u32 %v177, 4294901760
        %1412 = vmatpush1.msra.mxu0 %v1411
        %1413 = vmatprep.subr.mxu0 0.0
        %1414 = vmatpush1.msra.mxu0 0.0
        %1415 = vmatprep.subr.mxu0 0.0
        %1416 = vmatpush1.msra.mxu0 0.0
        %1417 = vmatprep.subr.mxu0 0.0
        %1418 = vmatpush1.msra.mxu0 0.0
        %1419 = vmatprep.subr.mxu0 0.0
        %1420 = vmatpush1.msra.mxu0 0.0
        %1421 = vmatprep.subr.mxu0 0.0
        %1422 = vmatpush1.msra.mxu0 0.0
        %1423 = vmatprep.subr.mxu0 0.0
        %1424 = vmatpush1.msra.mxu0 0.0
        %1425 = vmatprep.subr.mxu0 0.0
        %1426 = vmatpush1.msra.mxu0 0.0
        %1427 = vmatprep.subr.mxu0 0.0
        %1428 = vmatpush1.msra.mxu0 0.0
        %1429 = vmatprep.subr.mxu0 0.0
        %1430 = vmatpush1.msra.mxu0 0.0
        %1431 = vmatprep.subr.mxu0 0.0
        %1432 = vmatpush1.msra.mxu0 0.0
        %1433 = vmatprep.subr.mxu0 0.0
        %1434 = vmatpush1.msra.mxu0 0.0
        %1435 = vmatprep.subr.mxu0 0.0
        %1436 = vmatpush1.msra.mxu0 0.0
        %1437 = vmatprep.subr.mxu0 0.0
        %1438 = vmatpush1.msra.mxu0 0.0
        %1439 = vmatprep.subr.mxu0 0.0
        %1440 = vmatpush1.msra.mxu0 0.0
        %1441 = vmatprep.subr.mxu0 0.0
        %1442 = vmatpush1.msra.mxu0 0.0
        %1443 = vmatprep.subr.mxu0 0.0
        %1444 = vmatpush1.msra.mxu0 0.0
        %1445 = vmatprep.subr.mxu0 0.0
        %1446 = vmatpush1.msra.mxu0 0.0
        %1447 = vmatprep.subr.mxu0 0.0
        %1448 = vmatpush1.msra.mxu0 0.0
        %1449 = vmatprep.subr.mxu0 0.0
        %1450 = vmatpush1.msra.mxu0 0.0
        %1451 = vmatprep.subr.mxu0 0.0
        %1452 = vmatpush1.msra.mxu0 0.0
        %1453 = vmatprep.subr.mxu0 0.0
        %1454 = vmatpush1.msra.mxu0 0.0
        %1455 = vmatprep.subr.mxu0 0.0
        %1456 = vmatpush1.msra.mxu0 0.0
        %1457 = vmatprep.subr.mxu0 0.0
        %1458 = vmatpush1.msra.mxu0 0.0
        %1459 = vmatprep.subr.mxu0 0.0
        %1460 = vmatpush1.msra.mxu0 0.0
        %1461 = vmatprep.subr.mxu0 0.0
        %1462 = vmatpush1.msra.mxu0 0.0
        %1463 = vmatprep.subr.mxu0 0.0
        %1464 = vmatpush1.msra.mxu0 0.0
        %1465 = vmatprep.subr.mxu0 0.0
        %1466 = vmatpush1.msra.mxu0 0.0
        %1467 = vmatprep.subr.mxu0 0.0
        %1468 = vmatpush1.msra.mxu0 0.0
        %1469 = vmatprep.subr.mxu0 0.0
        %1470 = vmatpush1.msra.mxu0 0.0
        %1471 = vmatprep.subr.mxu0 0.0
        %1472 = vmatpush1.msra.mxu0 0.0
        %1473 = vmatprep.mubr.f32.mxu0 0.0
        %v1474 = vand.u32 %v989, 4294901760
        %v1475 = vsub.f32 %v989, %v1474
        %v1476 = vand.u32 %v1475, 4294901760
        %1477 = vmatmul.mubr.f32.gmra.mrb[0].mxu0 %v1476
        %v1478 = vpop.f32.mrb[0].mxu0
        %v1479 = vadd.f32 %v1355, %v1478
        %v1480 = vpop.f32.mrb[0].mxu0
        %1481 = vmatprep.mubr.f32.mxu0 0.0
        %v1482 = vand.u32 %v992, 4294901760
        %v1483 = vsub.f32 %v992, %v1482
        %v1484 = vand.u32 %v1483, 4294901760
        %1485 = vmatmul.mubr.f32.gmra.mrb[0].mxu0 %v1484
        %v1486 = vpop.f32.mrb[0].mxu0
        %v1487 = vadd.f32 %v1362, %v1486
        %v1488 = vpop.f32.mrb[0].mxu0
        %1489 = vmatprep.mubr.f32.mxu0 0.0
        %v1490 = vand.u32 %v995, 4294901760
        %v1491 = vsub.f32 %v995, %v1490
        %v1492 = vand.u32 %v1491, 4294901760
        %1493 = vmatmul.mubr.f32.gmra.mrb[0].mxu0 %v1492
        %v1494 = vpop.f32.mrb[0].mxu0
        %v1495 = vadd.f32 %v1369, %v1494
        %v1496 = vpop.f32.mrb[0].mxu0
        %1497 = vmatprep.mubr.f32.mxu0 0.0
        %v1498 = vand.u32 %v998, 4294901760
        %v1499 = vsub.f32 %v998, %v1498
        %v1500 = vand.u32 %v1499, 4294901760
        %1501 = vmatmul.mubr.f32.gmra.mrb[0].mxu0 %v1500
        %v1502 = vpop.f32.mrb[0].mxu0
        %v1503 = vadd.f32 %v1376, %v1502
        %v1504 = vpop.f32.mrb[0].mxu0
        %1505 = vmatprep.mubr.f32.mxu0 0.0
        %v1506 = vand.u32 %v1001, 4294901760
        %v1507 = vsub.f32 %v1001, %v1506
        %v1508 = vand.u32 %v1507, 4294901760
        %1509 = vmatmul.mubr.f32.gmra.mrb[0].mxu0 %v1508
        %v1510 = vpop.f32.mrb[0].mxu0
        %v1511 = vadd.f32 %v1383, %v1510
        %v1512 = vpop.f32.mrb[0].mxu0
        %1513 = vmatprep.mubr.f32.mxu0 0.0
        %v1514 = vand.u32 %v1004, 4294901760
        %v1515 = vsub.f32 %v1004, %v1514
        %v1516 = vand.u32 %v1515, 4294901760
        %1517 = vmatmul.mubr.f32.gmra.mrb[0].mxu0 %v1516
        %v1518 = vpop.f32.mrb[0].mxu0
        %v1519 = vadd.f32 %v1390, %v1518
        %v1520 = vpop.f32.mrb[0].mxu0
        %1521 = vmatprep.mubr.f32.mxu0 0.0
        %v1522 = vand.u32 %v1007, 4294901760
        %v1523 = vsub.f32 %v1007, %v1522
        %v1524 = vand.u32 %v1523, 4294901760
        %1525 = vmatmul.mubr.f32.gmra.mrb[0].mxu0 %v1524
        %v1526 = vpop.f32.mrb[0].mxu0
        %v1527 = vadd.f32 %v1397, %v1526
        %v1528 = vpop.f32.mrb[0].mxu0
        %1529 = vmatprep.mubr.f32.mxu0 0.0
        %v1530 = vand.u32 %v1010, 4294901760
        %v1531 = vsub.f32 %v1010, %v1530
        %v1532 = vand.u32 %v1531, 4294901760
        %1533 = vmatmul.mubr.f32.gmra.mrb[0].mxu0 %v1532
        %v1534 = vpop.f32.mrb[0].mxu0
        %v1535 = vadd.f32 %v1404, %v1534
        %v1536 = vpop.f32.mrb[0].mxu0
        %1537 = vdwg.mxu0
        %1538 = vmatprep.subr.mxu0 0.0
        %v1539 = vand.u32 %v176, 4294901760
        %v1540 = vsub.f32 %v176, %v1539
        %v1541 = vand.u32 %v1540, 4294901760
        %1542 = vmatpush1.msra.mxu0 %v1541
        %1543 = vmatprep.subr.mxu0 0.0
        %v1544 = vand.u32 %v177, 4294901760
        %v1545 = vsub.f32 %v177, %v1544
        %v1546 = vand.u32 %v1545, 4294901760
        %1547 = vmatpush1.msra.mxu0 %v1546
        %1548 = vmatprep.subr.mxu0 0.0
        %1549 = vmatpush1.msra.mxu0 0.0
        %1550 = vmatprep.subr.mxu0 0.0
        %1551 = vmatpush1.msra.mxu0 0.0
        %1552 = vmatprep.subr.mxu0 0.0
        %1553 = vmatpush1.msra.mxu0 0.0
        %1554 = vmatprep.subr.mxu0 0.0
        %1555 = vmatpush1.msra.mxu0 0.0
        %1556 = vmatprep.subr.mxu0 0.0
        %1557 = vmatpush1.msra.mxu0 0.0
        %1558 = vmatprep.subr.mxu0 0.0
        %1559 = vmatpush1.msra.mxu0 0.0
        %1560 = vmatprep.subr.mxu0 0.0
        %1561 = vmatpush1.msra.mxu0 0.0
        %1562 = vmatprep.subr.mxu0 0.0
        %1563 = vmatpush1.msra.mxu0 0.0
        %1564 = vmatprep.subr.mxu0 0.0
        %1565 = vmatpush1.msra.mxu0 0.0
        %1566 = vmatprep.subr.mxu0 0.0
        %1567 = vmatpush1.msra.mxu0 0.0
        %1568 = vmatprep.subr.mxu0 0.0
        %1569 = vmatpush1.msra.mxu0 0.0
        %1570 = vmatprep.subr.mxu0 0.0
        %1571 = vmatpush1.msra.mxu0 0.0
        %1572 = vmatprep.subr.mxu0 0.0
        %1573 = vmatpush1.msra.mxu0 0.0
        %1574 = vmatprep.subr.mxu0 0.0
        %1575 = vmatpush1.msra.mxu0 0.0
        %1576 = vmatprep.subr.mxu0 0.0
        %1577 = vmatpush1.msra.mxu0 0.0
        %1578 = vmatprep.subr.mxu0 0.0
        %1579 = vmatpush1.msra.mxu0 0.0
        %1580 = vmatprep.subr.mxu0 0.0
        %1581 = vmatpush1.msra.mxu0 0.0
        %1582 = vmatprep.subr.mxu0 0.0
        %1583 = vmatpush1.msra.mxu0 0.0
        %1584 = vmatprep.subr.mxu0 0.0
        %1585 = vmatpush1.msra.mxu0 0.0
        %1586 = vmatprep.subr.mxu0 0.0
        %1587 = vmatpush1.msra.mxu0 0.0
        %1588 = vmatprep.subr.mxu0 0.0
        %1589 = vmatpush1.msra.mxu0 0.0
        %1590 = vmatprep.subr.mxu0 0.0
        %1591 = vmatpush1.msra.mxu0 0.0
        %1592 = vmatprep.subr.mxu0 0.0
        %1593 = vmatpush1.msra.mxu0 0.0
        %1594 = vmatprep.subr.mxu0 0.0
        %1595 = vmatpush1.msra.mxu0 0.0
        %1596 = vmatprep.subr.mxu0 0.0
        %1597 = vmatpush1.msra.mxu0 0.0
        %1598 = vmatprep.subr.mxu0 0.0
        %1599 = vmatpush1.msra.mxu0 0.0
        %1600 = vmatprep.subr.mxu0 0.0
        %1601 = vmatpush1.msra.mxu0 0.0
        %1602 = vmatprep.subr.mxu0 0.0
        %1603 = vmatpush1.msra.mxu0 0.0
        %1604 = vmatprep.subr.mxu0 0.0
        %1605 = vmatpush1.msra.mxu0 0.0
        %1606 = vmatprep.subr.mxu0 0.0
        %1607 = vmatpush1.msra.mxu0 0.0
        %1608 = vmatprep.mubr.f32.mxu0 0.0
        %v1609 = vand.u32 %v989, 4294901760
        %1610 = vmatmul.mubr.f32.gmra.mrb[0].mxu0 %v1609
        %v1611 = vpop.f32.mrb[0].mxu0
        %v1612 = vadd.f32 %v1479, %v1611
        %v1613 = vpop.f32.mrb[0].mxu0
        %1614 = vmatprep.mubr.f32.mxu0 0.0
        %v1615 = vand.u32 %v992, 4294901760
        %1616 = vmatmul.mubr.f32.gmra.mrb[0].mxu0 %v1615
        %v1617 = vpop.f32.mrb[0].mxu0
        %v1618 = vadd.f32 %v1487, %v1617
        %v1619 = vpop.f32.mrb[0].mxu0
        %1620 = vmatprep.mubr.f32.mxu0 0.0
        %v1621 = vand.u32 %v995, 4294901760
        %1622 = vmatmul.mubr.f32.gmra.mrb[0].mxu0 %v1621
        %v1623 = vpop.f32.mrb[0].mxu0
        %v1624 = vadd.f32 %v1495, %v1623
        %v1625 = vpop.f32.mrb[0].mxu0
        %1626 = vmatprep.mubr.f32.mxu0 0.0
        %v1627 = vand.u32 %v998, 4294901760
        %1628 = vmatmul.mubr.f32.gmra.mrb[0].mxu0 %v1627
        %v1629 = vpop.f32.mrb[0].mxu0
        %v1630 = vadd.f32 %v1503, %v1629
        %v1631 = vpop.f32.mrb[0].mxu0
        %1632 = vmatprep.mubr.f32.mxu0 0.0
        %v1633 = vand.u32 %v1001, 4294901760
        %1634 = vmatmul.mubr.f32.gmra.mrb[0].mxu0 %v1633
        %v1635 = vpop.f32.mrb[0].mxu0
        %v1636 = vadd.f32 %v1511, %v1635
        %v1637 = vpop.f32.mrb[0].mxu0
        %1638 = vmatprep.mubr.f32.mxu0 0.0
        %v1639 = vand.u32 %v1004, 4294901760
        %1640 = vmatmul.mubr.f32.gmra.mrb[0].mxu0 %v1639
        %v1641 = vpop.f32.mrb[0].mxu0
        %v1642 = vadd.f32 %v1519, %v1641
        %v1643 = vpop.f32.mrb[0].mxu0
        %1644 = vmatprep.mubr.f32.mxu0 0.0
        %v1645 = vand.u32 %v1007, 4294901760
        %1646 = vmatmul.mubr.f32.gmra.mrb[0].mxu0 %v1645
        %v1647 = vpop.f32.mrb[0].mxu0
        %v1648 = vadd.f32 %v1527, %v1647
        %v1649 = vpop.f32.mrb[0].mxu0
        %1650 = vmatprep.mubr.f32.mxu0 0.0
        %v1651 = vand.u32 %v1010, 4294901760
        %1652 = vmatmul.mubr.f32.gmra.mrb[0].mxu0 %v1651
        %v1653 = vpop.f32.mrb[0].mxu0
        %v1654 = vadd.f32 %v1535, %v1653
        %v1655 = vpop.f32.mrb[0].mxu0
        %1656 = vdwg.mxu0
        %1657 = vmatprep.subr.mxu0 0.0
        %v1658 = vand.u32 %v176, 4294901760
        %1659 = vmatpush1.msra.mxu0 %v1658
        %1660 = vmatprep.subr.mxu0 0.0
        %v1661 = vand.u32 %v177, 4294901760
        %1662 = vmatpush1.msra.mxu0 %v1661
        %1663 = vmatprep.subr.mxu0 0.0
        %1664 = vmatpush1.msra.mxu0 0.0
        %1665 = vmatprep.subr.mxu0 0.0
        %1666 = vmatpush1.msra.mxu0 0.0
        %1667 = vmatprep.subr.mxu0 0.0
        %1668 = vmatpush1.msra.mxu0 0.0
        %1669 = vmatprep.subr.mxu0 0.0
        %1670 = vmatpush1.msra.mxu0 0.0
        %1671 = vmatprep.subr.mxu0 0.0
        %1672 = vmatpush1.msra.mxu0 0.0
        %1673 = vmatprep.subr.mxu0 0.0
        %1674 = vmatpush1.msra.mxu0 0.0
        %1675 = vmatprep.subr.mxu0 0.0
        %1676 = vmatpush1.msra.mxu0 0.0
        %1677 = vmatprep.subr.mxu0 0.0
        %1678 = vmatpush1.msra.mxu0 0.0
        %1679 = vmatprep.subr.mxu0 0.0
        %1680 = vmatpush1.msra.mxu0 0.0
        %1681 = vmatprep.subr.mxu0 0.0
        %1682 = vmatpush1.msra.mxu0 0.0
        %1683 = vmatprep.subr.mxu0 0.0
        %1684 = vmatpush1.msra.mxu0 0.0
        %1685 = vmatprep.subr.mxu0 0.0
        %1686 = vmatpush1.msra.mxu0 0.0
        %1687 = vmatprep.subr.mxu0 0.0
        %1688 = vmatpush1.msra.mxu0 0.0
        %1689 = vmatprep.subr.mxu0 0.0
        %1690 = vmatpush1.msra.mxu0 0.0
        %1691 = vmatprep.subr.mxu0 0.0
        %1692 = vmatpush1.msra.mxu0 0.0
        %1693 = vmatprep.subr.mxu0 0.0
        %1694 = vmatpush1.msra.mxu0 0.0
        %1695 = vmatprep.subr.mxu0 0.0
        %1696 = vmatpush1.msra.mxu0 0.0
        %1697 = vmatprep.subr.mxu0 0.0
        %1698 = vmatpush1.msra.mxu0 0.0
        %1699 = vmatprep.subr.mxu0 0.0
        %1700 = vmatpush1.msra.mxu0 0.0
        %1701 = vmatprep.subr.mxu0 0.0
        %1702 = vmatpush1.msra.mxu0 0.0
        %1703 = vmatprep.subr.mxu0 0.0
        %1704 = vmatpush1.msra.mxu0 0.0
        %1705 = vmatprep.subr.mxu0 0.0
        %1706 = vmatpush1.msra.mxu0 0.0
        %1707 = vmatprep.subr.mxu0 0.0
        %1708 = vmatpush1.msra.mxu0 0.0
        %1709 = vmatprep.subr.mxu0 0.0
        %1710 = vmatpush1.msra.mxu0 0.0
        %1711 = vmatprep.subr.mxu0 0.0
        %1712 = vmatpush1.msra.mxu0 0.0
        %1713 = vmatprep.subr.mxu0 0.0
        %1714 = vmatpush1.msra.mxu0 0.0
        %1715 = vmatprep.subr.mxu0 0.0
        %1716 = vmatpush1.msra.mxu0 0.0
        %1717 = vmatprep.subr.mxu0 0.0
        %1718 = vmatpush1.msra.mxu0 0.0
        %1719 = vmatprep.subr.mxu0 0.0
        %1720 = vmatpush1.msra.mxu0 0.0
        %1721 = vmatprep.subr.mxu0 0.0
        %1722 = vmatpush1.msra.mxu0 0.0
        %1723 = vmatprep.mubr.f32.mxu0 0.0
        %v1724 = vand.u32 %v989, 4294901760
        %1725 = vmatmul.mubr.f32.gmra.mrb[0].mxu0 %v1724
        %v1726 = vpop.f32.mrb[0].mxu0
        %v1727 = vadd.f32 %v1612, %v1726
        %v1728 = vpop.f32.mrb[0].mxu0
        %1729 = vmatprep.mubr.f32.mxu0 0.0
        %v1730 = vand.u32 %v992, 4294901760
        %1731 = vmatmul.mubr.f32.gmra.mrb[0].mxu0 %v1730
        %v1732 = vpop.f32.mrb[0].mxu0
        %v1733 = vadd.f32 %v1618, %v1732
        %v1734 = vpop.f32.mrb[0].mxu0
        %1735 = vmatprep.mubr.f32.mxu0 0.0
        %v1736 = vand.u32 %v995, 4294901760
        %1737 = vmatmul.mubr.f32.gmra.mrb[0].mxu0 %v1736
        %v1738 = vpop.f32.mrb[0].mxu0
        %v1739 = vadd.f32 %v1624, %v1738
        %v1740 = vpop.f32.mrb[0].mxu0
        %1741 = vmatprep.mubr.f32.mxu0 0.0
        %v1742 = vand.u32 %v998, 4294901760
        %1743 = vmatmul.mubr.f32.gmra.mrb[0].mxu0 %v1742
        %v1744 = vpop.f32.mrb[0].mxu0
        %v1745 = vadd.f32 %v1630, %v1744
        %v1746 = vpop.f32.mrb[0].mxu0
        %1747 = vmatprep.mubr.f32.mxu0 0.0
        %v1748 = vand.u32 %v1001, 4294901760
        %1749 = vmatmul.mubr.f32.gmra.mrb[0].mxu0 %v1748
        %v1750 = vpop.f32.mrb[0].mxu0
        %v1751 = vadd.f32 %v1636, %v1750
        %v1752 = vpop.f32.mrb[0].mxu0
        %1753 = vmatprep.mubr.f32.mxu0 0.0
        %v1754 = vand.u32 %v1004, 4294901760
        %1755 = vmatmul.mubr.f32.gmra.mrb[0].mxu0 %v1754
        %v1756 = vpop.f32.mrb[0].mxu0
        %v1757 = vadd.f32 %v1642, %v1756
        %v1758 = vpop.f32.mrb[0].mxu0
        %1759 = vmatprep.mubr.f32.mxu0 0.0
        %v1760 = vand.u32 %v1007, 4294901760
        %1761 = vmatmul.mubr.f32.gmra.mrb[0].mxu0 %v1760
        %v1762 = vpop.f32.mrb[0].mxu0
        %v1763 = vadd.f32 %v1648, %v1762
        %v1764 = vpop.f32.mrb[0].mxu0
        %1765 = vmatprep.mubr.f32.mxu0 0.0
        %v1766 = vand.u32 %v1010, 4294901760
        %1767 = vmatmul.mubr.f32.gmra.mrb[0].mxu0 %v1766
        %v1768 = vpop.f32.mrb[0].mxu0
        %v1769 = vadd.f32 %v1654, %v1768
        %v1770 = vpop.f32.mrb[0].mxu0
        %1771 = vdwg.mxu0
        %s1772 = scalar_lea.vmem %s131, 128 [#allocation2]
        %v1773 = vld [vmem:[%s1772] sm:$0xff]
        %v1774 = vld [vmem:[%s1772 + $0x8] sm:$0xff]
        %v1775 = vld [vmem:[%s1772 + $0x10] sm:$0xff]
        %v1776 = vld [vmem:[%s1772 + $0x18] sm:$0xff]
        %v1777 = vld [vmem:[%s1772 + $0x20] sm:$0xff]
        %v1778 = vld [vmem:[%s1772 + $0x28] sm:$0xff]
        %v1779 = vld [vmem:[%s1772 + $0x30] sm:$0xff]
        %v1780 = vld [vmem:[%s1772 + $0x38] sm:$0xff]
        %s1781 = scalar_lea.vmem %s131, 192 [#allocation2]
        %v1782 = vld [vmem:[%s1781] sm:$0xff]
        %v1783 = vld [vmem:[%s1781 + $0x8] sm:$0xff]
        %v1784 = vld [vmem:[%s1781 + $0x10] sm:$0xff]
        %v1785 = vld [vmem:[%s1781 + $0x18] sm:$0xff]
        %v1786 = vld [vmem:[%s1781 + $0x20] sm:$0xff]
        %v1787 = vld [vmem:[%s1781 + $0x28] sm:$0xff]
        %v1788 = vld [vmem:[%s1781 + $0x30] sm:$0xff]
        %v1789 = vld [vmem:[%s1781 + $0x38] sm:$0xff]
        %v1791 = vsel %vm203, %v1782, 0
        %v1794 = vsel %vm203, %v1783, 0
        %v1797 = vsel %vm203, %v1784, 0
        %v1800 = vsel %vm203, %v1785, 0
        %v1803 = vsel %vm203, %v1786, 0
        %v1806 = vsel %vm203, %v1787, 0
        %v1809 = vsel %vm203, %v1788, 0
        %v1812 = vsel %vm203, %v1789, 0
        %1814 = vmatprep.subr.mxu0 0.0
        %v1815 = vand.u32 %v192, 4294901760
        %1816 = vmatpush1.msra.mxu0 %v1815
        %1817 = vmatprep.subr.mxu0 0.0
        %v1818 = vand.u32 %v193, 4294901760
        %1819 = vmatpush1.msra.mxu0 %v1818
        %1820 = vmatprep.subr.mxu0 0.0
        %1821 = vmatpush1.msra.mxu0 0.0
        %1822 = vmatprep.subr.mxu0 0.0
        %1823 = vmatpush1.msra.mxu0 0.0
        %1824 = vmatprep.subr.mxu0 0.0
        %1825 = vmatpush1.msra.mxu0 0.0
        %1826 = vmatprep.subr.mxu0 0.0
        %1827 = vmatpush1.msra.mxu0 0.0
        %1828 = vmatprep.subr.mxu0 0.0
        %1829 = vmatpush1.msra.mxu0 0.0
        %1830 = vmatprep.subr.mxu0 0.0
        %1831 = vmatpush1.msra.mxu0 0.0
        %1832 = vmatprep.subr.mxu0 0.0
        %1833 = vmatpush1.msra.mxu0 0.0
        %1834 = vmatprep.subr.mxu0 0.0
        %1835 = vmatpush1.msra.mxu0 0.0
        %1836 = vmatprep.subr.mxu0 0.0
        %1837 = vmatpush1.msra.mxu0 0.0
        %1838 = vmatprep.subr.mxu0 0.0
        %1839 = vmatpush1.msra.mxu0 0.0
        %1840 = vmatprep.subr.mxu0 0.0
        %1841 = vmatpush1.msra.mxu0 0.0
        %1842 = vmatprep.subr.mxu0 0.0
        %1843 = vmatpush1.msra.mxu0 0.0
        %1844 = vmatprep.subr.mxu0 0.0
        %1845 = vmatpush1.msra.mxu0 0.0
        %1846 = vmatprep.subr.mxu0 0.0
        %1847 = vmatpush1.msra.mxu0 0.0
        %1848 = vmatprep.subr.mxu0 0.0
        %1849 = vmatpush1.msra.mxu0 0.0
        %1850 = vmatprep.subr.mxu0 0.0
        %1851 = vmatpush1.msra.mxu0 0.0
        %1852 = vmatprep.subr.mxu0 0.0
        %1853 = vmatpush1.msra.mxu0 0.0
        %1854 = vmatprep.subr.mxu0 0.0
        %1855 = vmatpush1.msra.mxu0 0.0
        %1856 = vmatprep.subr.mxu0 0.0
        %1857 = vmatpush1.msra.mxu0 0.0
        %1858 = vmatprep.subr.mxu0 0.0
        %1859 = vmatpush1.msra.mxu0 0.0
        %1860 = vmatprep.subr.mxu0 0.0
        %1861 = vmatpush1.msra.mxu0 0.0
        %1862 = vmatprep.subr.mxu0 0.0
        %1863 = vmatpush1.msra.mxu0 0.0
        %1864 = vmatprep.subr.mxu0 0.0
        %1865 = vmatpush1.msra.mxu0 0.0
        %1866 = vmatprep.subr.mxu0 0.0
        %1867 = vmatpush1.msra.mxu0 0.0
        %1868 = vmatprep.subr.mxu0 0.0
        %1869 = vmatpush1.msra.mxu0 0.0
        %1870 = vmatprep.subr.mxu0 0.0
        %1871 = vmatpush1.msra.mxu0 0.0
        %1872 = vmatprep.subr.mxu0 0.0
        %1873 = vmatpush1.msra.mxu0 0.0
        %1874 = vmatprep.subr.mxu0 0.0
        %1875 = vmatpush1.msra.mxu0 0.0
        %1876 = vmatprep.subr.mxu0 0.0
        %1877 = vmatpush1.msra.mxu0 0.0
        %1878 = vmatprep.subr.mxu0 0.0
        %1879 = vmatpush1.msra.mxu0 0.0
        %1880 = vmatprep.mubr.f32.mxu0 0.0
        %v1881 = vand.u32 %v1791, 4294901760
        %v1882 = vsub.f32 %v1791, %v1881
        %v1883 = vand.u32 %v1882, 4294901760
        %v1884 = vsub.f32 %v1882, %v1883
        %v1885 = vand.u32 %v1884, 4294901760
        %1886 = vmatmul.mubr.f32.gmra.mrb[0].mxu0 %v1885
        %v1887 = vpop.f32.mrb[0].mxu0
        %v1888 = vadd.f32 0.0, %v1887
        %v1889 = vpop.f32.mrb[0].mxu0
        %1890 = vmatprep.mubr.f32.mxu0 0.0
        %v1891 = vand.u32 %v1794, 4294901760
        %v1892 = vsub.f32 %v1794, %v1891
        %v1893 = vand.u32 %v1892, 4294901760
        %v1894 = vsub.f32 %v1892, %v1893
        %v1895 = vand.u32 %v1894, 4294901760
        %1896 = vmatmul.mubr.f32.gmra.mrb[0].mxu0 %v1895
        %v1897 = vpop.f32.mrb[0].mxu0
        %v1898 = vadd.f32 0.0, %v1897
        %v1899 = vpop.f32.mrb[0].mxu0
        %1900 = vmatprep.mubr.f32.mxu0 0.0
        %v1901 = vand.u32 %v1797, 4294901760
        %v1902 = vsub.f32 %v1797, %v1901
        %v1903 = vand.u32 %v1902, 4294901760
        %v1904 = vsub.f32 %v1902, %v1903
        %v1905 = vand.u32 %v1904, 4294901760
        %1906 = vmatmul.mubr.f32.gmra.mrb[0].mxu0 %v1905
        %v1907 = vpop.f32.mrb[0].mxu0
        %v1908 = vadd.f32 0.0, %v1907
        %v1909 = vpop.f32.mrb[0].mxu0
        %1910 = vmatprep.mubr.f32.mxu0 0.0
        %v1911 = vand.u32 %v1800, 4294901760
        %v1912 = vsub.f32 %v1800, %v1911
        %v1913 = vand.u32 %v1912, 4294901760
        %v1914 = vsub.f32 %v1912, %v1913
        %v1915 = vand.u32 %v1914, 4294901760
        %1916 = vmatmul.mubr.f32.gmra.mrb[0].mxu0 %v1915
        %v1917 = vpop.f32.mrb[0].mxu0
        %v1918 = vadd.f32 0.0, %v1917
        %v1919 = vpop.f32.mrb[0].mxu0
        %1920 = vmatprep.mubr.f32.mxu0 0.0
        %v1921 = vand.u32 %v1803, 4294901760
        %v1922 = vsub.f32 %v1803, %v1921
        %v1923 = vand.u32 %v1922, 4294901760
        %v1924 = vsub.f32 %v1922, %v1923
        %v1925 = vand.u32 %v1924, 4294901760
        %1926 = vmatmul.mubr.f32.gmra.mrb[0].mxu0 %v1925
        %v1927 = vpop.f32.mrb[0].mxu0
        %v1928 = vadd.f32 0.0, %v1927
        %v1929 = vpop.f32.mrb[0].mxu0
        %1930 = vmatprep.mubr.f32.mxu0 0.0
        %v1931 = vand.u32 %v1806, 4294901760
        %v1932 = vsub.f32 %v1806, %v1931
        %v1933 = vand.u32 %v1932, 4294901760
        %v1934 = vsub.f32 %v1932, %v1933
        %v1935 = vand.u32 %v1934, 4294901760
        %1936 = vmatmul.mubr.f32.gmra.mrb[0].mxu0 %v1935
        %v1937 = vpop.f32.mrb[0].mxu0
        %v1938 = vadd.f32 0.0, %v1937
        %v1939 = vpop.f32.mrb[0].mxu0
        %1940 = vmatprep.mubr.f32.mxu0 0.0
        %v1941 = vand.u32 %v1809, 4294901760
        %v1942 = vsub.f32 %v1809, %v1941
        %v1943 = vand.u32 %v1942, 4294901760
        %v1944 = vsub.f32 %v1942, %v1943
        %v1945 = vand.u32 %v1944, 4294901760
        %1946 = vmatmul.mubr.f32.gmra.mrb[0].mxu0 %v1945
        %v1947 = vpop.f32.mrb[0].mxu0
        %v1948 = vadd.f32 0.0, %v1947
        %v1949 = vpop.f32.mrb[0].mxu0
        %1950 = vmatprep.mubr.f32.mxu0 0.0
        %v1951 = vand.u32 %v1812, 4294901760
        %v1952 = vsub.f32 %v1812, %v1951
        %v1953 = vand.u32 %v1952, 4294901760
        %v1954 = vsub.f32 %v1952, %v1953
        %v1955 = vand.u32 %v1954, 4294901760
        %1956 = vmatmul.mubr.f32.gmra.mrb[0].mxu0 %v1955
        %v1957 = vpop.f32.mrb[0].mxu0
        %v1958 = vadd.f32 0.0, %v1957
        %v1959 = vpop.f32.mrb[0].mxu0
        %1960 = vdwg.mxu0
        %1961 = vmatprep.subr.mxu0 0.0
        %v1962 = vand.u32 %v192, 4294901760
        %v1963 = vsub.f32 %v192, %v1962
        %v1964 = vand.u32 %v1963, 4294901760
        %v1965 = vsub.f32 %v1963, %v1964
        %v1966 = vand.u32 %v1965, 4294901760
        %1967 = vmatpush1.msra.mxu0 %v1966
        %1968 = vmatprep.subr.mxu0 0.0
        %v1969 = vand.u32 %v193, 4294901760
        %v1970 = vsub.f32 %v193, %v1969
        %v1971 = vand.u32 %v1970, 4294901760
        %v1972 = vsub.f32 %v1970, %v1971
        %v1973 = vand.u32 %v1972, 4294901760
        %1974 = vmatpush1.msra.mxu0 %v1973
        %1975 = vmatprep.subr.mxu0 0.0
        %1976 = vmatpush1.msra.mxu0 0.0
        %1977 = vmatprep.subr.mxu0 0.0
        %1978 = vmatpush1.msra.mxu0 0.0
        %1979 = vmatprep.subr.mxu0 0.0
        %1980 = vmatpush1.msra.mxu0 0.0
        %1981 = vmatprep.subr.mxu0 0.0
        %1982 = vmatpush1.msra.mxu0 0.0
        %1983 = vmatprep.subr.mxu0 0.0
        %1984 = vmatpush1.msra.mxu0 0.0
        %1985 = vmatprep.subr.mxu0 0.0
        %1986 = vmatpush1.msra.mxu0 0.0
        %1987 = vmatprep.subr.mxu0 0.0
        %1988 = vmatpush1.msra.mxu0 0.0
        %1989 = vmatprep.subr.mxu0 0.0
        %1990 = vmatpush1.msra.mxu0 0.0
        %1991 = vmatprep.subr.mxu0 0.0
        %1992 = vmatpush1.msra.mxu0 0.0
        %1993 = vmatprep.subr.mxu0 0.0
        %1994 = vmatpush1.msra.mxu0 0.0
        %1995 = vmatprep.subr.mxu0 0.0
        %1996 = vmatpush1.msra.mxu0 0.0
        %1997 = vmatprep.subr.mxu0 0.0
        %1998 = vmatpush1.msra.mxu0 0.0
        %1999 = vmatprep.subr.mxu0 0.0
        %2000 = vmatpush1.msra.mxu0 0.0
        %2001 = vmatprep.subr.mxu0 0.0
        %2002 = vmatpush1.msra.mxu0 0.0
        %2003 = vmatprep.subr.mxu0 0.0
        %2004 = vmatpush1.msra.mxu0 0.0
        %2005 = vmatprep.subr.mxu0 0.0
        %2006 = vmatpush1.msra.mxu0 0.0
        %2007 = vmatprep.subr.mxu0 0.0
        %2008 = vmatpush1.msra.mxu0 0.0
        %2009 = vmatprep.subr.mxu0 0.0
        %2010 = vmatpush1.msra.mxu0 0.0
        %2011 = vmatprep.subr.mxu0 0.0
        %2012 = vmatpush1.msra.mxu0 0.0
        %2013 = vmatprep.subr.mxu0 0.0
        %2014 = vmatpush1.msra.mxu0 0.0
        %2015 = vmatprep.subr.mxu0 0.0
        %2016 = vmatpush1.msra.mxu0 0.0
        %2017 = vmatprep.subr.mxu0 0.0
        %2018 = vmatpush1.msra.mxu0 0.0
        %2019 = vmatprep.subr.mxu0 0.0
        %2020 = vmatpush1.msra.mxu0 0.0
        %2021 = vmatprep.subr.mxu0 0.0
        %2022 = vmatpush1.msra.mxu0 0.0
        %2023 = vmatprep.subr.mxu0 0.0
        %2024 = vmatpush1.msra.mxu0 0.0
        %2025 = vmatprep.subr.mxu0 0.0
        %2026 = vmatpush1.msra.mxu0 0.0
        %2027 = vmatprep.subr.mxu0 0.0
        %2028 = vmatpush1.msra.mxu0 0.0
        %2029 = vmatprep.subr.mxu0 0.0
        %2030 = vmatpush1.msra.mxu0 0.0
        %2031 = vmatprep.subr.mxu0 0.0
        %2032 = vmatpush1.msra.mxu0 0.0
        %2033 = vmatprep.subr.mxu0 0.0
        %2034 = vmatpush1.msra.mxu0 0.0
        %2035 = vmatprep.mubr.f32.mxu0 0.0
        %v2036 = vand.u32 %v1791, 4294901760
        %2037 = vmatmul.mubr.f32.gmra.mrb[0].mxu0 %v2036
        %v2038 = vpop.f32.mrb[0].mxu0
        %v2039 = vadd.f32 %v1888, %v2038
        %v2040 = vpop.f32.mrb[0].mxu0
        %2041 = vmatprep.mubr.f32.mxu0 0.0
        %v2042 = vand.u32 %v1794, 4294901760
        %2043 = vmatmul.mubr.f32.gmra.mrb[0].mxu0 %v2042
        %v2044 = vpop.f32.mrb[0].mxu0
        %v2045 = vadd.f32 %v1898, %v2044
        %v2046 = vpop.f32.mrb[0].mxu0
        %2047 = vmatprep.mubr.f32.mxu0 0.0
        %v2048 = vand.u32 %v1797, 4294901760
        %2049 = vmatmul.mubr.f32.gmra.mrb[0].mxu0 %v2048
        %v2050 = vpop.f32.mrb[0].mxu0
        %v2051 = vadd.f32 %v1908, %v2050
        %v2052 = vpop.f32.mrb[0].mxu0
        %2053 = vmatprep.mubr.f32.mxu0 0.0
        %v2054 = vand.u32 %v1800, 4294901760
        %2055 = vmatmul.mubr.f32.gmra.mrb[0].mxu0 %v2054
        %v2056 = vpop.f32.mrb[0].mxu0
        %v2057 = vadd.f32 %v1918, %v2056
        %v2058 = vpop.f32.mrb[0].mxu0
        %2059 = vmatprep.mubr.f32.mxu0 0.0
        %v2060 = vand.u32 %v1803, 4294901760
        %2061 = vmatmul.mubr.f32.gmra.mrb[0].mxu0 %v2060
        %v2062 = vpop.f32.mrb[0].mxu0
        %v2063 = vadd.f32 %v1928, %v2062
        %v2064 = vpop.f32.mrb[0].mxu0
        %2065 = vmatprep.mubr.f32.mxu0 0.0
        %v2066 = vand.u32 %v1806, 4294901760
        %2067 = vmatmul.mubr.f32.gmra.mrb[0].mxu0 %v2066
        %v2068 = vpop.f32.mrb[0].mxu0
        %v2069 = vadd.f32 %v1938, %v2068
        %v2070 = vpop.f32.mrb[0].mxu0
        %2071 = vmatprep.mubr.f32.mxu0 0.0
        %v2072 = vand.u32 %v1809, 4294901760
        %2073 = vmatmul.mubr.f32.gmra.mrb[0].mxu0 %v2072
        %v2074 = vpop.f32.mrb[0].mxu0
        %v2075 = vadd.f32 %v1948, %v2074
        %v2076 = vpop.f32.mrb[0].mxu0
        %2077 = vmatprep.mubr.f32.mxu0 0.0
        %v2078 = vand.u32 %v1812, 4294901760
        %2079 = vmatmul.mubr.f32.gmra.mrb[0].mxu0 %v2078
        %v2080 = vpop.f32.mrb[0].mxu0
        %v2081 = vadd.f32 %v1958, %v2080
        %v2082 = vpop.f32.mrb[0].mxu0
        %2083 = vdwg.mxu0
        %2084 = vmatprep.subr.mxu0 0.0
        %v2085 = vand.u32 %v192, 4294901760
        %v2086 = vsub.f32 %v192, %v2085
        %2087 = vmatpush1.msra.mxu0 %v2086
        %2088 = vmatprep.subr.mxu0 0.0
        %v2089 = vand.u32 %v193, 4294901760
        %v2090 = vsub.f32 %v193, %v2089
        %2091 = vmatpush1.msra.mxu0 %v2090
        %2092 = vmatprep.subr.mxu0 0.0
        %2093 = vmatpush1.msra.mxu0 0.0
        %2094 = vmatprep.subr.mxu0 0.0
        %2095 = vmatpush1.msra.mxu0 0.0
        %2096 = vmatprep.subr.mxu0 0.0
        %2097 = vmatpush1.msra.mxu0 0.0
        %2098 = vmatprep.subr.mxu0 0.0
        %2099 = vmatpush1.msra.mxu0 0.0
        %2100 = vmatprep.subr.mxu0 0.0
        %2101 = vmatpush1.msra.mxu0 0.0
        %2102 = vmatprep.subr.mxu0 0.0
        %2103 = vmatpush1.msra.mxu0 0.0
        %2104 = vmatprep.subr.mxu0 0.0
        %2105 = vmatpush1.msra.mxu0 0.0
        %2106 = vmatprep.subr.mxu0 0.0
        %2107 = vmatpush1.msra.mxu0 0.0
        %2108 = vmatprep.subr.mxu0 0.0
        %2109 = vmatpush1.msra.mxu0 0.0
        %2110 = vmatprep.subr.mxu0 0.0
        %2111 = vmatpush1.msra.mxu0 0.0
        %2112 = vmatprep.subr.mxu0 0.0
        %2113 = vmatpush1.msra.mxu0 0.0
        %2114 = vmatprep.subr.mxu0 0.0
        %2115 = vmatpush1.msra.mxu0 0.0
        %2116 = vmatprep.subr.mxu0 0.0
        %2117 = vmatpush1.msra.mxu0 0.0
        %2118 = vmatprep.subr.mxu0 0.0
        %2119 = vmatpush1.msra.mxu0 0.0
        %2120 = vmatprep.subr.mxu0 0.0
        %2121 = vmatpush1.msra.mxu0 0.0
        %2122 = vmatprep.subr.mxu0 0.0
        %2123 = vmatpush1.msra.mxu0 0.0
        %2124 = vmatprep.subr.mxu0 0.0
        %2125 = vmatpush1.msra.mxu0 0.0
        %2126 = vmatprep.subr.mxu0 0.0
        %2127 = vmatpush1.msra.mxu0 0.0
        %2128 = vmatprep.subr.mxu0 0.0
        %2129 = vmatpush1.msra.mxu0 0.0
        %2130 = vmatprep.subr.mxu0 0.0
        %2131 = vmatpush1.msra.mxu0 0.0
        %2132 = vmatprep.subr.mxu0 0.0
        %2133 = vmatpush1.msra.mxu0 0.0
        %2134 = vmatprep.subr.mxu0 0.0
        %2135 = vmatpush1.msra.mxu0 0.0
        %2136 = vmatprep.subr.mxu0 0.0
        %2137 = vmatpush1.msra.mxu0 0.0
        %2138 = vmatprep.subr.mxu0 0.0
        %2139 = vmatpush1.msra.mxu0 0.0
        %2140 = vmatprep.subr.mxu0 0.0
        %2141 = vmatpush1.msra.mxu0 0.0
        %2142 = vmatprep.subr.mxu0 0.0
        %2143 = vmatpush1.msra.mxu0 0.0
        %2144 = vmatprep.subr.mxu0 0.0
        %2145 = vmatpush1.msra.mxu0 0.0
        %2146 = vmatprep.subr.mxu0 0.0
        %2147 = vmatpush1.msra.mxu0 0.0
        %2148 = vmatprep.subr.mxu0 0.0
        %2149 = vmatpush1.msra.mxu0 0.0
        %2150 = vmatprep.subr.mxu0 0.0
        %2151 = vmatpush1.msra.mxu0 0.0
        %2152 = vmatprep.mubr.f32.mxu0 0.0
        %v2153 = vand.u32 %v1791, 4294901760
        %v2154 = vsub.f32 %v1791, %v2153
        %2155 = vmatmul.mubr.f32.gmra.mrb[0].mxu0 %v2154
        %v2156 = vpop.f32.mrb[0].mxu0
        %v2157 = vadd.f32 %v2039, %v2156
        %v2158 = vpop.f32.mrb[0].mxu0
        %2159 = vmatprep.mubr.f32.mxu0 0.0
        %v2160 = vand.u32 %v1794, 4294901760
        %v2161 = vsub.f32 %v1794, %v2160
        %2162 = vmatmul.mubr.f32.gmra.mrb[0].mxu0 %v2161
        %v2163 = vpop.f32.mrb[0].mxu0
        %v2164 = vadd.f32 %v2045, %v2163
        %v2165 = vpop.f32.mrb[0].mxu0
        %2166 = vmatprep.mubr.f32.mxu0 0.0
        %v2167 = vand.u32 %v1797, 4294901760
        %v2168 = vsub.f32 %v1797, %v2167
        %2169 = vmatmul.mubr.f32.gmra.mrb[0].mxu0 %v2168
        %v2170 = vpop.f32.mrb[0].mxu0
        %v2171 = vadd.f32 %v2051, %v2170
        %v2172 = vpop.f32.mrb[0].mxu0
        %2173 = vmatprep.mubr.f32.mxu0 0.0
        %v2174 = vand.u32 %v1800, 4294901760
        %v2175 = vsub.f32 %v1800, %v2174
        %2176 = vmatmul.mubr.f32.gmra.mrb[0].mxu0 %v2175
        %v2177 = vpop.f32.mrb[0].mxu0
        %v2178 = vadd.f32 %v2057, %v2177
        %v2179 = vpop.f32.mrb[0].mxu0
        %2180 = vmatprep.mubr.f32.mxu0 0.0
        %v2181 = vand.u32 %v1803, 4294901760
        %v2182 = vsub.f32 %v1803, %v2181
        %2183 = vmatmul.mubr.f32.gmra.mrb[0].mxu0 %v2182
        %v2184 = vpop.f32.mrb[0].mxu0
        %v2185 = vadd.f32 %v2063, %v2184
        %v2186 = vpop.f32.mrb[0].mxu0
        %2187 = vmatprep.mubr.f32.mxu0 0.0
        %v2188 = vand.u32 %v1806, 4294901760
        %v2189 = vsub.f32 %v1806, %v2188
        %2190 = vmatmul.mubr.f32.gmra.mrb[0].mxu0 %v2189
        %v2191 = vpop.f32.mrb[0].mxu0
        %v2192 = vadd.f32 %v2069, %v2191
        %v2193 = vpop.f32.mrb[0].mxu0
        %2194 = vmatprep.mubr.f32.mxu0 0.0
        %v2195 = vand.u32 %v1809, 4294901760
        %v2196 = vsub.f32 %v1809, %v2195
        %2197 = vmatmul.mubr.f32.gmra.mrb[0].mxu0 %v2196
        %v2198 = vpop.f32.mrb[0].mxu0
        %v2199 = vadd.f32 %v2075, %v2198
        %v2200 = vpop.f32.mrb[0].mxu0
        %2201 = vmatprep.mubr.f32.mxu0 0.0
        %v2202 = vand.u32 %v1812, 4294901760
        %v2203 = vsub.f32 %v1812, %v2202
        %2204 = vmatmul.mubr.f32.gmra.mrb[0].mxu0 %v2203
        %v2205 = vpop.f32.mrb[0].mxu0
        %v2206 = vadd.f32 %v2081, %v2205
        %v2207 = vpop.f32.mrb[0].mxu0
        %2208 = vdwg.mxu0
        %2209 = vmatprep.subr.mxu0 0.0
        %v2210 = vand.u32 %v192, 4294901760
        %2211 = vmatpush1.msra.mxu0 %v2210
        %2212 = vmatprep.subr.mxu0 0.0
        %v2213 = vand.u32 %v193, 4294901760
        %2214 = vmatpush1.msra.mxu0 %v2213
        %2215 = vmatprep.subr.mxu0 0.0
        %2216 = vmatpush1.msra.mxu0 0.0
        %2217 = vmatprep.subr.mxu0 0.0
        %2218 = vmatpush1.msra.mxu0 0.0
        %2219 = vmatprep.subr.mxu0 0.0
        %2220 = vmatpush1.msra.mxu0 0.0
        %2221 = vmatprep.subr.mxu0 0.0
        %2222 = vmatpush1.msra.mxu0 0.0
        %2223 = vmatprep.subr.mxu0 0.0
        %2224 = vmatpush1.msra.mxu0 0.0
        %2225 = vmatprep.subr.mxu0 0.0
        %2226 = vmatpush1.msra.mxu0 0.0
        %2227 = vmatprep.subr.mxu0 0.0
        %2228 = vmatpush1.msra.mxu0 0.0
        %2229 = vmatprep.subr.mxu0 0.0
        %2230 = vmatpush1.msra.mxu0 0.0
        %2231 = vmatprep.subr.mxu0 0.0
        %2232 = vmatpush1.msra.mxu0 0.0
        %2233 = vmatprep.subr.mxu0 0.0
        %2234 = vmatpush1.msra.mxu0 0.0
        %2235 = vmatprep.subr.mxu0 0.0
        %2236 = vmatpush1.msra.mxu0 0.0
        %2237 = vmatprep.subr.mxu0 0.0
        %2238 = vmatpush1.msra.mxu0 0.0
        %2239 = vmatprep.subr.mxu0 0.0
        %2240 = vmatpush1.msra.mxu0 0.0
        %2241 = vmatprep.subr.mxu0 0.0
        %2242 = vmatpush1.msra.mxu0 0.0
        %2243 = vmatprep.subr.mxu0 0.0
        %2244 = vmatpush1.msra.mxu0 0.0
        %2245 = vmatprep.subr.mxu0 0.0
        %2246 = vmatpush1.msra.mxu0 0.0
        %2247 = vmatprep.subr.mxu0 0.0
        %2248 = vmatpush1.msra.mxu0 0.0
        %2249 = vmatprep.subr.mxu0 0.0
        %2250 = vmatpush1.msra.mxu0 0.0
        %2251 = vmatprep.subr.mxu0 0.0
        %2252 = vmatpush1.msra.mxu0 0.0
        %2253 = vmatprep.subr.mxu0 0.0
        %2254 = vmatpush1.msra.mxu0 0.0
        %2255 = vmatprep.subr.mxu0 0.0
        %2256 = vmatpush1.msra.mxu0 0.0
        %2257 = vmatprep.subr.mxu0 0.0
        %2258 = vmatpush1.msra.mxu0 0.0
        %2259 = vmatprep.subr.mxu0 0.0
        %2260 = vmatpush1.msra.mxu0 0.0
        %2261 = vmatprep.subr.mxu0 0.0
        %2262 = vmatpush1.msra.mxu0 0.0
        %2263 = vmatprep.subr.mxu0 0.0
        %2264 = vmatpush1.msra.mxu0 0.0
        %2265 = vmatprep.subr.mxu0 0.0
        %2266 = vmatpush1.msra.mxu0 0.0
        %2267 = vmatprep.subr.mxu0 0.0
        %2268 = vmatpush1.msra.mxu0 0.0
        %2269 = vmatprep.subr.mxu0 0.0
        %2270 = vmatpush1.msra.mxu0 0.0
        %2271 = vmatprep.subr.mxu0 0.0
        %2272 = vmatpush1.msra.mxu0 0.0
        %2273 = vmatprep.subr.mxu0 0.0
        %2274 = vmatpush1.msra.mxu0 0.0
        %2275 = vmatprep.mubr.f32.mxu0 0.0
        %v2276 = vand.u32 %v1791, 4294901760
        %v2277 = vsub.f32 %v1791, %v2276
        %v2278 = vand.u32 %v2277, 4294901760
        %2279 = vmatmul.mubr.f32.gmra.mrb[0].mxu0 %v2278
        %v2280 = vpop.f32.mrb[0].mxu0
        %v2281 = vadd.f32 %v2157, %v2280
        %v2282 = vpop.f32.mrb[0].mxu0
        %2283 = vmatprep.mubr.f32.mxu0 0.0
        %v2284 = vand.u32 %v1794, 4294901760
        %v2285 = vsub.f32 %v1794, %v2284
        %v2286 = vand.u32 %v2285, 4294901760
        %2287 = vmatmul.mubr.f32.gmra.mrb[0].mxu0 %v2286
        %v2288 = vpop.f32.mrb[0].mxu0
        %v2289 = vadd.f32 %v2164, %v2288
        %v2290 = vpop.f32.mrb[0].mxu0
        %2291 = vmatprep.mubr.f32.mxu0 0.0
        %v2292 = vand.u32 %v1797, 4294901760
        %v2293 = vsub.f32 %v1797, %v2292
        %v2294 = vand.u32 %v2293, 4294901760
        %2295 = vmatmul.mubr.f32.gmra.mrb[0].mxu0 %v2294
        %v2296 = vpop.f32.mrb[0].mxu0
        %v2297 = vadd.f32 %v2171, %v2296
        %v2298 = vpop.f32.mrb[0].mxu0
        %2299 = vmatprep.mubr.f32.mxu0 0.0
        %v2300 = vand.u32 %v1800, 4294901760
        %v2301 = vsub.f32 %v1800, %v2300
        %v2302 = vand.u32 %v2301, 4294901760
        %2303 = vmatmul.mubr.f32.gmra.mrb[0].mxu0 %v2302
        %v2304 = vpop.f32.mrb[0].mxu0
        %v2305 = vadd.f32 %v2178, %v2304
        %v2306 = vpop.f32.mrb[0].mxu0
        %2307 = vmatprep.mubr.f32.mxu0 0.0
        %v2308 = vand.u32 %v1803, 4294901760
        %v2309 = vsub.f32 %v1803, %v2308
        %v2310 = vand.u32 %v2309, 4294901760
        %2311 = vmatmul.mubr.f32.gmra.mrb[0].mxu0 %v2310
        %v2312 = vpop.f32.mrb[0].mxu0
        %v2313 = vadd.f32 %v2185, %v2312
        %v2314 = vpop.f32.mrb[0].mxu0
        %2315 = vmatprep.mubr.f32.mxu0 0.0
        %v2316 = vand.u32 %v1806, 4294901760
        %v2317 = vsub.f32 %v1806, %v2316
        %v2318 = vand.u32 %v2317, 4294901760
        %2319 = vmatmul.mubr.f32.gmra.mrb[0].mxu0 %v2318
        %v2320 = vpop.f32.mrb[0].mxu0
        %v2321 = vadd.f32 %v2192, %v2320
        %v2322 = vpop.f32.mrb[0].mxu0
        %2323 = vmatprep.mubr.f32.mxu0 0.0
        %v2324 = vand.u32 %v1809, 4294901760
        %v2325 = vsub.f32 %v1809, %v2324
        %v2326 = vand.u32 %v2325, 4294901760
        %2327 = vmatmul.mubr.f32.gmra.mrb[0].mxu0 %v2326
        %v2328 = vpop.f32.mrb[0].mxu0
        %v2329 = vadd.f32 %v2199, %v2328
        %v2330 = vpop.f32.mrb[0].mxu0
        %2331 = vmatprep.mubr.f32.mxu0 0.0
        %v2332 = vand.u32 %v1812, 4294901760
        %v2333 = vsub.f32 %v1812, %v2332
        %v2334 = vand.u32 %v2333, 4294901760
        %2335 = vmatmul.mubr.f32.gmra.mrb[0].mxu0 %v2334
        %v2336 = vpop.f32.mrb[0].mxu0
        %v2337 = vadd.f32 %v2206, %v2336
        %v2338 = vpop.f32.mrb[0].mxu0
        %2339 = vdwg.mxu0
        %2340 = vmatprep.subr.mxu0 0.0
        %v2341 = vand.u32 %v192, 4294901760
        %v2342 = vsub.f32 %v192, %v2341
        %v2343 = vand.u32 %v2342, 4294901760
        %2344 = vmatpush1.msra.mxu0 %v2343
        %2345 = vmatprep.subr.mxu0 0.0
        %v2346 = vand.u32 %v193, 4294901760
        %v2347 = vsub.f32 %v193, %v2346
        %v2348 = vand.u32 %v2347, 4294901760
        %2349 = vmatpush1.msra.mxu0 %v2348
        %2350 = vmatprep.subr.mxu0 0.0
        %2351 = vmatpush1.msra.mxu0 0.0
        %2352 = vmatprep.subr.mxu0 0.0
        %2353 = vmatpush1.msra.mxu0 0.0
        %2354 = vmatprep.subr.mxu0 0.0
        %2355 = vmatpush1.msra.mxu0 0.0
        %2356 = vmatprep.subr.mxu0 0.0
        %2357 = vmatpush1.msra.mxu0 0.0
        %2358 = vmatprep.subr.mxu0 0.0
        %2359 = vmatpush1.msra.mxu0 0.0
        %2360 = vmatprep.subr.mxu0 0.0
        %2361 = vmatpush1.msra.mxu0 0.0
        %2362 = vmatprep.subr.mxu0 0.0
        %2363 = vmatpush1.msra.mxu0 0.0
        %2364 = vmatprep.subr.mxu0 0.0
        %2365 = vmatpush1.msra.mxu0 0.0
        %2366 = vmatprep.subr.mxu0 0.0
        %2367 = vmatpush1.msra.mxu0 0.0
        %2368 = vmatprep.subr.mxu0 0.0
        %2369 = vmatpush1.msra.mxu0 0.0
        %2370 = vmatprep.subr.mxu0 0.0
        %2371 = vmatpush1.msra.mxu0 0.0
        %2372 = vmatprep.subr.mxu0 0.0
        %2373 = vmatpush1.msra.mxu0 0.0
        %2374 = vmatprep.subr.mxu0 0.0
        %2375 = vmatpush1.msra.mxu0 0.0
        %2376 = vmatprep.subr.mxu0 0.0
        %2377 = vmatpush1.msra.mxu0 0.0
        %2378 = vmatprep.subr.mxu0 0.0
        %2379 = vmatpush1.msra.mxu0 0.0
        %2380 = vmatprep.subr.mxu0 0.0
        %2381 = vmatpush1.msra.mxu0 0.0
        %2382 = vmatprep.subr.mxu0 0.0
        %2383 = vmatpush1.msra.mxu0 0.0
        %2384 = vmatprep.subr.mxu0 0.0
        %2385 = vmatpush1.msra.mxu0 0.0
        %2386 = vmatprep.subr.mxu0 0.0
        %2387 = vmatpush1.msra.mxu0 0.0
        %2388 = vmatprep.subr.mxu0 0.0
        %2389 = vmatpush1.msra.mxu0 0.0
        %2390 = vmatprep.subr.mxu0 0.0
        %2391 = vmatpush1.msra.mxu0 0.0
        %2392 = vmatprep.subr.mxu0 0.0
        %2393 = vmatpush1.msra.mxu0 0.0
        %2394 = vmatprep.subr.mxu0 0.0
        %2395 = vmatpush1.msra.mxu0 0.0
        %2396 = vmatprep.subr.mxu0 0.0
        %2397 = vmatpush1.msra.mxu0 0.0
        %2398 = vmatprep.subr.mxu0 0.0
        %2399 = vmatpush1.msra.mxu0 0.0
        %2400 = vmatprep.subr.mxu0 0.0
        %2401 = vmatpush1.msra.mxu0 0.0
        %2402 = vmatprep.subr.mxu0 0.0
        %2403 = vmatpush1.msra.mxu0 0.0
        %2404 = vmatprep.subr.mxu0 0.0
        %2405 = vmatpush1.msra.mxu0 0.0
        %2406 = vmatprep.subr.mxu0 0.0
        %2407 = vmatpush1.msra.mxu0 0.0
        %2408 = vmatprep.subr.mxu0 0.0
        %2409 = vmatpush1.msra.mxu0 0.0
        %2410 = vmatprep.mubr.f32.mxu0 0.0
        %v2411 = vand.u32 %v1791, 4294901760
        %2412 = vmatmul.mubr.f32.gmra.mrb[0].mxu0 %v2411
        %v2413 = vpop.f32.mrb[0].mxu0
        %v2414 = vadd.f32 %v2281, %v2413
        %v2415 = vpop.f32.mrb[0].mxu0
        %2416 = vmatprep.mubr.f32.mxu0 0.0
        %v2417 = vand.u32 %v1794, 4294901760
        %2418 = vmatmul.mubr.f32.gmra.mrb[0].mxu0 %v2417
        %v2419 = vpop.f32.mrb[0].mxu0
        %v2420 = vadd.f32 %v2289, %v2419
        %v2421 = vpop.f32.mrb[0].mxu0
        %2422 = vmatprep.mubr.f32.mxu0 0.0
        %v2423 = vand.u32 %v1797, 4294901760
        %2424 = vmatmul.mubr.f32.gmra.mrb[0].mxu0 %v2423
        %v2425 = vpop.f32.mrb[0].mxu0
        %v2426 = vadd.f32 %v2297, %v2425
        %v2427 = vpop.f32.mrb[0].mxu0
        %2428 = vmatprep.mubr.f32.mxu0 0.0
        %v2429 = vand.u32 %v1800, 4294901760
        %2430 = vmatmul.mubr.f32.gmra.mrb[0].mxu0 %v2429
        %v2431 = vpop.f32.mrb[0].mxu0
        %v2432 = vadd.f32 %v2305, %v2431
        %v2433 = vpop.f32.mrb[0].mxu0
        %2434 = vmatprep.mubr.f32.mxu0 0.0
        %v2435 = vand.u32 %v1803, 4294901760
        %2436 = vmatmul.mubr.f32.gmra.mrb[0].mxu0 %v2435
        %v2437 = vpop.f32.mrb[0].mxu0
        %v2438 = vadd.f32 %v2313, %v2437
        %v2439 = vpop.f32.mrb[0].mxu0
        %2440 = vmatprep.mubr.f32.mxu0 0.0
        %v2441 = vand.u32 %v1806, 4294901760
        %2442 = vmatmul.mubr.f32.gmra.mrb[0].mxu0 %v2441
        %v2443 = vpop.f32.mrb[0].mxu0
        %v2444 = vadd.f32 %v2321, %v2443
        %v2445 = vpop.f32.mrb[0].mxu0
        %2446 = vmatprep.mubr.f32.mxu0 0.0
        %v2447 = vand.u32 %v1809, 4294901760
        %2448 = vmatmul.mubr.f32.gmra.mrb[0].mxu0 %v2447
        %v2449 = vpop.f32.mrb[0].mxu0
        %v2450 = vadd.f32 %v2329, %v2449
        %v2451 = vpop.f32.mrb[0].mxu0
        %2452 = vmatprep.mubr.f32.mxu0 0.0
        %v2453 = vand.u32 %v1812, 4294901760
        %2454 = vmatmul.mubr.f32.gmra.mrb[0].mxu0 %v2453
        %v2455 = vpop.f32.mrb[0].mxu0
        %v2456 = vadd.f32 %v2337, %v2455
        %v2457 = vpop.f32.mrb[0].mxu0
        %2458 = vdwg.mxu0
        %2459 = vmatprep.subr.mxu0 0.0
        %v2460 = vand.u32 %v192, 4294901760
        %2461 = vmatpush1.msra.mxu0 %v2460
        %2462 = vmatprep.subr.mxu0 0.0
        %v2463 = vand.u32 %v193, 4294901760
        %2464 = vmatpush1.msra.mxu0 %v2463
        %2465 = vmatprep.subr.mxu0 0.0
        %2466 = vmatpush1.msra.mxu0 0.0
        %2467 = vmatprep.subr.mxu0 0.0
        %2468 = vmatpush1.msra.mxu0 0.0
        %2469 = vmatprep.subr.mxu0 0.0
        %2470 = vmatpush1.msra.mxu0 0.0
        %2471 = vmatprep.subr.mxu0 0.0
        %2472 = vmatpush1.msra.mxu0 0.0
        %2473 = vmatprep.subr.mxu0 0.0
        %2474 = vmatpush1.msra.mxu0 0.0
        %2475 = vmatprep.subr.mxu0 0.0
        %2476 = vmatpush1.msra.mxu0 0.0
        %2477 = vmatprep.subr.mxu0 0.0
        %2478 = vmatpush1.msra.mxu0 0.0
        %2479 = vmatprep.subr.mxu0 0.0
        %2480 = vmatpush1.msra.mxu0 0.0
        %2481 = vmatprep.subr.mxu0 0.0
        %2482 = vmatpush1.msra.mxu0 0.0
        %2483 = vmatprep.subr.mxu0 0.0
        %2484 = vmatpush1.msra.mxu0 0.0
        %2485 = vmatprep.subr.mxu0 0.0
        %2486 = vmatpush1.msra.mxu0 0.0
        %2487 = vmatprep.subr.mxu0 0.0
        %2488 = vmatpush1.msra.mxu0 0.0
        %2489 = vmatprep.subr.mxu0 0.0
        %2490 = vmatpush1.msra.mxu0 0.0
        %2491 = vmatprep.subr.mxu0 0.0
        %2492 = vmatpush1.msra.mxu0 0.0
        %2493 = vmatprep.subr.mxu0 0.0
        %2494 = vmatpush1.msra.mxu0 0.0
        %2495 = vmatprep.subr.mxu0 0.0
        %2496 = vmatpush1.msra.mxu0 0.0
        %2497 = vmatprep.subr.mxu0 0.0
        %2498 = vmatpush1.msra.mxu0 0.0
        %2499 = vmatprep.subr.mxu0 0.0
        %2500 = vmatpush1.msra.mxu0 0.0
        %2501 = vmatprep.subr.mxu0 0.0
        %2502 = vmatpush1.msra.mxu0 0.0
        %2503 = vmatprep.subr.mxu0 0.0
        %2504 = vmatpush1.msra.mxu0 0.0
        %2505 = vmatprep.subr.mxu0 0.0
        %2506 = vmatpush1.msra.mxu0 0.0
        %2507 = vmatprep.subr.mxu0 0.0
        %2508 = vmatpush1.msra.mxu0 0.0
        %2509 = vmatprep.subr.mxu0 0.0
        %2510 = vmatpush1.msra.mxu0 0.0
        %2511 = vmatprep.subr.mxu0 0.0
        %2512 = vmatpush1.msra.mxu0 0.0
        %2513 = vmatprep.subr.mxu0 0.0
        %2514 = vmatpush1.msra.mxu0 0.0
        %2515 = vmatprep.subr.mxu0 0.0
        %2516 = vmatpush1.msra.mxu0 0.0
        %2517 = vmatprep.subr.mxu0 0.0
        %2518 = vmatpush1.msra.mxu0 0.0
        %2519 = vmatprep.subr.mxu0 0.0
        %2520 = vmatpush1.msra.mxu0 0.0
        %2521 = vmatprep.subr.mxu0 0.0
        %2522 = vmatpush1.msra.mxu0 0.0
        %2523 = vmatprep.subr.mxu0 0.0
        %2524 = vmatpush1.msra.mxu0 0.0
        %2525 = vmatprep.mubr.f32.mxu0 0.0
        %v2526 = vand.u32 %v1791, 4294901760
        %2527 = vmatmul.mubr.f32.gmra.mrb[0].mxu0 %v2526
        %v2528 = vpop.f32.mrb[0].mxu0
        %v2529 = vadd.f32 %v2414, %v2528
        %v2530 = vpop.f32.mrb[0].mxu0
        %2531 = vmatprep.mubr.f32.mxu0 0.0
        %v2532 = vand.u32 %v1794, 4294901760
        %2533 = vmatmul.mubr.f32.gmra.mrb[0].mxu0 %v2532
        %v2534 = vpop.f32.mrb[0].mxu0
        %v2535 = vadd.f32 %v2420, %v2534
        %v2536 = vpop.f32.mrb[0].mxu0
        %2537 = vmatprep.mubr.f32.mxu0 0.0
        %v2538 = vand.u32 %v1797, 4294901760
        %2539 = vmatmul.mubr.f32.gmra.mrb[0].mxu0 %v2538
        %v2540 = vpop.f32.mrb[0].mxu0
        %v2541 = vadd.f32 %v2426, %v2540
        %v2542 = vpop.f32.mrb[0].mxu0
        %2543 = vmatprep.mubr.f32.mxu0 0.0
        %v2544 = vand.u32 %v1800, 4294901760
        %2545 = vmatmul.mubr.f32.gmra.mrb[0].mxu0 %v2544
        %v2546 = vpop.f32.mrb[0].mxu0
        %v2547 = vadd.f32 %v2432, %v2546
        %v2548 = vpop.f32.mrb[0].mxu0
        %2549 = vmatprep.mubr.f32.mxu0 0.0
        %v2550 = vand.u32 %v1803, 4294901760
        %2551 = vmatmul.mubr.f32.gmra.mrb[0].mxu0 %v2550
        %v2552 = vpop.f32.mrb[0].mxu0
        %v2553 = vadd.f32 %v2438, %v2552
        %v2554 = vpop.f32.mrb[0].mxu0
        %2555 = vmatprep.mubr.f32.mxu0 0.0
        %v2556 = vand.u32 %v1806, 4294901760
        %2557 = vmatmul.mubr.f32.gmra.mrb[0].mxu0 %v2556
        %v2558 = vpop.f32.mrb[0].mxu0
        %v2559 = vadd.f32 %v2444, %v2558
        %v2560 = vpop.f32.mrb[0].mxu0
        %2561 = vmatprep.mubr.f32.mxu0 0.0
        %v2562 = vand.u32 %v1809, 4294901760
        %2563 = vmatmul.mubr.f32.gmra.mrb[0].mxu0 %v2562
        %v2564 = vpop.f32.mrb[0].mxu0
        %v2565 = vadd.f32 %v2450, %v2564
        %v2566 = vpop.f32.mrb[0].mxu0
        %2567 = vmatprep.mubr.f32.mxu0 0.0
        %v2568 = vand.u32 %v1812, 4294901760
        %2569 = vmatmul.mubr.f32.gmra.mrb[0].mxu0 %v2568
        %v2570 = vpop.f32.mrb[0].mxu0
        %v2571 = vadd.f32 %v2456, %v2570
        %v2572 = vpop.f32.mrb[0].mxu0
        %2573 = vdwg.mxu0
        %v2575 = vsel %vm203, %v1773, 0
        %v2578 = vsel %vm203, %v1774, 0
        %v2581 = vsel %vm203, %v1775, 0
        %v2584 = vsel %vm203, %v1776, 0
        %v2587 = vsel %vm203, %v1777, 0
        %v2590 = vsel %vm203, %v1778, 0
        %v2593 = vsel %vm203, %v1779, 0
        %v2596 = vsel %vm203, %v1780, 0
        %2598 = vmatprep.subr.mxu0 0.0
        %v2599 = vand.u32 %v176, 4294901760
        %2600 = vmatpush1.msra.mxu0 %v2599
        %2601 = vmatprep.subr.mxu0 0.0
        %v2602 = vand.u32 %v177, 4294901760
        %2603 = vmatpush1.msra.mxu0 %v2602
        %2604 = vmatprep.subr.mxu0 0.0
        %2605 = vmatpush1.msra.mxu0 0.0
        %2606 = vmatprep.subr.mxu0 0.0
        %2607 = vmatpush1.msra.mxu0 0.0
        %2608 = vmatprep.subr.mxu0 0.0
        %2609 = vmatpush1.msra.mxu0 0.0
        %2610 = vmatprep.subr.mxu0 0.0
        %2611 = vmatpush1.msra.mxu0 0.0
        %2612 = vmatprep.subr.mxu0 0.0
        %2613 = vmatpush1.msra.mxu0 0.0
        %2614 = vmatprep.subr.mxu0 0.0
        %2615 = vmatpush1.msra.mxu0 0.0
        %2616 = vmatprep.subr.mxu0 0.0
        %2617 = vmatpush1.msra.mxu0 0.0
        %2618 = vmatprep.subr.mxu0 0.0
        %2619 = vmatpush1.msra.mxu0 0.0
        %2620 = vmatprep.subr.mxu0 0.0
        %2621 = vmatpush1.msra.mxu0 0.0
        %2622 = vmatprep.subr.mxu0 0.0
        %2623 = vmatpush1.msra.mxu0 0.0
        %2624 = vmatprep.subr.mxu0 0.0
        %2625 = vmatpush1.msra.mxu0 0.0
        %2626 = vmatprep.subr.mxu0 0.0
        %2627 = vmatpush1.msra.mxu0 0.0
        %2628 = vmatprep.subr.mxu0 0.0
        %2629 = vmatpush1.msra.mxu0 0.0
        %2630 = vmatprep.subr.mxu0 0.0
        %2631 = vmatpush1.msra.mxu0 0.0
        %2632 = vmatprep.subr.mxu0 0.0
        %2633 = vmatpush1.msra.mxu0 0.0
        %2634 = vmatprep.subr.mxu0 0.0
        %2635 = vmatpush1.msra.mxu0 0.0
        %2636 = vmatprep.subr.mxu0 0.0
        %2637 = vmatpush1.msra.mxu0 0.0
        %2638 = vmatprep.subr.mxu0 0.0
        %2639 = vmatpush1.msra.mxu0 0.0
        %2640 = vmatprep.subr.mxu0 0.0
        %2641 = vmatpush1.msra.mxu0 0.0
        %2642 = vmatprep.subr.mxu0 0.0
        %2643 = vmatpush1.msra.mxu0 0.0
        %2644 = vmatprep.subr.mxu0 0.0
        %2645 = vmatpush1.msra.mxu0 0.0
        %2646 = vmatprep.subr.mxu0 0.0
        %2647 = vmatpush1.msra.mxu0 0.0
        %2648 = vmatprep.subr.mxu0 0.0
        %2649 = vmatpush1.msra.mxu0 0.0
        %2650 = vmatprep.subr.mxu0 0.0
        %2651 = vmatpush1.msra.mxu0 0.0
        %2652 = vmatprep.subr.mxu0 0.0
        %2653 = vmatpush1.msra.mxu0 0.0
        %2654 = vmatprep.subr.mxu0 0.0
        %2655 = vmatpush1.msra.mxu0 0.0
        %2656 = vmatprep.subr.mxu0 0.0
        %2657 = vmatpush1.msra.mxu0 0.0
        %2658 = vmatprep.subr.mxu0 0.0
        %2659 = vmatpush1.msra.mxu0 0.0
        %2660 = vmatprep.subr.mxu0 0.0
        %2661 = vmatpush1.msra.mxu0 0.0
        %2662 = vmatprep.subr.mxu0 0.0
        %2663 = vmatpush1.msra.mxu0 0.0
        %2664 = vmatprep.mubr.f32.mxu0 0.0
        %v2665 = vand.u32 %v2575, 4294901760
        %v2666 = vsub.f32 %v2575, %v2665
        %v2667 = vand.u32 %v2666, 4294901760
        %v2668 = vsub.f32 %v2666, %v2667
        %v2669 = vand.u32 %v2668, 4294901760
        %2670 = vmatmul.mubr.f32.gmra.mrb[0].mxu0 %v2669
        %v2671 = vpop.f32.mrb[0].mxu0
        %v2672 = vadd.f32 %v2529, %v2671
        %v2673 = vpop.f32.mrb[0].mxu0
        %2674 = vmatprep.mubr.f32.mxu0 0.0
        %v2675 = vand.u32 %v2578, 4294901760
        %v2676 = vsub.f32 %v2578, %v2675
        %v2677 = vand.u32 %v2676, 4294901760
        %v2678 = vsub.f32 %v2676, %v2677
        %v2679 = vand.u32 %v2678, 4294901760
        %2680 = vmatmul.mubr.f32.gmra.mrb[0].mxu0 %v2679
        %v2681 = vpop.f32.mrb[0].mxu0
        %v2682 = vadd.f32 %v2535, %v2681
        %v2683 = vpop.f32.mrb[0].mxu0
        %2684 = vmatprep.mubr.f32.mxu0 0.0
        %v2685 = vand.u32 %v2581, 4294901760
        %v2686 = vsub.f32 %v2581, %v2685
        %v2687 = vand.u32 %v2686, 4294901760
        %v2688 = vsub.f32 %v2686, %v2687
        %v2689 = vand.u32 %v2688, 4294901760
        %2690 = vmatmul.mubr.f32.gmra.mrb[0].mxu0 %v2689
        %v2691 = vpop.f32.mrb[0].mxu0
        %v2692 = vadd.f32 %v2541, %v2691
        %v2693 = vpop.f32.mrb[0].mxu0
        %2694 = vmatprep.mubr.f32.mxu0 0.0
        %v2695 = vand.u32 %v2584, 4294901760
        %v2696 = vsub.f32 %v2584, %v2695
        %v2697 = vand.u32 %v2696, 4294901760
        %v2698 = vsub.f32 %v2696, %v2697
        %v2699 = vand.u32 %v2698, 4294901760
        %2700 = vmatmul.mubr.f32.gmra.mrb[0].mxu0 %v2699
        %v2701 = vpop.f32.mrb[0].mxu0
        %v2702 = vadd.f32 %v2547, %v2701
        %v2703 = vpop.f32.mrb[0].mxu0
        %2704 = vmatprep.mubr.f32.mxu0 0.0
        %v2705 = vand.u32 %v2587, 4294901760
        %v2706 = vsub.f32 %v2587, %v2705
        %v2707 = vand.u32 %v2706, 4294901760
        %v2708 = vsub.f32 %v2706, %v2707
        %v2709 = vand.u32 %v2708, 4294901760
        %2710 = vmatmul.mubr.f32.gmra.mrb[0].mxu0 %v2709
        %v2711 = vpop.f32.mrb[0].mxu0
        %v2712 = vadd.f32 %v2553, %v2711
        %v2713 = vpop.f32.mrb[0].mxu0
        %2714 = vmatprep.mubr.f32.mxu0 0.0
        %v2715 = vand.u32 %v2590, 4294901760
        %v2716 = vsub.f32 %v2590, %v2715
        %v2717 = vand.u32 %v2716, 4294901760
        %v2718 = vsub.f32 %v2716, %v2717
        %v2719 = vand.u32 %v2718, 4294901760
        %2720 = vmatmul.mubr.f32.gmra.mrb[0].mxu0 %v2719
        %v2721 = vpop.f32.mrb[0].mxu0
        %v2722 = vadd.f32 %v2559, %v2721
        %v2723 = vpop.f32.mrb[0].mxu0
        %2724 = vmatprep.mubr.f32.mxu0 0.0
        %v2725 = vand.u32 %v2593, 4294901760
        %v2726 = vsub.f32 %v2593, %v2725
        %v2727 = vand.u32 %v2726, 4294901760
        %v2728 = vsub.f32 %v2726, %v2727
        %v2729 = vand.u32 %v2728, 4294901760
        %2730 = vmatmul.mubr.f32.gmra.mrb[0].mxu0 %v2729
        %v2731 = vpop.f32.mrb[0].mxu0
        %v2732 = vadd.f32 %v2565, %v2731
        %v2733 = vpop.f32.mrb[0].mxu0
        %2734 = vmatprep.mubr.f32.mxu0 0.0
        %v2735 = vand.u32 %v2596, 4294901760
        %v2736 = vsub.f32 %v2596, %v2735
        %v2737 = vand.u32 %v2736, 4294901760
        %v2738 = vsub.f32 %v2736, %v2737
        %v2739 = vand.u32 %v2738, 4294901760
        %2740 = vmatmul.mubr.f32.gmra.mrb[0].mxu0 %v2739
        %v2741 = vpop.f32.mrb[0].mxu0
        %v2742 = vadd.f32 %v2571, %v2741
        %v2743 = vpop.f32.mrb[0].mxu0
        %2744 = vdwg.mxu0
        %2745 = vmatprep.subr.mxu0 0.0
        %v2746 = vand.u32 %v176, 4294901760
        %v2747 = vsub.f32 %v176, %v2746
        %v2748 = vand.u32 %v2747, 4294901760
        %v2749 = vsub.f32 %v2747, %v2748
        %v2750 = vand.u32 %v2749, 4294901760
        %2751 = vmatpush1.msra.mxu0 %v2750
        %2752 = vmatprep.subr.mxu0 0.0
        %v2753 = vand.u32 %v177, 4294901760
        %v2754 = vsub.f32 %v177, %v2753
        %v2755 = vand.u32 %v2754, 4294901760
        %v2756 = vsub.f32 %v2754, %v2755
        %v2757 = vand.u32 %v2756, 4294901760
        %2758 = vmatpush1.msra.mxu0 %v2757
        %2759 = vmatprep.subr.mxu0 0.0
        %2760 = vmatpush1.msra.mxu0 0.0
        %2761 = vmatprep.subr.mxu0 0.0
        %2762 = vmatpush1.msra.mxu0 0.0
        %2763 = vmatprep.subr.mxu0 0.0
        %2764 = vmatpush1.msra.mxu0 0.0
        %2765 = vmatprep.subr.mxu0 0.0
        %2766 = vmatpush1.msra.mxu0 0.0
        %2767 = vmatprep.subr.mxu0 0.0
        %2768 = vmatpush1.msra.mxu0 0.0
        %2769 = vmatprep.subr.mxu0 0.0
        %2770 = vmatpush1.msra.mxu0 0.0
        %2771 = vmatprep.subr.mxu0 0.0
        %2772 = vmatpush1.msra.mxu0 0.0
        %2773 = vmatprep.subr.mxu0 0.0
        %2774 = vmatpush1.msra.mxu0 0.0
        %2775 = vmatprep.subr.mxu0 0.0
        %2776 = vmatpush1.msra.mxu0 0.0
        %2777 = vmatprep.subr.mxu0 0.0
        %2778 = vmatpush1.msra.mxu0 0.0
        %2779 = vmatprep.subr.mxu0 0.0
        %2780 = vmatpush1.msra.mxu0 0.0
        %2781 = vmatprep.subr.mxu0 0.0
        %2782 = vmatpush1.msra.mxu0 0.0
        %2783 = vmatprep.subr.mxu0 0.0
        %2784 = vmatpush1.msra.mxu0 0.0
        %2785 = vmatprep.subr.mxu0 0.0
        %2786 = vmatpush1.msra.mxu0 0.0
        %2787 = vmatprep.subr.mxu0 0.0
        %2788 = vmatpush1.msra.mxu0 0.0
        %2789 = vmatprep.subr.mxu0 0.0
        %2790 = vmatpush1.msra.mxu0 0.0
        %2791 = vmatprep.subr.mxu0 0.0
        %2792 = vmatpush1.msra.mxu0 0.0
        %2793 = vmatprep.subr.mxu0 0.0
        %2794 = vmatpush1.msra.mxu0 0.0
        %2795 = vmatprep.subr.mxu0 0.0
        %2796 = vmatpush1.msra.mxu0 0.0
        %2797 = vmatprep.subr.mxu0 0.0
        %2798 = vmatpush1.msra.mxu0 0.0
        %2799 = vmatprep.subr.mxu0 0.0
        %2800 = vmatpush1.msra.mxu0 0.0
        %2801 = vmatprep.subr.mxu0 0.0
        %2802 = vmatpush1.msra.mxu0 0.0
        %2803 = vmatprep.subr.mxu0 0.0
        %2804 = vmatpush1.msra.mxu0 0.0
        %2805 = vmatprep.subr.mxu0 0.0
        %2806 = vmatpush1.msra.mxu0 0.0
        %2807 = vmatprep.subr.mxu0 0.0
        %2808 = vmatpush1.msra.mxu0 0.0
        %2809 = vmatprep.subr.mxu0 0.0
        %2810 = vmatpush1.msra.mxu0 0.0
        %2811 = vmatprep.subr.mxu0 0.0
        %2812 = vmatpush1.msra.mxu0 0.0
        %2813 = vmatprep.subr.mxu0 0.0
        %2814 = vmatpush1.msra.mxu0 0.0
        %2815 = vmatprep.subr.mxu0 0.0
        %2816 = vmatpush1.msra.mxu0 0.0
        %2817 = vmatprep.subr.mxu0 0.0
        %2818 = vmatpush1.msra.mxu0 0.0
        %2819 = vmatprep.mubr.f32.mxu0 0.0
        %v2820 = vand.u32 %v2575, 4294901760
        %2821 = vmatmul.mubr.f32.gmra.mrb[0].mxu0 %v2820
        %v2822 = vpop.f32.mrb[0].mxu0
        %v2823 = vadd.f32 %v2672, %v2822
        %v2824 = vpop.f32.mrb[0].mxu0
        %2825 = vmatprep.mubr.f32.mxu0 0.0
        %v2826 = vand.u32 %v2578, 4294901760
        %2827 = vmatmul.mubr.f32.gmra.mrb[0].mxu0 %v2826
        %v2828 = vpop.f32.mrb[0].mxu0
        %v2829 = vadd.f32 %v2682, %v2828
        %v2830 = vpop.f32.mrb[0].mxu0
        %2831 = vmatprep.mubr.f32.mxu0 0.0
        %v2832 = vand.u32 %v2581, 4294901760
        %2833 = vmatmul.mubr.f32.gmra.mrb[0].mxu0 %v2832
        %v2834 = vpop.f32.mrb[0].mxu0
        %v2835 = vadd.f32 %v2692, %v2834
        %v2836 = vpop.f32.mrb[0].mxu0
        %2837 = vmatprep.mubr.f32.mxu0 0.0
        %v2838 = vand.u32 %v2584, 4294901760
        %2839 = vmatmul.mubr.f32.gmra.mrb[0].mxu0 %v2838
        %v2840 = vpop.f32.mrb[0].mxu0
        %v2841 = vadd.f32 %v2702, %v2840
        %v2842 = vpop.f32.mrb[0].mxu0
        %2843 = vmatprep.mubr.f32.mxu0 0.0
        %v2844 = vand.u32 %v2587, 4294901760
        %2845 = vmatmul.mubr.f32.gmra.mrb[0].mxu0 %v2844
        %v2846 = vpop.f32.mrb[0].mxu0
        %v2847 = vadd.f32 %v2712, %v2846
        %v2848 = vpop.f32.mrb[0].mxu0
        %2849 = vmatprep.mubr.f32.mxu0 0.0
        %v2850 = vand.u32 %v2590, 4294901760
        %2851 = vmatmul.mubr.f32.gmra.mrb[0].mxu0 %v2850
        %v2852 = vpop.f32.mrb[0].mxu0
        %v2853 = vadd.f32 %v2722, %v2852
        %v2854 = vpop.f32.mrb[0].mxu0
        %2855 = vmatprep.mubr.f32.mxu0 0.0
        %v2856 = vand.u32 %v2593, 4294901760
        %2857 = vmatmul.mubr.f32.gmra.mrb[0].mxu0 %v2856
        %v2858 = vpop.f32.mrb[0].mxu0
        %v2859 = vadd.f32 %v2732, %v2858
        %v2860 = vpop.f32.mrb[0].mxu0
        %2861 = vmatprep.mubr.f32.mxu0 0.0
        %v2862 = vand.u32 %v2596, 4294901760
        %2863 = vmatmul.mubr.f32.gmra.mrb[0].mxu0 %v2862
        %v2864 = vpop.f32.mrb[0].mxu0
        %v2865 = vadd.f32 %v2742, %v2864
        %v2866 = vpop.f32.mrb[0].mxu0
        %2867 = vdwg.mxu0
        %2868 = vmatprep.subr.mxu0 0.0
        %v2869 = vand.u32 %v176, 4294901760
        %v2870 = vsub.f32 %v176, %v2869
        %2871 = vmatpush1.msra.mxu0 %v2870
        %2872 = vmatprep.subr.mxu0 0.0
        %v2873 = vand.u32 %v177, 4294901760
        %v2874 = vsub.f32 %v177, %v2873
        %2875 = vmatpush1.msra.mxu0 %v2874
        %2876 = vmatprep.subr.mxu0 0.0
        %2877 = vmatpush1.msra.mxu0 0.0
        %2878 = vmatprep.subr.mxu0 0.0
        %2879 = vmatpush1.msra.mxu0 0.0
        %2880 = vmatprep.subr.mxu0 0.0
        %2881 = vmatpush1.msra.mxu0 0.0
        %2882 = vmatprep.subr.mxu0 0.0
        %2883 = vmatpush1.msra.mxu0 0.0
        %2884 = vmatprep.subr.mxu0 0.0
        %2885 = vmatpush1.msra.mxu0 0.0
        %2886 = vmatprep.subr.mxu0 0.0
        %2887 = vmatpush1.msra.mxu0 0.0
        %2888 = vmatprep.subr.mxu0 0.0
        %2889 = vmatpush1.msra.mxu0 0.0
        %2890 = vmatprep.subr.mxu0 0.0
        %2891 = vmatpush1.msra.mxu0 0.0
        %2892 = vmatprep.subr.mxu0 0.0
        %2893 = vmatpush1.msra.mxu0 0.0
        %2894 = vmatprep.subr.mxu0 0.0
        %2895 = vmatpush1.msra.mxu0 0.0
        %2896 = vmatprep.subr.mxu0 0.0
        %2897 = vmatpush1.msra.mxu0 0.0
        %2898 = vmatprep.subr.mxu0 0.0
        %2899 = vmatpush1.msra.mxu0 0.0
        %2900 = vmatprep.subr.mxu0 0.0
        %2901 = vmatpush1.msra.mxu0 0.0
        %2902 = vmatprep.subr.mxu0 0.0
        %2903 = vmatpush1.msra.mxu0 0.0
        %2904 = vmatprep.subr.mxu0 0.0
        %2905 = vmatpush1.msra.mxu0 0.0
        %2906 = vmatprep.subr.mxu0 0.0
        %2907 = vmatpush1.msra.mxu0 0.0
        %2908 = vmatprep.subr.mxu0 0.0
        %2909 = vmatpush1.msra.mxu0 0.0
        %2910 = vmatprep.subr.mxu0 0.0
        %2911 = vmatpush1.msra.mxu0 0.0
        %2912 = vmatprep.subr.mxu0 0.0
        %2913 = vmatpush1.msra.mxu0 0.0
        %2914 = vmatprep.subr.mxu0 0.0
        %2915 = vmatpush1.msra.mxu0 0.0
        %2916 = vmatprep.subr.mxu0 0.0
        %2917 = vmatpush1.msra.mxu0 0.0
        %2918 = vmatprep.subr.mxu0 0.0
        %2919 = vmatpush1.msra.mxu0 0.0
        %2920 = vmatprep.subr.mxu0 0.0
        %2921 = vmatpush1.msra.mxu0 0.0
        %2922 = vmatprep.subr.mxu0 0.0
        %2923 = vmatpush1.msra.mxu0 0.0
        %2924 = vmatprep.subr.mxu0 0.0
        %2925 = vmatpush1.msra.mxu0 0.0
        %2926 = vmatprep.subr.mxu0 0.0
        %2927 = vmatpush1.msra.mxu0 0.0
        %2928 = vmatprep.subr.mxu0 0.0
        %2929 = vmatpush1.msra.mxu0 0.0
        %2930 = vmatprep.subr.mxu0 0.0
        %2931 = vmatpush1.msra.mxu0 0.0
        %2932 = vmatprep.subr.mxu0 0.0
        %2933 = vmatpush1.msra.mxu0 0.0
        %2934 = vmatprep.subr.mxu0 0.0
        %2935 = vmatpush1.msra.mxu0 0.0
        %2936 = vmatprep.mubr.f32.mxu0 0.0
        %v2937 = vand.u32 %v2575, 4294901760
        %v2938 = vsub.f32 %v2575, %v2937
        %2939 = vmatmul.mubr.f32.gmra.mrb[0].mxu0 %v2938
        %v2940 = vpop.f32.mrb[0].mxu0
        %v2941 = vadd.f32 %v2823, %v2940
        %v2942 = vpop.f32.mrb[0].mxu0
        %2943 = vmatprep.mubr.f32.mxu0 0.0
        %v2944 = vand.u32 %v2578, 4294901760
        %v2945 = vsub.f32 %v2578, %v2944
        %2946 = vmatmul.mubr.f32.gmra.mrb[0].mxu0 %v2945
        %v2947 = vpop.f32.mrb[0].mxu0
        %v2948 = vadd.f32 %v2829, %v2947
        %v2949 = vpop.f32.mrb[0].mxu0
        %2950 = vmatprep.mubr.f32.mxu0 0.0
        %v2951 = vand.u32 %v2581, 4294901760
        %v2952 = vsub.f32 %v2581, %v2951
        %2953 = vmatmul.mubr.f32.gmra.mrb[0].mxu0 %v2952
        %v2954 = vpop.f32.mrb[0].mxu0
        %v2955 = vadd.f32 %v2835, %v2954
        %v2956 = vpop.f32.mrb[0].mxu0
        %2957 = vmatprep.mubr.f32.mxu0 0.0
        %v2958 = vand.u32 %v2584, 4294901760
        %v2959 = vsub.f32 %v2584, %v2958
        %2960 = vmatmul.mubr.f32.gmra.mrb[0].mxu0 %v2959
        %v2961 = vpop.f32.mrb[0].mxu0
        %v2962 = vadd.f32 %v2841, %v2961
        %v2963 = vpop.f32.mrb[0].mxu0
        %2964 = vmatprep.mubr.f32.mxu0 0.0
        %v2965 = vand.u32 %v2587, 4294901760
        %v2966 = vsub.f32 %v2587, %v2965
        %2967 = vmatmul.mubr.f32.gmra.mrb[0].mxu0 %v2966
        %v2968 = vpop.f32.mrb[0].mxu0
        %v2969 = vadd.f32 %v2847, %v2968
        %v2970 = vpop.f32.mrb[0].mxu0
        %2971 = vmatprep.mubr.f32.mxu0 0.0
        %v2972 = vand.u32 %v2590, 4294901760
        %v2973 = vsub.f32 %v2590, %v2972
        %2974 = vmatmul.mubr.f32.gmra.mrb[0].mxu0 %v2973
        %v2975 = vpop.f32.mrb[0].mxu0
        %v2976 = vadd.f32 %v2853, %v2975
        %v2977 = vpop.f32.mrb[0].mxu0
        %2978 = vmatprep.mubr.f32.mxu0 0.0
        %v2979 = vand.u32 %v2593, 4294901760
        %v2980 = vsub.f32 %v2593, %v2979
        %2981 = vmatmul.mubr.f32.gmra.mrb[0].mxu0 %v2980
        %v2982 = vpop.f32.mrb[0].mxu0
        %v2983 = vadd.f32 %v2859, %v2982
        %v2984 = vpop.f32.mrb[0].mxu0
        %2985 = vmatprep.mubr.f32.mxu0 0.0
        %v2986 = vand.u32 %v2596, 4294901760
        %v2987 = vsub.f32 %v2596, %v2986
        %2988 = vmatmul.mubr.f32.gmra.mrb[0].mxu0 %v2987
        %v2989 = vpop.f32.mrb[0].mxu0
        %v2990 = vadd.f32 %v2865, %v2989
        %v2991 = vpop.f32.mrb[0].mxu0
        %2992 = vdwg.mxu0
        %2993 = vmatprep.subr.mxu0 0.0
        %v2994 = vand.u32 %v176, 4294901760
        %2995 = vmatpush1.msra.mxu0 %v2994
        %2996 = vmatprep.subr.mxu0 0.0
        %v2997 = vand.u32 %v177, 4294901760
        %2998 = vmatpush1.msra.mxu0 %v2997
        %2999 = vmatprep.subr.mxu0 0.0
        %3000 = vmatpush1.msra.mxu0 0.0
        %3001 = vmatprep.subr.mxu0 0.0
        %3002 = vmatpush1.msra.mxu0 0.0
        %3003 = vmatprep.subr.mxu0 0.0
        %3004 = vmatpush1.msra.mxu0 0.0
        %3005 = vmatprep.subr.mxu0 0.0
        %3006 = vmatpush1.msra.mxu0 0.0
        %3007 = vmatprep.subr.mxu0 0.0
        %3008 = vmatpush1.msra.mxu0 0.0
        %3009 = vmatprep.subr.mxu0 0.0
        %3010 = vmatpush1.msra.mxu0 0.0
        %3011 = vmatprep.subr.mxu0 0.0
        %3012 = vmatpush1.msra.mxu0 0.0
        %3013 = vmatprep.subr.mxu0 0.0
        %3014 = vmatpush1.msra.mxu0 0.0
        %3015 = vmatprep.subr.mxu0 0.0
        %3016 = vmatpush1.msra.mxu0 0.0
        %3017 = vmatprep.subr.mxu0 0.0
        %3018 = vmatpush1.msra.mxu0 0.0
        %3019 = vmatprep.subr.mxu0 0.0
        %3020 = vmatpush1.msra.mxu0 0.0
        %3021 = vmatprep.subr.mxu0 0.0
        %3022 = vmatpush1.msra.mxu0 0.0
        %3023 = vmatprep.subr.mxu0 0.0
        %3024 = vmatpush1.msra.mxu0 0.0
        %3025 = vmatprep.subr.mxu0 0.0
        %3026 = vmatpush1.msra.mxu0 0.0
        %3027 = vmatprep.subr.mxu0 0.0
        %3028 = vmatpush1.msra.mxu0 0.0
        %3029 = vmatprep.subr.mxu0 0.0
        %3030 = vmatpush1.msra.mxu0 0.0
        %3031 = vmatprep.subr.mxu0 0.0
        %3032 = vmatpush1.msra.mxu0 0.0
        %3033 = vmatprep.subr.mxu0 0.0
        %3034 = vmatpush1.msra.mxu0 0.0
        %3035 = vmatprep.subr.mxu0 0.0
        %3036 = vmatpush1.msra.mxu0 0.0
        %3037 = vmatprep.subr.mxu0 0.0
        %3038 = vmatpush1.msra.mxu0 0.0
        %3039 = vmatprep.subr.mxu0 0.0
        %3040 = vmatpush1.msra.mxu0 0.0
        %3041 = vmatprep.subr.mxu0 0.0
        %3042 = vmatpush1.msra.mxu0 0.0
        %3043 = vmatprep.subr.mxu0 0.0
        %3044 = vmatpush1.msra.mxu0 0.0
        %3045 = vmatprep.subr.mxu0 0.0
        %3046 = vmatpush1.msra.mxu0 0.0
        %3047 = vmatprep.subr.mxu0 0.0
        %3048 = vmatpush1.msra.mxu0 0.0
        %3049 = vmatprep.subr.mxu0 0.0
        %3050 = vmatpush1.msra.mxu0 0.0
        %3051 = vmatprep.subr.mxu0 0.0
        %3052 = vmatpush1.msra.mxu0 0.0
        %3053 = vmatprep.subr.mxu0 0.0
        %3054 = vmatpush1.msra.mxu0 0.0
        %3055 = vmatprep.subr.mxu0 0.0
        %3056 = vmatpush1.msra.mxu0 0.0
        %3057 = vmatprep.subr.mxu0 0.0
        %3058 = vmatpush1.msra.mxu0 0.0
        %3059 = vmatprep.mubr.f32.mxu0 0.0
        %v3060 = vand.u32 %v2575, 4294901760
        %v3061 = vsub.f32 %v2575, %v3060
        %v3062 = vand.u32 %v3061, 4294901760
        %3063 = vmatmul.mubr.f32.gmra.mrb[0].mxu0 %v3062
        %v3064 = vpop.f32.mrb[0].mxu0
        %v3065 = vadd.f32 %v2941, %v3064
        %v3066 = vpop.f32.mrb[0].mxu0
        %3067 = vmatprep.mubr.f32.mxu0 0.0
        %v3068 = vand.u32 %v2578, 4294901760
        %v3069 = vsub.f32 %v2578, %v3068
        %v3070 = vand.u32 %v3069, 4294901760
        %3071 = vmatmul.mubr.f32.gmra.mrb[0].mxu0 %v3070
        %v3072 = vpop.f32.mrb[0].mxu0
        %v3073 = vadd.f32 %v2948, %v3072
        %v3074 = vpop.f32.mrb[0].mxu0
        %3075 = vmatprep.mubr.f32.mxu0 0.0
        %v3076 = vand.u32 %v2581, 4294901760
        %v3077 = vsub.f32 %v2581, %v3076
        %v3078 = vand.u32 %v3077, 4294901760
        %3079 = vmatmul.mubr.f32.gmra.mrb[0].mxu0 %v3078
        %v3080 = vpop.f32.mrb[0].mxu0
        %v3081 = vadd.f32 %v2955, %v3080
        %v3082 = vpop.f32.mrb[0].mxu0
        %3083 = vmatprep.mubr.f32.mxu0 0.0
        %v3084 = vand.u32 %v2584, 4294901760
        %v3085 = vsub.f32 %v2584, %v3084
        %v3086 = vand.u32 %v3085, 4294901760
        %3087 = vmatmul.mubr.f32.gmra.mrb[0].mxu0 %v3086
        %v3088 = vpop.f32.mrb[0].mxu0
        %v3089 = vadd.f32 %v2962, %v3088
        %v3090 = vpop.f32.mrb[0].mxu0
        %3091 = vmatprep.mubr.f32.mxu0 0.0
        %v3092 = vand.u32 %v2587, 4294901760
        %v3093 = vsub.f32 %v2587, %v3092
        %v3094 = vand.u32 %v3093, 4294901760
        %3095 = vmatmul.mubr.f32.gmra.mrb[0].mxu0 %v3094
        %v3096 = vpop.f32.mrb[0].mxu0
        %v3097 = vadd.f32 %v2969, %v3096
        %v3098 = vpop.f32.mrb[0].mxu0
        %3099 = vmatprep.mubr.f32.mxu0 0.0
        %v3100 = vand.u32 %v2590, 4294901760
        %v3101 = vsub.f32 %v2590, %v3100
        %v3102 = vand.u32 %v3101, 4294901760
        %3103 = vmatmul.mubr.f32.gmra.mrb[0].mxu0 %v3102
        %v3104 = vpop.f32.mrb[0].mxu0
        %v3105 = vadd.f32 %v2976, %v3104
        %v3106 = vpop.f32.mrb[0].mxu0
        %3107 = vmatprep.mubr.f32.mxu0 0.0
        %v3108 = vand.u32 %v2593, 4294901760
        %v3109 = vsub.f32 %v2593, %v3108
        %v3110 = vand.u32 %v3109, 4294901760
        %3111 = vmatmul.mubr.f32.gmra.mrb[0].mxu0 %v3110
        %v3112 = vpop.f32.mrb[0].mxu0
        %v3113 = vadd.f32 %v2983, %v3112
        %v3114 = vpop.f32.mrb[0].mxu0
        %3115 = vmatprep.mubr.f32.mxu0 0.0
        %v3116 = vand.u32 %v2596, 4294901760
        %v3117 = vsub.f32 %v2596, %v3116
        %v3118 = vand.u32 %v3117, 4294901760
        %3119 = vmatmul.mubr.f32.gmra.mrb[0].mxu0 %v3118
        %v3120 = vpop.f32.mrb[0].mxu0
        %v3121 = vadd.f32 %v2990, %v3120
        %v3122 = vpop.f32.mrb[0].mxu0
        %3123 = vdwg.mxu0
        %3124 = vmatprep.subr.mxu0 0.0
        %v3125 = vand.u32 %v176, 4294901760
        %v3126 = vsub.f32 %v176, %v3125
        %v3127 = vand.u32 %v3126, 4294901760
        %3128 = vmatpush1.msra.mxu0 %v3127
        %3129 = vmatprep.subr.mxu0 0.0
        %v3130 = vand.u32 %v177, 4294901760
        %v3131 = vsub.f32 %v177, %v3130
        %v3132 = vand.u32 %v3131, 4294901760
        %3133 = vmatpush1.msra.mxu0 %v3132
        %3134 = vmatprep.subr.mxu0 0.0
        %3135 = vmatpush1.msra.mxu0 0.0
        %3136 = vmatprep.subr.mxu0 0.0
        %3137 = vmatpush1.msra.mxu0 0.0
        %3138 = vmatprep.subr.mxu0 0.0
        %3139 = vmatpush1.msra.mxu0 0.0
        %3140 = vmatprep.subr.mxu0 0.0
        %3141 = vmatpush1.msra.mxu0 0.0
        %3142 = vmatprep.subr.mxu0 0.0
        %3143 = vmatpush1.msra.mxu0 0.0
        %3144 = vmatprep.subr.mxu0 0.0
        %3145 = vmatpush1.msra.mxu0 0.0
        %3146 = vmatprep.subr.mxu0 0.0
        %3147 = vmatpush1.msra.mxu0 0.0
        %3148 = vmatprep.subr.mxu0 0.0
        %3149 = vmatpush1.msra.mxu0 0.0
        %3150 = vmatprep.subr.mxu0 0.0
        %3151 = vmatpush1.msra.mxu0 0.0
        %3152 = vmatprep.subr.mxu0 0.0
        %3153 = vmatpush1.msra.mxu0 0.0
        %3154 = vmatprep.subr.mxu0 0.0
        %3155 = vmatpush1.msra.mxu0 0.0
        %3156 = vmatprep.subr.mxu0 0.0
        %3157 = vmatpush1.msra.mxu0 0.0
        %3158 = vmatprep.subr.mxu0 0.0
        %3159 = vmatpush1.msra.mxu0 0.0
        %3160 = vmatprep.subr.mxu0 0.0
        %3161 = vmatpush1.msra.mxu0 0.0
        %3162 = vmatprep.subr.mxu0 0.0
        %3163 = vmatpush1.msra.mxu0 0.0
        %3164 = vmatprep.subr.mxu0 0.0
        %3165 = vmatpush1.msra.mxu0 0.0
        %3166 = vmatprep.subr.mxu0 0.0
        %3167 = vmatpush1.msra.mxu0 0.0
        %3168 = vmatprep.subr.mxu0 0.0
        %3169 = vmatpush1.msra.mxu0 0.0
        %3170 = vmatprep.subr.mxu0 0.0
        %3171 = vmatpush1.msra.mxu0 0.0
        %3172 = vmatprep.subr.mxu0 0.0
        %3173 = vmatpush1.msra.mxu0 0.0
        %3174 = vmatprep.subr.mxu0 0.0
        %3175 = vmatpush1.msra.mxu0 0.0
        %3176 = vmatprep.subr.mxu0 0.0
        %3177 = vmatpush1.msra.mxu0 0.0
        %3178 = vmatprep.subr.mxu0 0.0
        %3179 = vmatpush1.msra.mxu0 0.0
        %3180 = vmatprep.subr.mxu0 0.0
        %3181 = vmatpush1.msra.mxu0 0.0
        %3182 = vmatprep.subr.mxu0 0.0
        %3183 = vmatpush1.msra.mxu0 0.0
        %3184 = vmatprep.subr.mxu0 0.0
        %3185 = vmatpush1.msra.mxu0 0.0
        %3186 = vmatprep.subr.mxu0 0.0
        %3187 = vmatpush1.msra.mxu0 0.0
        %3188 = vmatprep.subr.mxu0 0.0
        %3189 = vmatpush1.msra.mxu0 0.0
        %3190 = vmatprep.subr.mxu0 0.0
        %3191 = vmatpush1.msra.mxu0 0.0
        %3192 = vmatprep.subr.mxu0 0.0
        %3193 = vmatpush1.msra.mxu0 0.0
        %3194 = vmatprep.mubr.f32.mxu0 0.0
        %v3195 = vand.u32 %v2575, 4294901760
        %3196 = vmatmul.mubr.f32.gmra.mrb[0].mxu0 %v3195
        %v3197 = vpop.f32.mrb[0].mxu0
        %v3198 = vadd.f32 %v3065, %v3197
        %v3199 = vpop.f32.mrb[0].mxu0
        %3200 = vmatprep.mubr.f32.mxu0 0.0
        %v3201 = vand.u32 %v2578, 4294901760
        %3202 = vmatmul.mubr.f32.gmra.mrb[0].mxu0 %v3201
        %v3203 = vpop.f32.mrb[0].mxu0
        %v3204 = vadd.f32 %v3073, %v3203
        %v3205 = vpop.f32.mrb[0].mxu0
        %3206 = vmatprep.mubr.f32.mxu0 0.0
        %v3207 = vand.u32 %v2581, 4294901760
        %3208 = vmatmul.mubr.f32.gmra.mrb[0].mxu0 %v3207
        %v3209 = vpop.f32.mrb[0].mxu0
        %v3210 = vadd.f32 %v3081, %v3209
        %v3211 = vpop.f32.mrb[0].mxu0
        %3212 = vmatprep.mubr.f32.mxu0 0.0
        %v3213 = vand.u32 %v2584, 4294901760
        %3214 = vmatmul.mubr.f32.gmra.mrb[0].mxu0 %v3213
        %v3215 = vpop.f32.mrb[0].mxu0
        %v3216 = vadd.f32 %v3089, %v3215
        %v3217 = vpop.f32.mrb[0].mxu0
        %3218 = vmatprep.mubr.f32.mxu0 0.0
        %v3219 = vand.u32 %v2587, 4294901760
        %3220 = vmatmul.mubr.f32.gmra.mrb[0].mxu0 %v3219
        %v3221 = vpop.f32.mrb[0].mxu0
        %v3222 = vadd.f32 %v3097, %v3221
        %v3223 = vpop.f32.mrb[0].mxu0
        %3224 = vmatprep.mubr.f32.mxu0 0.0
        %v3225 = vand.u32 %v2590, 4294901760
        %3226 = vmatmul.mubr.f32.gmra.mrb[0].mxu0 %v3225
        %v3227 = vpop.f32.mrb[0].mxu0
        %v3228 = vadd.f32 %v3105, %v3227
        %v3229 = vpop.f32.mrb[0].mxu0
        %3230 = vmatprep.mubr.f32.mxu0 0.0
        %v3231 = vand.u32 %v2593, 4294901760
        %3232 = vmatmul.mubr.f32.gmra.mrb[0].mxu0 %v3231
        %v3233 = vpop.f32.mrb[0].mxu0
        %v3234 = vadd.f32 %v3113, %v3233
        %v3235 = vpop.f32.mrb[0].mxu0
        %3236 = vmatprep.mubr.f32.mxu0 0.0
        %v3237 = vand.u32 %v2596, 4294901760
        %3238 = vmatmul.mubr.f32.gmra.mrb[0].mxu0 %v3237
        %v3239 = vpop.f32.mrb[0].mxu0
        %v3240 = vadd.f32 %v3121, %v3239
        %v3241 = vpop.f32.mrb[0].mxu0
        %3242 = vdwg.mxu0
        %3243 = vmatprep.subr.mxu0 0.0
        %v3244 = vand.u32 %v176, 4294901760
        %3245 = vmatpush1.msra.mxu0 %v3244
        %3246 = vmatprep.subr.mxu0 0.0
        %v3247 = vand.u32 %v177, 4294901760
        %3248 = vmatpush1.msra.mxu0 %v3247
        %3249 = vmatprep.subr.mxu0 0.0
        %3250 = vmatpush1.msra.mxu0 0.0
        %3251 = vmatprep.subr.mxu0 0.0
        %3252 = vmatpush1.msra.mxu0 0.0
        %3253 = vmatprep.subr.mxu0 0.0
        %3254 = vmatpush1.msra.mxu0 0.0
        %3255 = vmatprep.subr.mxu0 0.0
        %3256 = vmatpush1.msra.mxu0 0.0
        %3257 = vmatprep.subr.mxu0 0.0
        %3258 = vmatpush1.msra.mxu0 0.0
        %3259 = vmatprep.subr.mxu0 0.0
        %3260 = vmatpush1.msra.mxu0 0.0
        %3261 = vmatprep.subr.mxu0 0.0
        %3262 = vmatpush1.msra.mxu0 0.0
        %3263 = vmatprep.subr.mxu0 0.0
        %3264 = vmatpush1.msra.mxu0 0.0
        %3265 = vmatprep.subr.mxu0 0.0
        %3266 = vmatpush1.msra.mxu0 0.0
        %3267 = vmatprep.subr.mxu0 0.0
        %3268 = vmatpush1.msra.mxu0 0.0
        %3269 = vmatprep.subr.mxu0 0.0
        %3270 = vmatpush1.msra.mxu0 0.0
        %3271 = vmatprep.subr.mxu0 0.0
        %3272 = vmatpush1.msra.mxu0 0.0
        %3273 = vmatprep.subr.mxu0 0.0
        %3274 = vmatpush1.msra.mxu0 0.0
        %3275 = vmatprep.subr.mxu0 0.0
        %3276 = vmatpush1.msra.mxu0 0.0
        %3277 = vmatprep.subr.mxu0 0.0
        %3278 = vmatpush1.msra.mxu0 0.0
        %3279 = vmatprep.subr.mxu0 0.0
        %3280 = vmatpush1.msra.mxu0 0.0
        %3281 = vmatprep.subr.mxu0 0.0
        %3282 = vmatpush1.msra.mxu0 0.0
        %3283 = vmatprep.subr.mxu0 0.0
        %3284 = vmatpush1.msra.mxu0 0.0
        %3285 = vmatprep.subr.mxu0 0.0
        %3286 = vmatpush1.msra.mxu0 0.0
        %3287 = vmatprep.subr.mxu0 0.0
        %3288 = vmatpush1.msra.mxu0 0.0
        %3289 = vmatprep.subr.mxu0 0.0
        %3290 = vmatpush1.msra.mxu0 0.0
        %3291 = vmatprep.subr.mxu0 0.0
        %3292 = vmatpush1.msra.mxu0 0.0
        %3293 = vmatprep.subr.mxu0 0.0
        %3294 = vmatpush1.msra.mxu0 0.0
        %3295 = vmatprep.subr.mxu0 0.0
        %3296 = vmatpush1.msra.mxu0 0.0
        %3297 = vmatprep.subr.mxu0 0.0
        %3298 = vmatpush1.msra.mxu0 0.0
        %3299 = vmatprep.subr.mxu0 0.0
        %3300 = vmatpush1.msra.mxu0 0.0
        %3301 = vmatprep.subr.mxu0 0.0
        %3302 = vmatpush1.msra.mxu0 0.0
        %3303 = vmatprep.subr.mxu0 0.0
        %3304 = vmatpush1.msra.mxu0 0.0
        %3305 = vmatprep.subr.mxu0 0.0
        %3306 = vmatpush1.msra.mxu0 0.0
        %3307 = vmatprep.subr.mxu0 0.0
        %3308 = vmatpush1.msra.mxu0 0.0
        %3309 = vmatprep.mubr.f32.mxu0 0.0
        %v3310 = vand.u32 %v2575, 4294901760
        %3311 = vmatmul.mubr.f32.gmra.mrb[0].mxu0 %v3310
        %v3312 = vpop.f32.mrb[0].mxu0
        %v3313 = vadd.f32 %v3198, %v3312
        %v3314 = vpop.f32.mrb[0].mxu0
        %3315 = vmatprep.mubr.f32.mxu0 0.0
        %v3316 = vand.u32 %v2578, 4294901760
        %3317 = vmatmul.mubr.f32.gmra.mrb[0].mxu0 %v3316
        %v3318 = vpop.f32.mrb[0].mxu0
        %v3319 = vadd.f32 %v3204, %v3318
        %v3320 = vpop.f32.mrb[0].mxu0
        %3321 = vmatprep.mubr.f32.mxu0 0.0
        %v3322 = vand.u32 %v2581, 4294901760
        %3323 = vmatmul.mubr.f32.gmra.mrb[0].mxu0 %v3322
        %v3324 = vpop.f32.mrb[0].mxu0
        %v3325 = vadd.f32 %v3210, %v3324
        %v3326 = vpop.f32.mrb[0].mxu0
        %3327 = vmatprep.mubr.f32.mxu0 0.0
        %v3328 = vand.u32 %v2584, 4294901760
        %3329 = vmatmul.mubr.f32.gmra.mrb[0].mxu0 %v3328
        %v3330 = vpop.f32.mrb[0].mxu0
        %v3331 = vadd.f32 %v3216, %v3330
        %v3332 = vpop.f32.mrb[0].mxu0
        %3333 = vmatprep.mubr.f32.mxu0 0.0
        %v3334 = vand.u32 %v2587, 4294901760
        %3335 = vmatmul.mubr.f32.gmra.mrb[0].mxu0 %v3334
        %v3336 = vpop.f32.mrb[0].mxu0
        %v3337 = vadd.f32 %v3222, %v3336
        %v3338 = vpop.f32.mrb[0].mxu0
        %3339 = vmatprep.mubr.f32.mxu0 0.0
        %v3340 = vand.u32 %v2590, 4294901760
        %3341 = vmatmul.mubr.f32.gmra.mrb[0].mxu0 %v3340
        %v3342 = vpop.f32.mrb[0].mxu0
        %v3343 = vadd.f32 %v3228, %v3342
        %v3344 = vpop.f32.mrb[0].mxu0
        %3345 = vmatprep.mubr.f32.mxu0 0.0
        %v3346 = vand.u32 %v2593, 4294901760
        %3347 = vmatmul.mubr.f32.gmra.mrb[0].mxu0 %v3346
        %v3348 = vpop.f32.mrb[0].mxu0
        %v3349 = vadd.f32 %v3234, %v3348
        %v3350 = vpop.f32.mrb[0].mxu0
        %3351 = vmatprep.mubr.f32.mxu0 0.0
        %v3352 = vand.u32 %v2596, 4294901760
        %3353 = vmatmul.mubr.f32.gmra.mrb[0].mxu0 %v3352
        %v3354 = vpop.f32.mrb[0].mxu0
        %v3355 = vadd.f32 %v3240, %v3354
        %v3356 = vpop.f32.mrb[0].mxu0
        %3357 = vdwg.mxu0
        %3366 = vrot.lane.b32.xlu0 %v3313, 32
        %v3367 = vpop.permute.xlu0 %3366
        %3368 = vrot.lane.b32.xlu0 %v3319, 32
        %v3369 = vpop.permute.xlu0 %3368
        %3370 = vrot.lane.b32.xlu0 %v3325, 32
        %v3371 = vpop.permute.xlu0 %3370
        %3372 = vrot.lane.b32.xlu0 %v3331, 32
        %v3373 = vpop.permute.xlu0 %3372
        %3374 = vrot.lane.b32.xlu0 %v3337, 32
        %v3375 = vpop.permute.xlu0 %3374
        %3376 = vrot.lane.b32.xlu0 %v3343, 32
        %v3377 = vpop.permute.xlu0 %3376
        %3378 = vrot.lane.b32.xlu0 %v3349, 32
        %v3379 = vpop.permute.xlu0 %3378
        %3380 = vrot.lane.b32.xlu0 %v3355, 32
        %v3381 = vpop.permute.xlu0 %3380
        %vm3390 = vcmask 261120
        %v3391 = vsel %vm3390, %v1727, %v3367
        %v3392 = vsel %vm3390, %v1733, %v3369
        %v3393 = vsel %vm3390, %v1739, %v3371
        %v3394 = vsel %vm3390, %v1745, %v3373
        %v3395 = vsel %vm3390, %v1751, %v3375
        %v3396 = vsel %vm3390, %v1757, %v3377
        %v3397 = vsel %vm3390, %v1763, %v3379
        %v3398 = vsel %vm3390, %v1769, %v3381
        %vm3399 = vcmask 523264
        %3400 = vst.msk [vmem:[%s163] sm:$0xff] %vm3399, %v3391
        %3401 = vst.msk [vmem:[%s163 + $0x8] sm:$0xff] %vm3399, %v3392
        %3402 = vst.msk [vmem:[%s163 + $0x10] sm:$0xff] %vm3399, %v3393
        %3403 = vst.msk [vmem:[%s163 + $0x18] sm:$0xff] %vm3399, %v3394
        %3404 = vst.msk [vmem:[%s163 + $0x20] sm:$0xff] %vm3399, %v3395
        %3405 = vst.msk [vmem:[%s163 + $0x28] sm:$0xff] %vm3399, %v3396
        %3406 = vst.msk [vmem:[%s163 + $0x30] sm:$0xff] %vm3399, %v3397
        %3407 = vst.msk [vmem:[%s163 + $0x38] sm:$0xff] %vm3399, %v3398
        %s3408 = smul.u32 8, %s20
        %p3409 = scmp.lt.s32.totalorder %s19, 1
        %s3410 = scalar_select %p3409, %s19, 1
        %p3411 = scmp.lt.s32.totalorder %s3408, 7
        %s3412 = scalar_select %p3411, %s3408, 7
        %s3413 = smul.addr %s3410, 8
        %s3414 = sadd.s32 %s3412, %s3413
        %s3415 = smul.addr %s3414, 8
        %s3416 = scalar_lea.vmem %s1, %s3415
        // Predicated region
        $region29: #{expand_forward.1} parent=23 // pred_check
          %p3417 = pneg %p75
        $region30: #{expand_forward.1} parent=23 // pred_check_branch
          %3419 = sbr.rel (%p3417) target = $region32
        $region31: #{expand_forward.1} parent=23 // pred_region
          %s3420 = smul.u32 8, %s20
        $region32: #{expand_forward.1} parent=23 // pred_fallthru
          _
      $region24: #{expand_forward.1} parent=5 // pred_fallthru
        _
      %p3421 = scmp.le.s32.totalorder 2, %s10
      // Predicated region
      $region33: #{expand_forward.1} parent=5 // pred_check
        %p3422 = pneg %p3421
      $region34: #{expand_forward.1} parent=5 // pred_check_branch
        %3424 = sbr.rel (%p3422) target = $region36
      $region35: #{expand_forward.1} parent=5 // pred_region
        %s3425 = ssub.s32 %s10, 2
        // Predicated region
        $region37: #{expand_forward.1} parent=35 // pred_check
          %p3426 = pneg %p81
        $region38: #{expand_forward.1} parent=35 // pred_check_branch
          %3428 = sbr.rel (%p3426) target = $region40
        $region39: #{expand_forward.1} parent=35 // pred_region
          %s3429 = smul.u32 8, %s22
          %p3430 = scmp.lt.s32.totalorder %s21, 1
          %s3431 = scalar_select %p3430, %s21, 1
          %p3432 = scmp.lt.s32.totalorder %s3429, 7
          %s3433 = scalar_select %p3432, %s3429, 7
          %s3434 = smul.addr %s3431, 8
          %s3435 = sadd.s32 %s3433, %s3434
          %s3436 = smul.addr %s3435, 8
          %s3437 = scalar_lea.vmem %s1, %s3436
        $region40: #{expand_forward.1} parent=35 // pred_fallthru
          _
      $region36: #{expand_forward.1} parent=5 // pred_fallthru
        _
    $region6: #{expand_forward.1} parent=1 // loop_footer
      %s14 = sadd.s32 1, %s10
    $region7: #{expand_forward.1} parent=1 // loop_footer_branch
      %9 = sbr.rel target = $region3
    $region8: #{expand_forward.1} parent=1 // loop_exit
      _
    %3438 = vsyncpa [#allocation3], 1
    %s3439 = scalar_lea.sflag [#allocation3], 1
    %3440 = vsyncpa %s3439, 1

</llo_original>
